<compile_context>
chip_gen: v5e
topology: v5e:2x2
jax: 0.10.0
libtpu: 0.0.40
codegen_flags: <defaults>
</compile_context>

<pallas_src>
import jax
import jax.numpy as jnp
from jax.experimental import pallas as pl
from jax.experimental.pallas import tpu as pltpu


# ------------------------------------------------------------------ kernels
def ffn_kernel_resident(x_ref, w1_ref, b1_ref, w2_ref, b2_ref, o_ref):
    """Single pass over the whole d_mlp; weights are VMEM-resident (constant index)."""
    x = x_ref[...].astype(w1_ref.dtype)                      # cast in VMEM, post-DMA
    h = jnp.dot(x, w1_ref[...], preferred_element_type=jnp.float32)
    h = jnp.maximum(h + b1_ref[...], 0.0)                    # bias + ReLU (f32, VPU)
    # Dropout: identity (eval mode).
    y = jnp.dot(h.astype(w2_ref.dtype), w2_ref[...],
                preferred_element_type=jnp.float32)
    o_ref[...] = (y + b2_ref[...]).astype(o_ref.dtype)


def ffn_kernel_stream_accout(x_ref, w1_ref, b1_ref, w2_ref, b2_ref, o_ref):
    """d_mlp streamed in chunks; f32 output block (resident across k) is the accumulator."""
    k = pl.program_id(1)
    x = x_ref[...].astype(w1_ref.dtype)
    h = jnp.dot(x, w1_ref[...], preferred_element_type=jnp.float32)
    h = jnp.maximum(h + b1_ref[...], 0.0)
    # Dropout: identity (eval mode).
    y = jnp.dot(h.astype(w2_ref.dtype), w2_ref[...],
                preferred_element_type=jnp.float32)

    @pl.when(k == 0)
    def _():
        o_ref[...] = y + b2_ref[...]          # fold output bias into the first chunk

    @pl.when(k > 0)
    def _():
        o_ref[...] += y


def ffn_kernel_stream_scratch(x_ref, w1_ref, b1_ref, w2_ref, b2_ref, o_ref, acc_ref):
    """Streamed path with an f32 scratch accumulator (non-f32 output dtype)."""
    k = pl.program_id(1)
    x = x_ref[...].astype(w1_ref.dtype)
    h = jnp.dot(x, w1_ref[...], preferred_element_type=jnp.float32)
    h = jnp.maximum(h + b1_ref[...], 0.0)
    # Dropout: identity (eval mode).
    y = jnp.dot(h.astype(w2_ref.dtype), w2_ref[...],
                preferred_element_type=jnp.float32)

    @pl.when(k == 0)
    def _():
        acc_ref[...] = y + b2_ref[...]

    @pl.when(k > 0)
    def _():
        acc_ref[...] += y

    @pl.when(k == pl.num_programs(1) - 1)
    def _():
        o_ref[...] = acc_ref[...].astype(o_ref.dtype)


# ------------------------------------------------------------------ helpers
def _round_up(x, m):
    return ((x + m - 1) // m) * m


def _tpu_vmem_capacity_bytes():
    """Physical VMEM per TensorCore; conservative 64 MiB fallback (v7x)."""
    try:
        cap = int(pltpu.get_tpu_info().vmem_capacity_bytes)
        if cap > 0:
            return cap
    except Exception:
        pass
    return 64 * 1024 * 1024


def _pick_row_tile(M, resident, vmem_cap):
    if M <= 256:
        return _round_up(M, 16)          # small-M / decode path: don't pad with zeros
    # Streamed-weight schedule has arithmetic intensity ~ tm FLOPs per weight byte:
    # need ~256 (v5e), ~384-512 (v7x per-TC), ~640+ (v6e) before the MXU is fed.
    target = 256 if resident else (512 if vmem_cap <= (64 << 20) else 768)
    if M <= target:
        # Split into >= 2 row blocks so both v7x TensorCores get work.
        return _round_up(pl.cdiv(M, 2), 16)
    return target


def _pick_k_chunk(d_mlp, d_model, vmem_cap, c_sz):
    # tk a multiple of 256 and >= 512 where possible; double-buffered W1+W2 chunks
    # (2 * 2 * d_model * tk * c_sz bytes) must stay within roughly half of VMEM.
    for c in (1024, 512, 256):
        if d_mlp % c == 0 and 4 * d_model * c * c_sz <= vmem_cap // 2:
            return c
    return d_mlp


# ------------------------------------------------------------------ wrapper
def feed_forward(x, w1, b1, w2, b2, *, compute_dtype=jnp.bfloat16, tm=None, tk=None):
    """Fused FeedForward: relu(x @ W1 + b1) @ W2 + b2   (dropout = identity / eval).

    x  : [B, S, d_model]
    w1 : [d_model, d_mlp]   (transposed wrt torch's [out, in])
    b1 : [d_mlp] or [1, d_mlp]
    w2 : [d_mlp, d_model]
    b2 : [d_model] or [1, d_model]

    For best performance store w1/w2 in `compute_dtype` (bf16) ahead of time so the
    wrapper never burns an HBM pass re-casting them per call.
    """
    B, S, d_model = x.shape
    d_mlp = w1.shape[1]
    assert w1.shape == (d_model, d_mlp) and w2.shape == (d_mlp, d_model)

    out_dtype = x.dtype
    M = B * S
    vmem_cap = _tpu_vmem_capacity_bytes()

    c_sz = jnp.dtype(compute_dtype).itemsize
    x_sz = jnp.dtype(x.dtype).itemsize
    o_sz = jnp.dtype(out_dtype).itemsize

    # --- resident vs streamed weights (probe with a small row tile) ---------------
    tm_probe = min(256, _round_up(M, 16))
    weight_bytes = 2 * (2 * d_model * d_mlp * c_sz) + 4 * (d_mlp + d_model)  # 2x buffers
    probe_tiles = (2 * tm_probe * d_model * (x_sz + o_sz)      # x/out double-buffered
                   + tm_probe * d_mlp * (4 + c_sz)             # h (f32 + bf16 copy)
                   + tm_probe * d_model * c_sz)                # x bf16 cast
    resident = (tk is None) and (weight_bytes + probe_tiles) <= int(0.6 * vmem_cap)

    if tm is None:
        tm = _pick_row_tile(M, resident, vmem_cap)
    m_pad = _round_up(M, tm)
    grid_rows = m_pad // tm

    # --- operands (no hot-path casts of big tensors unless unavoidable) -----------
    x2d = x.reshape(M, d_model)
    if m_pad != M:
        x2d = jnp.pad(x2d, ((0, m_pad - M), (0, 0)))
    w1c = w1 if w1.dtype == compute_dtype else w1.astype(compute_dtype)
    w2c = w2 if w2.dtype == compute_dtype else w2.astype(compute_dtype)
    b1c = jnp.asarray(b1).reshape(1, d_mlp).astype(jnp.float32)
    b2c = jnp.asarray(b2).reshape(1, d_model).astype(jnp.float32)

    if resident:
        footprint = (weight_bytes
                     + 2 * tm * d_model * (x_sz + o_sz)
                     + tm * d_mlp * (4 + c_sz)
                     + tm * d_model * c_sz)
        vmem_limit = int(min(0.85 * vmem_cap, max(32 << 20, 1.5 * footprint)))

        out2d = pl.pallas_call(
            ffn_kernel_resident,
            out_shape=jax.ShapeDtypeStruct((m_pad, d_model), out_dtype),
            grid_spec=pltpu.PrefetchScalarGridSpec(
                num_scalar_prefetch=0,
                grid=(grid_rows,),
                in_specs=[
                    pl.BlockSpec((tm, d_model), lambda i: (i, 0)),     # x row tile
                    pl.BlockSpec((d_model, d_mlp), lambda i: (0, 0)),  # W1 (resident)
                    pl.BlockSpec((1, d_mlp), lambda i: (0, 0)),        # b1 (resident)
                    pl.BlockSpec((d_mlp, d_model), lambda i: (0, 0)),  # W2 (resident)
                    pl.BlockSpec((1, d_model), lambda i: (0, 0)),      # b2 (resident)
                ],
                out_specs=pl.BlockSpec((tm, d_model), lambda i: (i, 0)),
            ),
            compiler_params=pltpu.CompilerParams(
                dimension_semantics=("parallel",),
                vmem_limit_bytes=vmem_limit,
            ),
        )(x2d, w1c, b1c, w2c, b2c)
        return out2d[:M].reshape(B, S, d_model)

    # ---------------- streamed path: d_mlp in tk chunks, trailing reduction axis --
    if tk is None:
        tk = _pick_k_chunk(d_mlp, d_model, vmem_cap, c_sz)
    assert d_mlp % tk == 0, "d_mlp must be divisible by the d_mlp chunk size"
    nk = d_mlp // tk

    footprint = (2 * tm * d_model * (x_sz + o_sz)      # x / out double-buffered
                 + 2 * 2 * d_model * tk * c_sz         # W1/W2 chunks double-buffered
                 + 2 * (tk + d_model) * 4              # bias chunks
                 + tm * tk * (4 + c_sz)                # h (f32 + bf16 copy)
                 + tm * d_model * (c_sz + 4))          # x cast + resident f32 acc/out
    vmem_limit = int(min(0.85 * vmem_cap, max(32 << 20, 1.5 * footprint)))

    in_specs = [
        pl.BlockSpec((tm, d_model), lambda i, k: (i, 0)),      # x row tile
        pl.BlockSpec((d_model, tk), lambda i, k: (0, k)),      # W1 chunk (streams)
        pl.BlockSpec((1, tk), lambda i, k: (0, k)),            # b1 chunk
        pl.BlockSpec((tk, d_model), lambda i, k: (k, 0)),      # W2 chunk (streams)
        pl.BlockSpec((1, d_model), lambda i, k: (0, 0)),       # b2
    ]
    out_spec = pl.BlockSpec((tm, d_model), lambda i, k: (i, 0))

    if jnp.dtype(out_dtype) == jnp.dtype(jnp.float32):
        kernel, scratch = ffn_kernel_stream_accout, []
    else:
        kernel, scratch = ffn_kernel_stream_scratch, [pltpu.VMEM((tm, d_model), jnp.float32)]

    out2d = pl.pallas_call(
        kernel,
        out_shape=jax.ShapeDtypeStruct((m_pad, d_model), out_dtype),
        grid_spec=pltpu.PrefetchScalarGridSpec(
            num_scalar_prefetch=0,
            grid=(grid_rows, nk),                      # reduction (d_mlp chunks) last
            in_specs=in_specs,
            out_specs=out_spec,
            scratch_shapes=scratch,
        ),
        compiler_params=pltpu.CompilerParams(
            dimension_semantics=("parallel", "arbitrary"),
            vmem_limit_bytes=vmem_limit,
        ),
    )(x2d, w1c, b1c, w2c, b2c)
    return out2d[:M].reshape(B, S, d_model)


def init_params(key, d_model, d_mlp, dtype=jnp.float32):
    """Deterministic init mimicking torch nn.Linear (uniform(-1/sqrt(fan_in), 1/sqrt(fan_in)))."""
    k1, k2, k3, k4 = jax.random.split(key, 4)
    bound1 = 1.0 / (d_model ** 0.5)
    bound2 = 1.0 / (d_mlp ** 0.5)
    w1 = jax.random.uniform(k1, (d_model, d_mlp), dtype, -bound1, bound1)
    b1 = jax.random.uniform(k2, (1, d_mlp), dtype, -bound1, bound1)
    w2 = jax.random.uniform(k3, (d_mlp, d_model), dtype, -bound2, bound2)
    b2 = jax.random.uniform(k4, (1, d_model), dtype, -bound2, bound2)
    return w1, b1, w2, b2


if __name__ == "__main__":
    # Module defaults: d_model=512, d_mlp=1024; small batch/seq.
    batch, seq, dm, dh = 2, 8, 512, 1024

    key = jax.random.PRNGKey(0)
    kx, kp = jax.random.split(key)
    x = jax.random.normal(kx, (batch, seq, dm), dtype=jnp.float32)
    w1, b1, w2, b2 = init_params(kp, dm, dh)

    # Store weights in bf16 once, off the hot path (no per-call weight-cast pass).
    w1c = w1.astype(jnp.bfloat16)
    w2c = w2.astype(jnp.bfloat16)

    # Reference with matching precision (bf16 matmul operands, f32 accumulation, dropout=identity).
    xb = x.reshape(-1, dm).astype(jnp.bfloat16)
    h = jnp.dot(xb, w1c, preferred_element_type=jnp.float32)
    h = jnp.maximum(h + b1.astype(jnp.float32), 0.0)
    ref = jnp.dot(h.astype(jnp.bfloat16), w2c, preferred_element_type=jnp.float32)
    ref = (ref + b2.astype(jnp.float32)).reshape(batch, seq, dm)

    # 1) Resident-weights fast path (auto-selected for this small model).
    out = feed_forward(x, w1c, b1, w2c, b2)
    out = jax.block_until_ready(out)
    assert out.shape == (batch, seq, dm) and out.dtype == x.dtype
    assert jnp.allclose(out.astype(jnp.float32), ref, atol=1e-2, rtol=1e-2), \
        "resident path mismatch vs reference"

    # 2) Streamed-weights path (forced via tk) — exercises the reduction-axis kernel.
    out_s = feed_forward(x, w1c, b1, w2c, b2, tk=512)
    out_s = jax.block_until_ready(out_s)
    assert jnp.allclose(out_s.astype(jnp.float32), ref, atol=1e-2, rtol=1e-2), \
        "streamed path mismatch vs reference"

    print("KERNEL_OK")
</pallas_src>

<mosaic_0001>
module attributes {stable_mosaic.version = 11 : i64} {
  func.func @ffn_kernel_resident(%arg0: i32, %arg1: memref<16x512xf32, #tpu.memory_space<vmem>>, %arg2: memref<512x1024xbf16, #tpu.memory_space<vmem>>, %arg3: memref<1x1024xf32, #tpu.memory_space<vmem>>, %arg4: memref<1024x512xbf16, #tpu.memory_space<vmem>>, %arg5: memref<1x512xf32, #tpu.memory_space<vmem>>, %arg6: memref<16x512xf32, #tpu.memory_space<vmem>>) attributes {dimension_semantics = [#tpu.dimension_semantics<parallel>], iteration_bounds = array<i64: 1>, scalar_prefetch = 0 : i64, scratch_operands = 0 : i64, tpu.core_type = #tpu.core_type<tc>, window_params = [{transform_indices = @transform_0, window_bounds = array<i64: 16, 512>}, {pipeline_mode = #tpu.pipeline_mode<synchronous>, transform_indices = @transform_1, window_bounds = array<i64: 512, 1024>}, {pipeline_mode = #tpu.pipeline_mode<synchronous>, transform_indices = @transform_2, window_bounds = array<i64: 1, 1024>}, {pipeline_mode = #tpu.pipeline_mode<synchronous>, transform_indices = @transform_3, window_bounds = array<i64: 1024, 512>}, {pipeline_mode = #tpu.pipeline_mode<synchronous>, transform_indices = @transform_4, window_bounds = array<i64: 1, 512>}, {transform_indices = @transform_5, window_bounds = array<i64: 16, 512>}]} {
    %c0 = arith.constant 0 : index
    %c0_0 = arith.constant 0 : index
    %0 = vector.load %arg1[%c0, %c0_0] : memref<16x512xf32, #tpu.memory_space<vmem>>, vector<16x512xf32>
    %1 = arith.truncf %0 : vector<16x512xf32> to vector<16x512xbf16>
    %c0_1 = arith.constant 0 : index
    %c0_2 = arith.constant 0 : index
    %2 = vector.load %arg2[%c0_1, %c0_2] : memref<512x1024xbf16, #tpu.memory_space<vmem>>, vector<512x1024xbf16>
    %cst = arith.constant dense<0.000000e+00> : vector<16x1024xf32>
    %3 = tpu.matmul %1, %2, %cst {dimension_numbers = #tpu.dot_dimension_numbers<[1], [0], [0], [1], [0, 0, 1, 1], [], []>} : vector<16x512xbf16>, vector<512x1024xbf16>, vector<16x1024xf32> -> vector<16x1024xf32>
    %c0_3 = arith.constant 0 : index
    %c0_4 = arith.constant 0 : index
    %4 = vector.load %arg3[%c0_3, %c0_4] : memref<1x1024xf32, #tpu.memory_space<vmem>>, vector<1x1024xf32>
    %5 = vector.broadcast %4 : vector<1x1024xf32> to vector<16x1024xf32>
    %6 = arith.addf %3, %5 : vector<16x1024xf32>
    %cst_5 = arith.constant 0.000000e+00 : f32
    %7 = vector.broadcast %cst_5 : f32 to vector<16x1024xf32>
    %8 = arith.maximumf %6, %7 : vector<16x1024xf32>
    %9 = arith.truncf %8 : vector<16x1024xf32> to vector<16x1024xbf16>
    %c0_6 = arith.constant 0 : index
    %c0_7 = arith.constant 0 : index
    %10 = vector.load %arg4[%c0_6, %c0_7] : memref<1024x512xbf16, #tpu.memory_space<vmem>>, vector<1024x512xbf16>
    %cst_8 = arith.constant dense<0.000000e+00> : vector<16x512xf32>
    %11 = tpu.matmul %9, %10, %cst_8 {dimension_numbers = #tpu.dot_dimension_numbers<[1], [0], [0], [1], [0, 0, 1, 1], [], []>} : vector<16x1024xbf16>, vector<1024x512xbf16>, vector<16x512xf32> -> vector<16x512xf32>
    %c0_9 = arith.constant 0 : index
    %c0_10 = arith.constant 0 : index
    %12 = vector.load %arg5[%c0_9, %c0_10] : memref<1x512xf32, #tpu.memory_space<vmem>>, vector<1x512xf32>
    %13 = vector.broadcast %12 : vector<1x512xf32> to vector<16x512xf32>
    %14 = arith.addf %11, %13 : vector<16x512xf32>
    %c0_11 = arith.constant 0 : index
    %c0_12 = arith.constant 0 : index
    %15 = vector.load %arg6[%c0_11, %c0_12] : memref<16x512xf32, #tpu.memory_space<vmem>>, vector<16x512xf32>
    tpu.vector_store %arg6[%c0_11, %c0_12], %14 {strides = array<i32>} : memref<16x512xf32, #tpu.memory_space<vmem>>, vector<16x512xf32>,
    return
  }
  func.func @transform_0(%arg0: i32) -> (i32, i32) {
    %c0_i32 = arith.constant 0 : i32
    %c0_i32_0 = arith.constant 0 : i32
    return %arg0, %c0_i32 : i32, i32
  }
  func.func @transform_1(%arg0: i32) -> (i32, i32) {
    %c0_i32 = arith.constant 0 : i32
    %c0_i32_0 = arith.constant 0 : i32
    %c0_i32_1 = arith.constant 0 : i32
    return %c0_i32, %c0_i32_0 : i32, i32
  }
  func.func @transform_2(%arg0: i32) -> (i32, i32) {
    %c0_i32 = arith.constant 0 : i32
    %c0_i32_0 = arith.constant 0 : i32
    %c0_i32_1 = arith.constant 0 : i32
    return %c0_i32, %c0_i32_0 : i32, i32
  }
  func.func @transform_3(%arg0: i32) -> (i32, i32) {
    %c0_i32 = arith.constant 0 : i32
    %c0_i32_0 = arith.constant 0 : i32
    %c0_i32_1 = arith.constant 0 : i32
    return %c0_i32, %c0_i32_0 : i32, i32
  }
  func.func @transform_4(%arg0: i32) -> (i32, i32) {
    %c0_i32 = arith.constant 0 : i32
    %c0_i32_0 = arith.constant 0 : i32
    %c0_i32_1 = arith.constant 0 : i32
    return %c0_i32, %c0_i32_0 : i32, i32
  }
  func.func @transform_5(%arg0: i32) -> (i32, i32) {
    %c0_i32 = arith.constant 0 : i32
    %c0_i32_0 = arith.constant 0 : i32
    return %arg0, %c0_i32 : i32, i32
  }
}

</mosaic_0001>

<llo_original>
// kernel: tpu_custom_call.1
$region0: #{tpu_custom_call.1}
  #allocation0 [shape = 'u32[]', space=smem, size = 0x4, offset = 0x4, fixed_abs, tag = 'smem constant byte address 0x4 - core index']
  #allocation1 [shape = 'u32[72,128]{1,0:T(1,128)}', space=vmem, size = 0x9000, scoped, tag = 'internal scratch']
  %s0 = inlined_call_operand.hbm [shape: f32[16,512], index: 0, kind: input, shape index: {}]
  %s1 = inlined_call_operand.hbm [shape: bf16[512,1024], index: 1, kind: input, shape index: {}]
  %s2 = inlined_call_operand.hbm [shape: f32[1,1024], index: 2, kind: input, shape index: {}]
  %s3 = inlined_call_operand.hbm [shape: bf16[1024,512], index: 3, kind: input, shape index: {}]
  %s4 = inlined_call_operand.hbm [shape: f32[1,512], index: 4, kind: input, shape index: {}]
  %s5 = inlined_call_operand.hbm [shape: f32[16,512], index: 5, kind: output, shape index: {}]
  %s6 = sld [smem:[#allocation0]]
  $region50: #{tpu_custom_call.1} parent=0
    _
  %s8 = ssub.s32 1, %s6
  %s9 = scalar_select 0, %s8, %s6
  $region1: #{tpu_custom_call.1} parent=0
    #allocation2 [shape = 'u8[32768]{0}', space=vmem, size = 0x8000, scoped, tag = 'input window, operand 0, single buffered']
    #allocation3 [shape = 's32[1]{0}', space=sflag, size = 0x4, scoped, tag = 'scoped memory for tpu_custom_call.1']
    #allocation4 [shape = 's32[1]{0}', space=sflag, size = 0x4, scoped, tag = 'scoped memory for tpu_custom_call.1']
    #allocation5 [shape = 'u8[1048576]{0}', space=vmem, size = 0x100000, scoped, tag = 'input window, operand 1, single buffered']
    #allocation6 [shape = 's32[1]{0}', space=sflag, size = 0x4, scoped, tag = 'scoped memory for tpu_custom_call.1']
    #allocation7 [shape = 'u8[4096]{0}', space=vmem, size = 0x1000, scoped, tag = 'input window, operand 2, single buffered']
    #allocation8 [shape = 'u8[1048576]{0}', space=vmem, size = 0x100000, scoped, tag = 'input window, operand 3, single buffered']
    #allocation9 [shape = 's32[1]{0}', space=sflag, size = 0x4, scoped, tag = 'scoped memory for tpu_custom_call.1']
    #allocation10 [shape = 'u8[2048]{0}', space=vmem, size = 0x800, scoped, tag = 'input window, operand 4, single buffered']
    #allocation11 [shape = 'u8[32768]{0}', space=vmem, size = 0x8000, scoped, tag = 'output window, operand 0, single buffered']
    %10 = vsyncpa [#allocation3], 0
    %11 = vsyncpa [#allocation6], 0
    %12 = vsyncpa [#allocation9], 0
    %13 = vsyncpa [#allocation4], 0
    // Predicated region
    $region2: #{tpu_custom_call.1} parent=1 // pred_check
      _
    $region3: #{tpu_custom_call.1} parent=1 // pred_check_branch
      %15 = sbr.rel (0) target = $region5
    $region4: #{tpu_custom_call.1} parent=1 // pred_region
      %17 = vsyncadd [#allocation3], 0
      %s18 = sshll.u32 %s0, 4
      %s19 = int_to_ptr.hbm [resolvable:$true] %s18
      %s20 = sshll.u32 [#allocation2], 4
      %s21 = int_to_ptr.vmem [resolvable:$true] %s20
      %26 = dma.hbm_to_vmem [thread:$0]  %s19, 1024, %s21, [#allocation3], 512, 512, 32
    $region5: #{tpu_custom_call.1} parent=1 // pred_fallthru
      _
    // Predicated region
    $region6: #{tpu_custom_call.1} parent=1 // pred_check
      _
    $region7: #{tpu_custom_call.1} parent=1 // pred_check_branch
      %28 = sbr.rel (0) target = $region9
    $region8: #{tpu_custom_call.1} parent=1 // pred_region
      %30 = vsyncadd [#allocation6], 0
      %s31 = sshll.u32 %s1, 4
      %s32 = int_to_ptr.hbm [resolvable:$true] %s31
      %s33 = sshll.u32 [#allocation5], 4
      %s34 = int_to_ptr.vmem [resolvable:$true] %s33
      %39 = dma.hbm_to_vmem [thread:$0]  %s32, 32768, %s34, [#allocation6], 512, 512, 32
    $region9: #{tpu_custom_call.1} parent=1 // pred_fallthru
      _
    // Predicated region
    $region10: #{tpu_custom_call.1} parent=1 // pred_check
      _
    $region11: #{tpu_custom_call.1} parent=1 // pred_check_branch
      %41 = sbr.rel (0) target = $region13
    $region12: #{tpu_custom_call.1} parent=1 // pred_region
      %43 = vsyncadd [#allocation6], 0
      %s45 = sshll.u32 %s2, 4
      %s46 = int_to_ptr.hbm [resolvable:$true] %s45
      %s47 = sshll.u32 [#allocation7], 4
      %s48 = int_to_ptr.vmem [resolvable:$true] %s47
      %50 = dma.hbm_to_vmem [thread:$0]  %s46, 128, %s48, [#allocation6]
    $region13: #{tpu_custom_call.1} parent=1 // pred_fallthru
      _
    // Predicated region
    $region14: #{tpu_custom_call.1} parent=1 // pred_check
      _
    $region15: #{tpu_custom_call.1} parent=1 // pred_check_branch
      %52 = sbr.rel (0) target = $region17
    $region16: #{tpu_custom_call.1} parent=1 // pred_region
      %54 = vsyncadd [#allocation9], 0
      %s55 = sshll.u32 %s3, 4
      %s56 = int_to_ptr.hbm [resolvable:$true] %s55
      %s57 = sshll.u32 [#allocation8], 4
      %s58 = int_to_ptr.vmem [resolvable:$true] %s57
      %63 = dma.hbm_to_vmem [thread:$0]  %s56, 32768, %s58, [#allocation9], 256, 256, 16
    $region17: #{tpu_custom_call.1} parent=1 // pred_fallthru
      _
    // Predicated region
    $region18: #{tpu_custom_call.1} parent=1 // pred_check
      _
    $region19: #{tpu_custom_call.1} parent=1 // pred_check_branch
      %65 = sbr.rel (0) target = $region21
    $region20: #{tpu_custom_call.1} parent=1 // pred_region
      %67 = vsyncadd [#allocation9], 0
      %s69 = sshll.u32 %s4, 4
      %s70 = int_to_ptr.hbm [resolvable:$true] %s69
      %s71 = sshll.u32 [#allocation10], 4
      %s72 = int_to_ptr.vmem [resolvable:$true] %s71
      %74 = dma.hbm_to_vmem [thread:$0]  %s70, 64, %s72, [#allocation9]
    $region21: #{tpu_custom_call.1} parent=1 // pred_fallthru
      _
    // Predicated region
    $region22: #{tpu_custom_call.1} parent=1 // pred_check
      _
    $region23: #{tpu_custom_call.1} parent=1 // pred_check_branch
      %76 = sbr.rel (0) target = $region25
    $region24: #{tpu_custom_call.1} parent=1 // pred_region
      %78 = dma.done [#allocation3], 1024
    $region25: #{tpu_custom_call.1} parent=1 // pred_fallthru
      _
    // Predicated region
    $region26: #{tpu_custom_call.1} parent=1 // pred_check
      _
    $region27: #{tpu_custom_call.1} parent=1 // pred_check_branch
      %80 = sbr.rel (0) target = $region29
    $region28: #{tpu_custom_call.1} parent=1 // pred_region
      %82 = dma.done [#allocation6], 32768
    $region29: #{tpu_custom_call.1} parent=1 // pred_fallthru
      _
    // Predicated region
    $region30: #{tpu_custom_call.1} parent=1 // pred_check
      _
    $region31: #{tpu_custom_call.1} parent=1 // pred_check_branch
      %84 = sbr.rel (0) target = $region33
    $region32: #{tpu_custom_call.1} parent=1 // pred_region
      %86 = dma.done [#allocation6], 128
    $region33: #{tpu_custom_call.1} parent=1 // pred_fallthru
      _
    // Predicated region
    $region34: #{tpu_custom_call.1} parent=1 // pred_check
      _
    $region35: #{tpu_custom_call.1} parent=1 // pred_check_branch
      %88 = sbr.rel (0) target = $region37
    $region36: #{tpu_custom_call.1} parent=1 // pred_region
      %90 = dma.done [#allocation9], 32768
    $region37: #{tpu_custom_call.1} parent=1 // pred_fallthru
      _
    // Predicated region
    $region38: #{tpu_custom_call.1} parent=1 // pred_check
      _
    $region39: #{tpu_custom_call.1} parent=1 // pred_check_branch
      %92 = sbr.rel (0) target = $region41
    $region40: #{tpu_custom_call.1} parent=1 // pred_region
      %94 = dma.done [#allocation9], 64
    $region41: #{tpu_custom_call.1} parent=1 // pred_fallthru
      _
    %v95 = vld [vmem:[#allocation2] sm:$0xff]
    %v96 = vld [vmem:[#allocation2 + $0x8] sm:$0xff]
    %v97 = vld [vmem:[#allocation2 + $0x10] sm:$0xff]
    %v98 = vld [vmem:[#allocation2 + $0x18] sm:$0xff]
    %v99 = vld [vmem:[#allocation2 + $0x20] sm:$0xff]
    %v100 = vld [vmem:[#allocation2 + $0x28] sm:$0xff]
    %v101 = vld [vmem:[#allocation2 + $0x30] sm:$0xff]
    %v102 = vld [vmem:[#allocation2 + $0x38] sm:$0xff]
    %v103 = vpack.c.bf16 %v99, %v95
    %v104 = vpack.c.bf16 %v100, %v96
    %v105 = vpack.c.bf16 %v101, %v97
    %v106 = vpack.c.bf16 %v102, %v98
    %v107 = vld [vmem:[#allocation5] sm:$0xff]
    %v108 = vld [vmem:[#allocation5 + $0x8] sm:$0xff]
    %v109 = vld [vmem:[#allocation5 + $0x10] sm:$0xff]
    %v110 = vld [vmem:[#allocation5 + $0x18] sm:$0xff]
    %v111 = vld [vmem:[#allocation5 + $0x20] sm:$0xff]
    %v112 = vld [vmem:[#allocation5 + $0x28] sm:$0xff]
    %v113 = vld [vmem:[#allocation5 + $0x30] sm:$0xff]
    %v114 = vld [vmem:[#allocation5 + $0x38] sm:$0xff]
    %v115 = vld [vmem:[#allocation5 + $0x40] sm:$0xff]
    %v116 = vld [vmem:[#allocation5 + $0x48] sm:$0xff]
    %v117 = vld [vmem:[#allocation5 + $0x50] sm:$0xff]
    %v118 = vld [vmem:[#allocation5 + $0x58] sm:$0xff]
    %v119 = vld [vmem:[#allocation5 + $0x60] sm:$0xff]
    %v120 = vld [vmem:[#allocation5 + $0x68] sm:$0xff]
    %v121 = vld [vmem:[#allocation5 + $0x70] sm:$0xff]
    %v122 = vld [vmem:[#allocation5 + $0x78] sm:$0xff]
    %v123 = vld [vmem:[#allocation5 + $0x80] sm:$0xff]
    %v124 = vld [vmem:[#allocation5 + $0x88] sm:$0xff]
    %v125 = vld [vmem:[#allocation5 + $0x90] sm:$0xff]
    %v126 = vld [vmem:[#allocation5 + $0x98] sm:$0xff]
    %v127 = vld [vmem:[#allocation5 + $0xa0] sm:$0xff]
    %v128 = vld [vmem:[#allocation5 + $0xa8] sm:$0xff]
    %v129 = vld [vmem:[#allocation5 + $0xb0] sm:$0xff]
    %v130 = vld [vmem:[#allocation5 + $0xb8] sm:$0xff]
    %v131 = vld [vmem:[#allocation5 + $0xc0] sm:$0xff]
    %v132 = vld [vmem:[#allocation5 + $0xc8] sm:$0xff]
    %v133 = vld [vmem:[#allocation5 + $0xd0] sm:$0xff]
    %v134 = vld [vmem:[#allocation5 + $0xd8] sm:$0xff]
    %v135 = vld [vmem:[#allocation5 + $0xe0] sm:$0xff]
    %v136 = vld [vmem:[#allocation5 + $0xe8] sm:$0xff]
    %v137 = vld [vmem:[#allocation5 + $0xf0] sm:$0xff]
    %v138 = vld [vmem:[#allocation5 + $0xf8] sm:$0xff]
    %v139 = vld [vmem:[#allocation5 + $0x100] sm:$0xff]
    %v140 = vld [vmem:[#allocation5 + $0x108] sm:$0xff]
    %v141 = vld [vmem:[#allocation5 + $0x110] sm:$0xff]
    %v142 = vld [vmem:[#allocation5 + $0x118] sm:$0xff]
    %v143 = vld [vmem:[#allocation5 + $0x120] sm:$0xff]
    %v144 = vld [vmem:[#allocation5 + $0x128] sm:$0xff]
    %v145 = vld [vmem:[#allocation5 + $0x130] sm:$0xff]
    %v146 = vld [vmem:[#allocation5 + $0x138] sm:$0xff]
    %v147 = vld [vmem:[#allocation5 + $0x140] sm:$0xff]
    %v148 = vld [vmem:[#allocation5 + $0x148] sm:$0xff]
    %v149 = vld [vmem:[#allocation5 + $0x150] sm:$0xff]
    %v150 = vld [vmem:[#allocation5 + $0x158] sm:$0xff]
    %v151 = vld [vmem:[#allocation5 + $0x160] sm:$0xff]
    %v152 = vld [vmem:[#allocation5 + $0x168] sm:$0xff]
    %v153 = vld [vmem:[#allocation5 + $0x170] sm:$0xff]
    %v154 = vld [vmem:[#allocation5 + $0x178] sm:$0xff]
    %v155 = vld [vmem:[#allocation5 + $0x180] sm:$0xff]
    %v156 = vld [vmem:[#allocation5 + $0x188] sm:$0xff]
    %v157 = vld [vmem:[#allocation5 + $0x190] sm:$0xff]
    %v158 = vld [vmem:[#allocation5 + $0x198] sm:$0xff]
    %v159 = vld [vmem:[#allocation5 + $0x1a0] sm:$0xff]
    %v160 = vld [vmem:[#allocation5 + $0x1a8] sm:$0xff]
    %v161 = vld [vmem:[#allocation5 + $0x1b0] sm:$0xff]
    %v162 = vld [vmem:[#allocation5 + $0x1b8] sm:$0xff]
    %v163 = vld [vmem:[#allocation5 + $0x1c0] sm:$0xff]
    %v164 = vld [vmem:[#allocation5 + $0x1c8] sm:$0xff]
    %v165 = vld [vmem:[#allocation5 + $0x1d0] sm:$0xff]
    %v166 = vld [vmem:[#allocation5 + $0x1d8] sm:$0xff]
    %v167 = vld [vmem:[#allocation5 + $0x1e0] sm:$0xff]
    %v168 = vld [vmem:[#allocation5 + $0x1e8] sm:$0xff]
    %v169 = vld [vmem:[#allocation5 + $0x1f0] sm:$0xff]
    %v170 = vld [vmem:[#allocation5 + $0x1f8] sm:$0xff]
    %v171 = vld [vmem:[#allocation5 + $0x200] sm:$0xff]
    %v172 = vld [vmem:[#allocation5 + $0x208] sm:$0xff]
    %v173 = vld [vmem:[#allocation5 + $0x210] sm:$0xff]
    %v174 = vld [vmem:[#allocation5 + $0x218] sm:$0xff]
    %v175 = vld [vmem:[#allocation5 + $0x220] sm:$0xff]
    %v176 = vld [vmem:[#allocation5 + $0x228] sm:$0xff]
    %v177 = vld [vmem:[#allocation5 + $0x230] sm:$0xff]
    %v178 = vld [vmem:[#allocation5 + $0x238] sm:$0xff]
    %v179 = vld [vmem:[#allocation5 + $0x240] sm:$0xff]
    %v180 = vld [vmem:[#allocation5 + $0x248] sm:$0xff]
    %v181 = vld [vmem:[#allocation5 + $0x250] sm:$0xff]
    %v182 = vld [vmem:[#allocation5 + $0x258] sm:$0xff]
    %v183 = vld [vmem:[#allocation5 + $0x260] sm:$0xff]
    %v184 = vld [vmem:[#allocation5 + $0x268] sm:$0xff]
    %v185 = vld [vmem:[#allocation5 + $0x270] sm:$0xff]
    %v186 = vld [vmem:[#allocation5 + $0x278] sm:$0xff]
    %v187 = vld [vmem:[#allocation5 + $0x280] sm:$0xff]
    %v188 = vld [vmem:[#allocation5 + $0x288] sm:$0xff]
    %v189 = vld [vmem:[#allocation5 + $0x290] sm:$0xff]
    %v190 = vld [vmem:[#allocation5 + $0x298] sm:$0xff]
    %v191 = vld [vmem:[#allocation5 + $0x2a0] sm:$0xff]
    %v192 = vld [vmem:[#allocation5 + $0x2a8] sm:$0xff]
    %v193 = vld [vmem:[#allocation5 + $0x2b0] sm:$0xff]
    %v194 = vld [vmem:[#allocation5 + $0x2b8] sm:$0xff]
    %v195 = vld [vmem:[#allocation5 + $0x2c0] sm:$0xff]
    %v196 = vld [vmem:[#allocation5 + $0x2c8] sm:$0xff]
    %v197 = vld [vmem:[#allocation5 + $0x2d0] sm:$0xff]
    %v198 = vld [vmem:[#allocation5 + $0x2d8] sm:$0xff]
    %v199 = vld [vmem:[#allocation5 + $0x2e0] sm:$0xff]
    %v200 = vld [vmem:[#allocation5 + $0x2e8] sm:$0xff]
    %v201 = vld [vmem:[#allocation5 + $0x2f0] sm:$0xff]
    %v202 = vld [vmem:[#allocation5 + $0x2f8] sm:$0xff]
    %v203 = vld [vmem:[#allocation5 + $0x300] sm:$0xff]
    %v204 = vld [vmem:[#allocation5 + $0x308] sm:$0xff]
    %v205 = vld [vmem:[#allocation5 + $0x310] sm:$0xff]
    %v206 = vld [vmem:[#allocation5 + $0x318] sm:$0xff]
    %v207 = vld [vmem:[#allocation5 + $0x320] sm:$0xff]
    %v208 = vld [vmem:[#allocation5 + $0x328] sm:$0xff]
    %v209 = vld [vmem:[#allocation5 + $0x330] sm:$0xff]
    %v210 = vld [vmem:[#allocation5 + $0x338] sm:$0xff]
    %v211 = vld [vmem:[#allocation5 + $0x340] sm:$0xff]
    %v212 = vld [vmem:[#allocation5 + $0x348] sm:$0xff]
    %v213 = vld [vmem:[#allocation5 + $0x350] sm:$0xff]
    %v214 = vld [vmem:[#allocation5 + $0x358] sm:$0xff]
    %v215 = vld [vmem:[#allocation5 + $0x360] sm:$0xff]
    %v216 = vld [vmem:[#allocation5 + $0x368] sm:$0xff]
    %v217 = vld [vmem:[#allocation5 + $0x370] sm:$0xff]
    %v218 = vld [vmem:[#allocation5 + $0x378] sm:$0xff]
    %v219 = vld [vmem:[#allocation5 + $0x380] sm:$0xff]
    %v220 = vld [vmem:[#allocation5 + $0x388] sm:$0xff]
    %v221 = vld [vmem:[#allocation5 + $0x390] sm:$0xff]
    %v222 = vld [vmem:[#allocation5 + $0x398] sm:$0xff]
    %v223 = vld [vmem:[#allocation5 + $0x3a0] sm:$0xff]
    %v224 = vld [vmem:[#allocation5 + $0x3a8] sm:$0xff]
    %v225 = vld [vmem:[#allocation5 + $0x3b0] sm:$0xff]
    %v226 = vld [vmem:[#allocation5 + $0x3b8] sm:$0xff]
    %v227 = vld [vmem:[#allocation5 + $0x3c0] sm:$0xff]
    %v228 = vld [vmem:[#allocation5 + $0x3c8] sm:$0xff]
    %v229 = vld [vmem:[#allocation5 + $0x3d0] sm:$0xff]
    %v230 = vld [vmem:[#allocation5 + $0x3d8] sm:$0xff]
    %v231 = vld [vmem:[#allocation5 + $0x3e0] sm:$0xff]
    %v232 = vld [vmem:[#allocation5 + $0x3e8] sm:$0xff]
    %v233 = vld [vmem:[#allocation5 + $0x3f0] sm:$0xff]
    %v234 = vld [vmem:[#allocation5 + $0x3f8] sm:$0xff]
    %v235 = vld [vmem:[#allocation5 + $0x400] sm:$0xff]
    %v236 = vld [vmem:[#allocation5 + $0x408] sm:$0xff]
    %v237 = vld [vmem:[#allocation5 + $0x410] sm:$0xff]
    %v238 = vld [vmem:[#allocation5 + $0x418] sm:$0xff]
    %v239 = vld [vmem:[#allocation5 + $0x420] sm:$0xff]
    %v240 = vld [vmem:[#allocation5 + $0x428] sm:$0xff]
    %v241 = vld [vmem:[#allocation5 + $0x430] sm:$0xff]
    %v242 = vld [vmem:[#allocation5 + $0x438] sm:$0xff]
    %v243 = vld [vmem:[#allocation5 + $0x440] sm:$0xff]
    %v244 = vld [vmem:[#allocation5 + $0x448] sm:$0xff]
    %v245 = vld [vmem:[#allocation5 + $0x450] sm:$0xff]
    %v246 = vld [vmem:[#allocation5 + $0x458] sm:$0xff]
    %v247 = vld [vmem:[#allocation5 + $0x460] sm:$0xff]
    %v248 = vld [vmem:[#allocation5 + $0x468] sm:$0xff]
    %v249 = vld [vmem:[#allocation5 + $0x470] sm:$0xff]
    %v250 = vld [vmem:[#allocation5 + $0x478] sm:$0xff]
    %v251 = vld [vmem:[#allocation5 + $0x480] sm:$0xff]
    %v252 = vld [vmem:[#allocation5 + $0x488] sm:$0xff]
    %v253 = vld [vmem:[#allocation5 + $0x490] sm:$0xff]
    %v254 = vld [vmem:[#allocation5 + $0x498] sm:$0xff]
    %v255 = vld [vmem:[#allocation5 + $0x4a0] sm:$0xff]
    %v256 = vld [vmem:[#allocation5 + $0x4a8] sm:$0xff]
    %v257 = vld [vmem:[#allocation5 + $0x4b0] sm:$0xff]
    %v258 = vld [vmem:[#allocation5 + $0x4b8] sm:$0xff]
    %v259 = vld [vmem:[#allocation5 + $0x4c0] sm:$0xff]
    %v260 = vld [vmem:[#allocation5 + $0x4c8] sm:$0xff]
    %v261 = vld [vmem:[#allocation5 + $0x4d0] sm:$0xff]
    %v262 = vld [vmem:[#allocation5 + $0x4d8] sm:$0xff]
    %v263 = vld [vmem:[#allocation5 + $0x4e0] sm:$0xff]
    %v264 = vld [vmem:[#allocation5 + $0x4e8] sm:$0xff]
    %v265 = vld [vmem:[#allocation5 + $0x4f0] sm:$0xff]
    %v266 = vld [vmem:[#allocation5 + $0x4f8] sm:$0xff]
    %v267 = vld [vmem:[#allocation5 + $0x500] sm:$0xff]
    %v268 = vld [vmem:[#allocation5 + $0x508] sm:$0xff]
    %v269 = vld [vmem:[#allocation5 + $0x510] sm:$0xff]
    %v270 = vld [vmem:[#allocation5 + $0x518] sm:$0xff]
    %v271 = vld [vmem:[#allocation5 + $0x520] sm:$0xff]
    %v272 = vld [vmem:[#allocation5 + $0x528] sm:$0xff]
    %v273 = vld [vmem:[#allocation5 + $0x530] sm:$0xff]
    %v274 = vld [vmem:[#allocation5 + $0x538] sm:$0xff]
    %v275 = vld [vmem:[#allocation5 + $0x540] sm:$0xff]
    %v276 = vld [vmem:[#allocation5 + $0x548] sm:$0xff]
    %v277 = vld [vmem:[#allocation5 + $0x550] sm:$0xff]
    %v278 = vld [vmem:[#allocation5 + $0x558] sm:$0xff]
    %v279 = vld [vmem:[#allocation5 + $0x560] sm:$0xff]
    %v280 = vld [vmem:[#allocation5 + $0x568] sm:$0xff]
    %v281 = vld [vmem:[#allocation5 + $0x570] sm:$0xff]
    %v282 = vld [vmem:[#allocation5 + $0x578] sm:$0xff]
    %v283 = vld [vmem:[#allocation5 + $0x580] sm:$0xff]
    %v284 = vld [vmem:[#allocation5 + $0x588] sm:$0xff]
    %v285 = vld [vmem:[#allocation5 + $0x590] sm:$0xff]
    %v286 = vld [vmem:[#allocation5 + $0x598] sm:$0xff]
    %v287 = vld [vmem:[#allocation5 + $0x5a0] sm:$0xff]
    %v288 = vld [vmem:[#allocation5 + $0x5a8] sm:$0xff]
    %v289 = vld [vmem:[#allocation5 + $0x5b0] sm:$0xff]
    %v290 = vld [vmem:[#allocation5 + $0x5b8] sm:$0xff]
    %v291 = vld [vmem:[#allocation5 + $0x5c0] sm:$0xff]
    %v292 = vld [vmem:[#allocation5 + $0x5c8] sm:$0xff]
    %v293 = vld [vmem:[#allocation5 + $0x5d0] sm:$0xff]
    %v294 = vld [vmem:[#allocation5 + $0x5d8] sm:$0xff]
    %v295 = vld [vmem:[#allocation5 + $0x5e0] sm:$0xff]
    %v296 = vld [vmem:[#allocation5 + $0x5e8] sm:$0xff]
    %v297 = vld [vmem:[#allocation5 + $0x5f0] sm:$0xff]
    %v298 = vld [vmem:[#allocation5 + $0x5f8] sm:$0xff]
    %v299 = vld [vmem:[#allocation5 + $0x600] sm:$0xff]
    %v300 = vld [vmem:[#allocation5 + $0x608] sm:$0xff]
    %v301 = vld [vmem:[#allocation5 + $0x610] sm:$0xff]
    %v302 = vld [vmem:[#allocation5 + $0x618] sm:$0xff]
    %v303 = vld [vmem:[#allocation5 + $0x620] sm:$0xff]
    %v304 = vld [vmem:[#allocation5 + $0x628] sm:$0xff]
    %v305 = vld [vmem:[#allocation5 + $0x630] sm:$0xff]
    %v306 = vld [vmem:[#allocation5 + $0x638] sm:$0xff]
    %v307 = vld [vmem:[#allocation5 + $0x640] sm:$0xff]
    %v308 = vld [vmem:[#allocation5 + $0x648] sm:$0xff]
    %v309 = vld [vmem:[#allocation5 + $0x650] sm:$0xff]
    %v310 = vld [vmem:[#allocation5 + $0x658] sm:$0xff]
    %v311 = vld [vmem:[#allocation5 + $0x660] sm:$0xff]
    %v312 = vld [vmem:[#allocation5 + $0x668] sm:$0xff]
    %v313 = vld [vmem:[#allocation5 + $0x670] sm:$0xff]
    %v314 = vld [vmem:[#allocation5 + $0x678] sm:$0xff]
    %v315 = vld [vmem:[#allocation5 + $0x680] sm:$0xff]
    %v316 = vld [vmem:[#allocation5 + $0x688] sm:$0xff]
    %v317 = vld [vmem:[#allocation5 + $0x690] sm:$0xff]
    %v318 = vld [vmem:[#allocation5 + $0x698] sm:$0xff]
    %v319 = vld [vmem:[#allocation5 + $0x6a0] sm:$0xff]
    %v320 = vld [vmem:[#allocation5 + $0x6a8] sm:$0xff]
    %v321 = vld [vmem:[#allocation5 + $0x6b0] sm:$0xff]
    %v322 = vld [vmem:[#allocation5 + $0x6b8] sm:$0xff]
    %v323 = vld [vmem:[#allocation5 + $0x6c0] sm:$0xff]
    %v324 = vld [vmem:[#allocation5 + $0x6c8] sm:$0xff]
    %v325 = vld [vmem:[#allocation5 + $0x6d0] sm:$0xff]
    %v326 = vld [vmem:[#allocation5 + $0x6d8] sm:$0xff]
    %v327 = vld [vmem:[#allocation5 + $0x6e0] sm:$0xff]
    %v328 = vld [vmem:[#allocation5 + $0x6e8] sm:$0xff]
    %v329 = vld [vmem:[#allocation5 + $0x6f0] sm:$0xff]
    %v330 = vld [vmem:[#allocation5 + $0x6f8] sm:$0xff]
    %v331 = vld [vmem:[#allocation5 + $0x700] sm:$0xff]
    %v332 = vld [vmem:[#allocation5 + $0x708] sm:$0xff]
    %v333 = vld [vmem:[#allocation5 + $0x710] sm:$0xff]
    %v334 = vld [vmem:[#allocation5 + $0x718] sm:$0xff]
    %v335 = vld [vmem:[#allocation5 + $0x720] sm:$0xff]
    %v336 = vld [vmem:[#allocation5 + $0x728] sm:$0xff]
    %v337 = vld [vmem:[#allocation5 + $0x730] sm:$0xff]
    %v338 = vld [vmem:[#allocation5 + $0x738] sm:$0xff]
    %v339 = vld [vmem:[#allocation5 + $0x740] sm:$0xff]
    %v340 = vld [vmem:[#allocation5 + $0x748] sm:$0xff]
    %v341 = vld [vmem:[#allocation5 + $0x750] sm:$0xff]
    %v342 = vld [vmem:[#allocation5 + $0x758] sm:$0xff]
    %v343 = vld [vmem:[#allocation5 + $0x760] sm:$0xff]
    %v344 = vld [vmem:[#allocation5 + $0x768] sm:$0xff]
    %v345 = vld [vmem:[#allocation5 + $0x770] sm:$0xff]
    %v346 = vld [vmem:[#allocation5 + $0x778] sm:$0xff]
    %v347 = vld [vmem:[#allocation5 + $0x780] sm:$0xff]
    %v348 = vld [vmem:[#allocation5 + $0x788] sm:$0xff]
    %v349 = vld [vmem:[#allocation5 + $0x790] sm:$0xff]
    %v350 = vld [vmem:[#allocation5 + $0x798] sm:$0xff]
    %v351 = vld [vmem:[#allocation5 + $0x7a0] sm:$0xff]
    %v352 = vld [vmem:[#allocation5 + $0x7a8] sm:$0xff]
    %v353 = vld [vmem:[#allocation5 + $0x7b0] sm:$0xff]
    %v354 = vld [vmem:[#allocation5 + $0x7b8] sm:$0xff]
    %v355 = vld [vmem:[#allocation5 + $0x7c0] sm:$0xff]
    %v356 = vld [vmem:[#allocation5 + $0x7c8] sm:$0xff]
    %v357 = vld [vmem:[#allocation5 + $0x7d0] sm:$0xff]
    %v358 = vld [vmem:[#allocation5 + $0x7d8] sm:$0xff]
    %v359 = vld [vmem:[#allocation5 + $0x7e0] sm:$0xff]
    %v360 = vld [vmem:[#allocation5 + $0x7e8] sm:$0xff]
    %v361 = vld [vmem:[#allocation5 + $0x7f0] sm:$0xff]
    %v362 = vld [vmem:[#allocation5 + $0x7f8] sm:$0xff]
    %v363 = vld [vmem:[#allocation7] sm:$0xff]
    %v365 = vperm.slane %v363, 0
    %v366 = vperm.slane %v363, 1
    %v367 = vperm.slane %v363, 2
    %v368 = vperm.slane %v363, 3
    %v369 = vperm.slane %v363, 4
    %v370 = vperm.slane %v363, 5
    %v371 = vperm.slane %v363, 6
    %v372 = vperm.slane %v363, 7
    %v637 = vunpack.c.l.b16 %v107
    %v638 = vunpack.c.h.b16 %v107
    %v639 = vunpack.c.l.b16 %v108
    %v640 = vunpack.c.h.b16 %v108
    %v641 = vunpack.c.l.b16 %v109
    %v642 = vunpack.c.h.b16 %v109
    %v643 = vunpack.c.l.b16 %v110
    %v644 = vunpack.c.h.b16 %v110
    %v645 = vunpack.c.l.b16 %v111
    %v646 = vunpack.c.h.b16 %v111
    %v647 = vunpack.c.l.b16 %v112
    %v648 = vunpack.c.h.b16 %v112
    %v649 = vunpack.c.l.b16 %v113
    %v650 = vunpack.c.h.b16 %v113
    %v651 = vunpack.c.l.b16 %v114
    %v652 = vunpack.c.h.b16 %v114
    %v653 = vunpack.c.l.b16 %v115
    %v654 = vunpack.c.h.b16 %v115
    %v655 = vunpack.c.l.b16 %v116
    %v656 = vunpack.c.h.b16 %v116
    %v657 = vunpack.c.l.b16 %v117
    %v658 = vunpack.c.h.b16 %v117
    %v659 = vunpack.c.l.b16 %v118
    %v660 = vunpack.c.h.b16 %v118
    %v661 = vunpack.c.l.b16 %v119
    %v662 = vunpack.c.h.b16 %v119
    %v663 = vunpack.c.l.b16 %v120
    %v664 = vunpack.c.h.b16 %v120
    %v665 = vunpack.c.l.b16 %v121
    %v666 = vunpack.c.h.b16 %v121
    %v667 = vunpack.c.l.b16 %v122
    %v668 = vunpack.c.h.b16 %v122
    %v669 = vunpack.c.l.b16 %v123
    %v670 = vunpack.c.h.b16 %v123
    %v671 = vunpack.c.l.b16 %v124
    %v672 = vunpack.c.h.b16 %v124
    %v673 = vunpack.c.l.b16 %v125
    %v674 = vunpack.c.h.b16 %v125
    %v675 = vunpack.c.l.b16 %v126
    %v676 = vunpack.c.h.b16 %v126
    %v677 = vunpack.c.l.b16 %v127
    %v678 = vunpack.c.h.b16 %v127
    %v679 = vunpack.c.l.b16 %v128
    %v680 = vunpack.c.h.b16 %v128
    %v681 = vunpack.c.l.b16 %v129
    %v682 = vunpack.c.h.b16 %v129
    %v683 = vunpack.c.l.b16 %v130
    %v684 = vunpack.c.h.b16 %v130
    %v685 = vunpack.c.l.b16 %v131
    %v686 = vunpack.c.h.b16 %v131
    %v687 = vunpack.c.l.b16 %v132
    %v688 = vunpack.c.h.b16 %v132
    %v689 = vunpack.c.l.b16 %v133
    %v690 = vunpack.c.h.b16 %v133
    %v691 = vunpack.c.l.b16 %v134
    %v692 = vunpack.c.h.b16 %v134
    %v693 = vunpack.c.l.b16 %v135
    %v694 = vunpack.c.h.b16 %v135
    %v695 = vunpack.c.l.b16 %v136
    %v696 = vunpack.c.h.b16 %v136
    %v697 = vunpack.c.l.b16 %v137
    %v698 = vunpack.c.h.b16 %v137
    %v699 = vunpack.c.l.b16 %v138
    %v700 = vunpack.c.h.b16 %v138
    %v701 = vunpack.c.l.b16 %v139
    %v702 = vunpack.c.h.b16 %v139
    %v703 = vunpack.c.l.b16 %v140
    %v704 = vunpack.c.h.b16 %v140
    %v705 = vunpack.c.l.b16 %v141
    %v706 = vunpack.c.h.b16 %v141
    %v707 = vunpack.c.l.b16 %v142
    %v708 = vunpack.c.h.b16 %v142
    %v709 = vunpack.c.l.b16 %v143
    %v710 = vunpack.c.h.b16 %v143
    %v711 = vunpack.c.l.b16 %v144
    %v712 = vunpack.c.h.b16 %v144
    %v713 = vunpack.c.l.b16 %v145
    %v714 = vunpack.c.h.b16 %v145
    %v715 = vunpack.c.l.b16 %v146
    %v716 = vunpack.c.h.b16 %v146
    %v717 = vunpack.c.l.b16 %v147
    %v718 = vunpack.c.h.b16 %v147
    %v719 = vunpack.c.l.b16 %v148
    %v720 = vunpack.c.h.b16 %v148
    %v721 = vunpack.c.l.b16 %v149
    %v722 = vunpack.c.h.b16 %v149
    %v723 = vunpack.c.l.b16 %v150
    %v724 = vunpack.c.h.b16 %v150
    %v725 = vunpack.c.l.b16 %v151
    %v726 = vunpack.c.h.b16 %v151
    %v727 = vunpack.c.l.b16 %v152
    %v728 = vunpack.c.h.b16 %v152
    %v729 = vunpack.c.l.b16 %v153
    %v730 = vunpack.c.h.b16 %v153
    %v731 = vunpack.c.l.b16 %v154
    %v732 = vunpack.c.h.b16 %v154
    %v733 = vunpack.c.l.b16 %v155
    %v734 = vunpack.c.h.b16 %v155
    %v735 = vunpack.c.l.b16 %v156
    %v736 = vunpack.c.h.b16 %v156
    %v737 = vunpack.c.l.b16 %v157
    %v738 = vunpack.c.h.b16 %v157
    %v739 = vunpack.c.l.b16 %v158
    %v740 = vunpack.c.h.b16 %v158
    %v741 = vunpack.c.l.b16 %v159
    %v742 = vunpack.c.h.b16 %v159
    %v743 = vunpack.c.l.b16 %v160
    %v744 = vunpack.c.h.b16 %v160
    %v745 = vunpack.c.l.b16 %v161
    %v746 = vunpack.c.h.b16 %v161
    %v747 = vunpack.c.l.b16 %v162
    %v748 = vunpack.c.h.b16 %v162
    %v749 = vunpack.c.l.b16 %v163
    %v750 = vunpack.c.h.b16 %v163
    %v751 = vunpack.c.l.b16 %v164
    %v752 = vunpack.c.h.b16 %v164
    %v753 = vunpack.c.l.b16 %v165
    %v754 = vunpack.c.h.b16 %v165
    %v755 = vunpack.c.l.b16 %v166
    %v756 = vunpack.c.h.b16 %v166
    %v757 = vunpack.c.l.b16 %v167
    %v758 = vunpack.c.h.b16 %v167
    %v759 = vunpack.c.l.b16 %v168
    %v760 = vunpack.c.h.b16 %v168
    %v761 = vunpack.c.l.b16 %v169
    %v762 = vunpack.c.h.b16 %v169
    %v763 = vunpack.c.l.b16 %v170
    %v764 = vunpack.c.h.b16 %v170
    %v765 = vunpack.c.l.b16 %v171
    %v766 = vunpack.c.h.b16 %v171
    %v767 = vunpack.c.l.b16 %v172
    %v768 = vunpack.c.h.b16 %v172
    %v769 = vunpack.c.l.b16 %v173
    %v770 = vunpack.c.h.b16 %v173
    %v771 = vunpack.c.l.b16 %v174
    %v772 = vunpack.c.h.b16 %v174
    %v773 = vunpack.c.l.b16 %v175
    %v774 = vunpack.c.h.b16 %v175
    %v775 = vunpack.c.l.b16 %v176
    %v776 = vunpack.c.h.b16 %v176
    %v777 = vunpack.c.l.b16 %v177
    %v778 = vunpack.c.h.b16 %v177
    %v779 = vunpack.c.l.b16 %v178
    %v780 = vunpack.c.h.b16 %v178
    %v781 = vunpack.c.l.b16 %v179
    %v782 = vunpack.c.h.b16 %v179
    %v783 = vunpack.c.l.b16 %v180
    %v784 = vunpack.c.h.b16 %v180
    %v785 = vunpack.c.l.b16 %v181
    %v786 = vunpack.c.h.b16 %v181
    %v787 = vunpack.c.l.b16 %v182
    %v788 = vunpack.c.h.b16 %v182
    %v789 = vunpack.c.l.b16 %v183
    %v790 = vunpack.c.h.b16 %v183
    %v791 = vunpack.c.l.b16 %v184
    %v792 = vunpack.c.h.b16 %v184
    %v793 = vunpack.c.l.b16 %v185
    %v794 = vunpack.c.h.b16 %v185
    %v795 = vunpack.c.l.b16 %v186
    %v796 = vunpack.c.h.b16 %v186
    %v797 = vunpack.c.l.b16 %v187
    %v798 = vunpack.c.h.b16 %v187
    %v799 = vunpack.c.l.b16 %v188
    %v800 = vunpack.c.h.b16 %v188
    %v801 = vunpack.c.l.b16 %v189
    %v802 = vunpack.c.h.b16 %v189
    %v803 = vunpack.c.l.b16 %v190
    %v804 = vunpack.c.h.b16 %v190
    %v805 = vunpack.c.l.b16 %v191
    %v806 = vunpack.c.h.b16 %v191
    %v807 = vunpack.c.l.b16 %v192
    %v808 = vunpack.c.h.b16 %v192
    %v809 = vunpack.c.l.b16 %v193
    %v810 = vunpack.c.h.b16 %v193
    %v811 = vunpack.c.l.b16 %v194
    %v812 = vunpack.c.h.b16 %v194
    %v813 = vunpack.c.l.b16 %v195
    %v814 = vunpack.c.h.b16 %v195
    %v815 = vunpack.c.l.b16 %v196
    %v816 = vunpack.c.h.b16 %v196
    %v817 = vunpack.c.l.b16 %v197
    %v818 = vunpack.c.h.b16 %v197
    %v819 = vunpack.c.l.b16 %v198
    %v820 = vunpack.c.h.b16 %v198
    %v821 = vunpack.c.l.b16 %v199
    %v822 = vunpack.c.h.b16 %v199
    %v823 = vunpack.c.l.b16 %v200
    %v824 = vunpack.c.h.b16 %v200
    %v825 = vunpack.c.l.b16 %v201
    %v826 = vunpack.c.h.b16 %v201
    %v827 = vunpack.c.l.b16 %v202
    %v828 = vunpack.c.h.b16 %v202
    %v829 = vunpack.c.l.b16 %v203
    %v830 = vunpack.c.h.b16 %v203
    %v831 = vunpack.c.l.b16 %v204
    %v832 = vunpack.c.h.b16 %v204
    %v833 = vunpack.c.l.b16 %v205
    %v834 = vunpack.c.h.b16 %v205
    %v835 = vunpack.c.l.b16 %v206
    %v836 = vunpack.c.h.b16 %v206
    %v837 = vunpack.c.l.b16 %v207
    %v838 = vunpack.c.h.b16 %v207
    %v839 = vunpack.c.l.b16 %v208
    %v840 = vunpack.c.h.b16 %v208
    %v841 = vunpack.c.l.b16 %v209
    %v842 = vunpack.c.h.b16 %v209
    %v843 = vunpack.c.l.b16 %v210
    %v844 = vunpack.c.h.b16 %v210
    %v845 = vunpack.c.l.b16 %v211
    %v846 = vunpack.c.h.b16 %v211
    %v847 = vunpack.c.l.b16 %v212
    %v848 = vunpack.c.h.b16 %v212
    %v849 = vunpack.c.l.b16 %v213
    %v850 = vunpack.c.h.b16 %v213
    %v851 = vunpack.c.l.b16 %v214
    %v852 = vunpack.c.h.b16 %v214
    %v853 = vunpack.c.l.b16 %v215
    %v854 = vunpack.c.h.b16 %v215
    %v855 = vunpack.c.l.b16 %v216
    %v856 = vunpack.c.h.b16 %v216
    %v857 = vunpack.c.l.b16 %v217
    %v858 = vunpack.c.h.b16 %v217
    %v859 = vunpack.c.l.b16 %v218
    %v860 = vunpack.c.h.b16 %v218
    %v861 = vunpack.c.l.b16 %v219
    %v862 = vunpack.c.h.b16 %v219
    %v863 = vunpack.c.l.b16 %v220
    %v864 = vunpack.c.h.b16 %v220
    %v865 = vunpack.c.l.b16 %v221
    %v866 = vunpack.c.h.b16 %v221
    %v867 = vunpack.c.l.b16 %v222
    %v868 = vunpack.c.h.b16 %v222
    %v869 = vunpack.c.l.b16 %v223
    %v870 = vunpack.c.h.b16 %v223
    %v871 = vunpack.c.l.b16 %v224
    %v872 = vunpack.c.h.b16 %v224
    %v873 = vunpack.c.l.b16 %v225
    %v874 = vunpack.c.h.b16 %v225
    %v875 = vunpack.c.l.b16 %v226
    %v876 = vunpack.c.h.b16 %v226
    %v877 = vunpack.c.l.b16 %v227
    %v878 = vunpack.c.h.b16 %v227
    %v879 = vunpack.c.l.b16 %v228
    %v880 = vunpack.c.h.b16 %v228
    %v881 = vunpack.c.l.b16 %v229
    %v882 = vunpack.c.h.b16 %v229
    %v883 = vunpack.c.l.b16 %v230
    %v884 = vunpack.c.h.b16 %v230
    %v885 = vunpack.c.l.b16 %v231
    %v886 = vunpack.c.h.b16 %v231
    %v887 = vunpack.c.l.b16 %v232
    %v888 = vunpack.c.h.b16 %v232
    %v889 = vunpack.c.l.b16 %v233
    %v890 = vunpack.c.h.b16 %v233
    %v891 = vunpack.c.l.b16 %v234
    %v892 = vunpack.c.h.b16 %v234
    %v893 = vunpack.c.l.b16 %v235
    %v894 = vunpack.c.h.b16 %v235
    %v895 = vunpack.c.l.b16 %v236
    %v896 = vunpack.c.h.b16 %v236
    %v897 = vunpack.c.l.b16 %v237
    %v898 = vunpack.c.h.b16 %v237
    %v899 = vunpack.c.l.b16 %v238
    %v900 = vunpack.c.h.b16 %v238
    %v901 = vunpack.c.l.b16 %v239
    %v902 = vunpack.c.h.b16 %v239
    %v903 = vunpack.c.l.b16 %v240
    %v904 = vunpack.c.h.b16 %v240
    %v905 = vunpack.c.l.b16 %v241
    %v906 = vunpack.c.h.b16 %v241
    %v907 = vunpack.c.l.b16 %v242
    %v908 = vunpack.c.h.b16 %v242
    %v909 = vunpack.c.l.b16 %v243
    %v910 = vunpack.c.h.b16 %v243
    %v911 = vunpack.c.l.b16 %v244
    %v912 = vunpack.c.h.b16 %v244
    %v913 = vunpack.c.l.b16 %v245
    %v914 = vunpack.c.h.b16 %v245
    %v915 = vunpack.c.l.b16 %v246
    %v916 = vunpack.c.h.b16 %v246
    %v917 = vunpack.c.l.b16 %v247
    %v918 = vunpack.c.h.b16 %v247
    %v919 = vunpack.c.l.b16 %v248
    %v920 = vunpack.c.h.b16 %v248
    %v921 = vunpack.c.l.b16 %v249
    %v922 = vunpack.c.h.b16 %v249
    %v923 = vunpack.c.l.b16 %v250
    %v924 = vunpack.c.h.b16 %v250
    %v925 = vunpack.c.l.b16 %v251
    %v926 = vunpack.c.h.b16 %v251
    %v927 = vunpack.c.l.b16 %v252
    %v928 = vunpack.c.h.b16 %v252
    %v929 = vunpack.c.l.b16 %v253
    %v930 = vunpack.c.h.b16 %v253
    %v931 = vunpack.c.l.b16 %v254
    %v932 = vunpack.c.h.b16 %v254
    %v933 = vunpack.c.l.b16 %v255
    %v934 = vunpack.c.h.b16 %v255
    %v935 = vunpack.c.l.b16 %v256
    %v936 = vunpack.c.h.b16 %v256
    %v937 = vunpack.c.l.b16 %v257
    %v938 = vunpack.c.h.b16 %v257
    %v939 = vunpack.c.l.b16 %v258
    %v940 = vunpack.c.h.b16 %v258
    %v941 = vunpack.c.l.b16 %v259
    %v942 = vunpack.c.h.b16 %v259
    %v943 = vunpack.c.l.b16 %v260
    %v944 = vunpack.c.h.b16 %v260
    %v945 = vunpack.c.l.b16 %v261
    %v946 = vunpack.c.h.b16 %v261
    %v947 = vunpack.c.l.b16 %v262
    %v948 = vunpack.c.h.b16 %v262
    %v949 = vunpack.c.l.b16 %v263
    %v950 = vunpack.c.h.b16 %v263
    %v951 = vunpack.c.l.b16 %v264
    %v952 = vunpack.c.h.b16 %v264
    %v953 = vunpack.c.l.b16 %v265
    %v954 = vunpack.c.h.b16 %v265
    %v955 = vunpack.c.l.b16 %v266
    %v956 = vunpack.c.h.b16 %v266
    %v957 = vunpack.c.l.b16 %v267
    %v958 = vunpack.c.h.b16 %v267
    %v959 = vunpack.c.l.b16 %v268
    %v960 = vunpack.c.h.b16 %v268
    %v961 = vunpack.c.l.b16 %v269
    %v962 = vunpack.c.h.b16 %v269
    %v963 = vunpack.c.l.b16 %v270
    %v964 = vunpack.c.h.b16 %v270
    %v965 = vunpack.c.l.b16 %v271
    %v966 = vunpack.c.h.b16 %v271
    %v967 = vunpack.c.l.b16 %v272
    %v968 = vunpack.c.h.b16 %v272
    %v969 = vunpack.c.l.b16 %v273
    %v970 = vunpack.c.h.b16 %v273
    %v971 = vunpack.c.l.b16 %v274
    %v972 = vunpack.c.h.b16 %v274
    %v973 = vunpack.c.l.b16 %v275
    %v974 = vunpack.c.h.b16 %v275
    %v975 = vunpack.c.l.b16 %v276
    %v976 = vunpack.c.h.b16 %v276
    %v977 = vunpack.c.l.b16 %v277
    %v978 = vunpack.c.h.b16 %v277
    %v979 = vunpack.c.l.b16 %v278
    %v980 = vunpack.c.h.b16 %v278
    %v981 = vunpack.c.l.b16 %v279
    %v982 = vunpack.c.h.b16 %v279
    %v983 = vunpack.c.l.b16 %v280
    %v984 = vunpack.c.h.b16 %v280
    %v985 = vunpack.c.l.b16 %v281
    %v986 = vunpack.c.h.b16 %v281
    %v987 = vunpack.c.l.b16 %v282
    %v988 = vunpack.c.h.b16 %v282
    %v989 = vunpack.c.l.b16 %v283
    %v990 = vunpack.c.h.b16 %v283
    %v991 = vunpack.c.l.b16 %v284
    %v992 = vunpack.c.h.b16 %v284
    %v993 = vunpack.c.l.b16 %v285
    %v994 = vunpack.c.h.b16 %v285
    %v995 = vunpack.c.l.b16 %v286
    %v996 = vunpack.c.h.b16 %v286
    %v997 = vunpack.c.l.b16 %v287
    %v998 = vunpack.c.h.b16 %v287
    %v999 = vunpack.c.l.b16 %v288
    %v1000 = vunpack.c.h.b16 %v288
    %v1001 = vunpack.c.l.b16 %v289
    %v1002 = vunpack.c.h.b16 %v289
    %v1003 = vunpack.c.l.b16 %v290
    %v1004 = vunpack.c.h.b16 %v290
    %v1005 = vunpack.c.l.b16 %v291
    %v1006 = vunpack.c.h.b16 %v291
    %v1007 = vunpack.c.l.b16 %v292
    %v1008 = vunpack.c.h.b16 %v292
    %v1009 = vunpack.c.l.b16 %v293
    %v1010 = vunpack.c.h.b16 %v293
    %v1011 = vunpack.c.l.b16 %v294
    %v1012 = vunpack.c.h.b16 %v294
    %v1013 = vunpack.c.l.b16 %v295
    %v1014 = vunpack.c.h.b16 %v295
    %v1015 = vunpack.c.l.b16 %v296
    %v1016 = vunpack.c.h.b16 %v296
    %v1017 = vunpack.c.l.b16 %v297
    %v1018 = vunpack.c.h.b16 %v297
    %v1019 = vunpack.c.l.b16 %v298
    %v1020 = vunpack.c.h.b16 %v298
    %v1021 = vunpack.c.l.b16 %v299
    %v1022 = vunpack.c.h.b16 %v299
    %v1023 = vunpack.c.l.b16 %v300
    %v1024 = vunpack.c.h.b16 %v300
    %v1025 = vunpack.c.l.b16 %v301
    %v1026 = vunpack.c.h.b16 %v301
    %v1027 = vunpack.c.l.b16 %v302
    %v1028 = vunpack.c.h.b16 %v302
    %v1029 = vunpack.c.l.b16 %v303
    %v1030 = vunpack.c.h.b16 %v303
    %v1031 = vunpack.c.l.b16 %v304
    %v1032 = vunpack.c.h.b16 %v304
    %v1033 = vunpack.c.l.b16 %v305
    %v1034 = vunpack.c.h.b16 %v305
    %v1035 = vunpack.c.l.b16 %v306
    %v1036 = vunpack.c.h.b16 %v306
    %v1037 = vunpack.c.l.b16 %v307
    %v1038 = vunpack.c.h.b16 %v307
    %v1039 = vunpack.c.l.b16 %v308
    %v1040 = vunpack.c.h.b16 %v308
    %v1041 = vunpack.c.l.b16 %v309
    %v1042 = vunpack.c.h.b16 %v309
    %v1043 = vunpack.c.l.b16 %v310
    %v1044 = vunpack.c.h.b16 %v310
    %v1045 = vunpack.c.l.b16 %v311
    %v1046 = vunpack.c.h.b16 %v311
    %v1047 = vunpack.c.l.b16 %v312
    %v1048 = vunpack.c.h.b16 %v312
    %v1049 = vunpack.c.l.b16 %v313
    %v1050 = vunpack.c.h.b16 %v313
    %v1051 = vunpack.c.l.b16 %v314
    %v1052 = vunpack.c.h.b16 %v314
    %v1053 = vunpack.c.l.b16 %v315
    %v1054 = vunpack.c.h.b16 %v315
    %v1055 = vunpack.c.l.b16 %v316
    %v1056 = vunpack.c.h.b16 %v316
    %v1057 = vunpack.c.l.b16 %v317
    %v1058 = vunpack.c.h.b16 %v317
    %v1059 = vunpack.c.l.b16 %v318
    %v1060 = vunpack.c.h.b16 %v318
    %v1061 = vunpack.c.l.b16 %v319
    %v1062 = vunpack.c.h.b16 %v319
    %v1063 = vunpack.c.l.b16 %v320
    %v1064 = vunpack.c.h.b16 %v320
    %v1065 = vunpack.c.l.b16 %v321
    %v1066 = vunpack.c.h.b16 %v321
    %v1067 = vunpack.c.l.b16 %v322
    %v1068 = vunpack.c.h.b16 %v322
    %v1069 = vunpack.c.l.b16 %v323
    %v1070 = vunpack.c.h.b16 %v323
    %v1071 = vunpack.c.l.b16 %v324
    %v1072 = vunpack.c.h.b16 %v324
    %v1073 = vunpack.c.l.b16 %v325
    %v1074 = vunpack.c.h.b16 %v325
    %v1075 = vunpack.c.l.b16 %v326
    %v1076 = vunpack.c.h.b16 %v326
    %v1077 = vunpack.c.l.b16 %v327
    %v1078 = vunpack.c.h.b16 %v327
    %v1079 = vunpack.c.l.b16 %v328
    %v1080 = vunpack.c.h.b16 %v328
    %v1081 = vunpack.c.l.b16 %v329
    %v1082 = vunpack.c.h.b16 %v329
    %v1083 = vunpack.c.l.b16 %v330
    %v1084 = vunpack.c.h.b16 %v330
    %v1085 = vunpack.c.l.b16 %v331
    %v1086 = vunpack.c.h.b16 %v331
    %v1087 = vunpack.c.l.b16 %v332
    %v1088 = vunpack.c.h.b16 %v332
    %v1089 = vunpack.c.l.b16 %v333
    %v1090 = vunpack.c.h.b16 %v333
    %v1091 = vunpack.c.l.b16 %v334
    %v1092 = vunpack.c.h.b16 %v334
    %v1093 = vunpack.c.l.b16 %v335
    %v1094 = vunpack.c.h.b16 %v335
    %v1095 = vunpack.c.l.b16 %v336
    %v1096 = vunpack.c.h.b16 %v336
    %v1097 = vunpack.c.l.b16 %v337
    %v1098 = vunpack.c.h.b16 %v337
    %v1099 = vunpack.c.l.b16 %v338
    %v1100 = vunpack.c.h.b16 %v338
    %v1101 = vunpack.c.l.b16 %v339
    %v1102 = vunpack.c.h.b16 %v339
    %v1103 = vunpack.c.l.b16 %v340
    %v1104 = vunpack.c.h.b16 %v340
    %v1105 = vunpack.c.l.b16 %v341
    %v1106 = vunpack.c.h.b16 %v341
    %v1107 = vunpack.c.l.b16 %v342
    %v1108 = vunpack.c.h.b16 %v342
    %v1109 = vunpack.c.l.b16 %v343
    %v1110 = vunpack.c.h.b16 %v343
    %v1111 = vunpack.c.l.b16 %v344
    %v1112 = vunpack.c.h.b16 %v344
    %v1113 = vunpack.c.l.b16 %v345
    %v1114 = vunpack.c.h.b16 %v345
    %v1115 = vunpack.c.l.b16 %v346
    %v1116 = vunpack.c.h.b16 %v346
    %v1117 = vunpack.c.l.b16 %v347
    %v1118 = vunpack.c.h.b16 %v347
    %v1119 = vunpack.c.l.b16 %v348
    %v1120 = vunpack.c.h.b16 %v348
    %v1121 = vunpack.c.l.b16 %v349
    %v1122 = vunpack.c.h.b16 %v349
    %v1123 = vunpack.c.l.b16 %v350
    %v1124 = vunpack.c.h.b16 %v350
    %v1125 = vunpack.c.l.b16 %v351
    %v1126 = vunpack.c.h.b16 %v351
    %v1127 = vunpack.c.l.b16 %v352
    %v1128 = vunpack.c.h.b16 %v352
    %v1129 = vunpack.c.l.b16 %v353
    %v1130 = vunpack.c.h.b16 %v353
    %v1131 = vunpack.c.l.b16 %v354
    %v1132 = vunpack.c.h.b16 %v354
    %v1133 = vunpack.c.l.b16 %v355
    %v1134 = vunpack.c.h.b16 %v355
    %v1135 = vunpack.c.l.b16 %v356
    %v1136 = vunpack.c.h.b16 %v356
    %v1137 = vunpack.c.l.b16 %v357
    %v1138 = vunpack.c.h.b16 %v357
    %v1139 = vunpack.c.l.b16 %v358
    %v1140 = vunpack.c.h.b16 %v358
    %v1141 = vunpack.c.l.b16 %v359
    %v1142 = vunpack.c.h.b16 %v359
    %v1143 = vunpack.c.l.b16 %v360
    %v1144 = vunpack.c.h.b16 %v360
    %v1145 = vunpack.c.l.b16 %v361
    %v1146 = vunpack.c.h.b16 %v361
    %v1147 = vunpack.c.l.b16 %v362
    %v1148 = vunpack.c.h.b16 %v362
    %v1149 = vpack.c.b16 %v645, %v637
    %v1150 = vpack.c.b16 %v646, %v638
    %v1151 = vpack.c.b16 %v647, %v639
    %v1152 = vpack.c.b16 %v648, %v640
    %v1153 = vpack.c.b16 %v649, %v641
    %v1154 = vpack.c.b16 %v650, %v642
    %v1155 = vpack.c.b16 %v651, %v643
    %v1156 = vpack.c.b16 %v652, %v644
    %v1157 = vpack.c.b16 %v661, %v653
    %v1158 = vpack.c.b16 %v662, %v654
    %v1159 = vpack.c.b16 %v663, %v655
    %v1160 = vpack.c.b16 %v664, %v656
    %v1161 = vpack.c.b16 %v665, %v657
    %v1162 = vpack.c.b16 %v666, %v658
    %v1163 = vpack.c.b16 %v667, %v659
    %v1164 = vpack.c.b16 %v668, %v660
    %v1165 = vpack.c.b16 %v677, %v669
    %v1166 = vpack.c.b16 %v678, %v670
    %v1167 = vpack.c.b16 %v679, %v671
    %v1168 = vpack.c.b16 %v680, %v672
    %v1169 = vpack.c.b16 %v681, %v673
    %v1170 = vpack.c.b16 %v682, %v674
    %v1171 = vpack.c.b16 %v683, %v675
    %v1172 = vpack.c.b16 %v684, %v676
    %v1173 = vpack.c.b16 %v693, %v685
    %v1174 = vpack.c.b16 %v694, %v686
    %v1175 = vpack.c.b16 %v695, %v687
    %v1176 = vpack.c.b16 %v696, %v688
    %v1177 = vpack.c.b16 %v697, %v689
    %v1178 = vpack.c.b16 %v698, %v690
    %v1179 = vpack.c.b16 %v699, %v691
    %v1180 = vpack.c.b16 %v700, %v692
    %v1181 = vpack.c.b16 %v709, %v701
    %v1182 = vpack.c.b16 %v710, %v702
    %v1183 = vpack.c.b16 %v711, %v703
    %v1184 = vpack.c.b16 %v712, %v704
    %v1185 = vpack.c.b16 %v713, %v705
    %v1186 = vpack.c.b16 %v714, %v706
    %v1187 = vpack.c.b16 %v715, %v707
    %v1188 = vpack.c.b16 %v716, %v708
    %v1189 = vpack.c.b16 %v725, %v717
    %v1190 = vpack.c.b16 %v726, %v718
    %v1191 = vpack.c.b16 %v727, %v719
    %v1192 = vpack.c.b16 %v728, %v720
    %v1193 = vpack.c.b16 %v729, %v721
    %v1194 = vpack.c.b16 %v730, %v722
    %v1195 = vpack.c.b16 %v731, %v723
    %v1196 = vpack.c.b16 %v732, %v724
    %v1197 = vpack.c.b16 %v741, %v733
    %v1198 = vpack.c.b16 %v742, %v734
    %v1199 = vpack.c.b16 %v743, %v735
    %v1200 = vpack.c.b16 %v744, %v736
    %v1201 = vpack.c.b16 %v745, %v737
    %v1202 = vpack.c.b16 %v746, %v738
    %v1203 = vpack.c.b16 %v747, %v739
    %v1204 = vpack.c.b16 %v748, %v740
    %v1205 = vpack.c.b16 %v757, %v749
    %v1206 = vpack.c.b16 %v758, %v750
    %v1207 = vpack.c.b16 %v759, %v751
    %v1208 = vpack.c.b16 %v760, %v752
    %v1209 = vpack.c.b16 %v761, %v753
    %v1210 = vpack.c.b16 %v762, %v754
    %v1211 = vpack.c.b16 %v763, %v755
    %v1212 = vpack.c.b16 %v764, %v756
    %v1213 = vpack.c.b16 %v773, %v765
    %v1214 = vpack.c.b16 %v774, %v766
    %v1215 = vpack.c.b16 %v775, %v767
    %v1216 = vpack.c.b16 %v776, %v768
    %v1217 = vpack.c.b16 %v777, %v769
    %v1218 = vpack.c.b16 %v778, %v770
    %v1219 = vpack.c.b16 %v779, %v771
    %v1220 = vpack.c.b16 %v780, %v772
    %v1221 = vpack.c.b16 %v789, %v781
    %v1222 = vpack.c.b16 %v790, %v782
    %v1223 = vpack.c.b16 %v791, %v783
    %v1224 = vpack.c.b16 %v792, %v784
    %v1225 = vpack.c.b16 %v793, %v785
    %v1226 = vpack.c.b16 %v794, %v786
    %v1227 = vpack.c.b16 %v795, %v787
    %v1228 = vpack.c.b16 %v796, %v788
    %v1229 = vpack.c.b16 %v805, %v797
    %v1230 = vpack.c.b16 %v806, %v798
    %v1231 = vpack.c.b16 %v807, %v799
    %v1232 = vpack.c.b16 %v808, %v800
    %v1233 = vpack.c.b16 %v809, %v801
    %v1234 = vpack.c.b16 %v810, %v802
    %v1235 = vpack.c.b16 %v811, %v803
    %v1236 = vpack.c.b16 %v812, %v804
    %v1237 = vpack.c.b16 %v821, %v813
    %v1238 = vpack.c.b16 %v822, %v814
    %v1239 = vpack.c.b16 %v823, %v815
    %v1240 = vpack.c.b16 %v824, %v816
    %v1241 = vpack.c.b16 %v825, %v817
    %v1242 = vpack.c.b16 %v826, %v818
    %v1243 = vpack.c.b16 %v827, %v819
    %v1244 = vpack.c.b16 %v828, %v820
    %v1245 = vpack.c.b16 %v837, %v829
    %v1246 = vpack.c.b16 %v838, %v830
    %v1247 = vpack.c.b16 %v839, %v831
    %v1248 = vpack.c.b16 %v840, %v832
    %v1249 = vpack.c.b16 %v841, %v833
    %v1250 = vpack.c.b16 %v842, %v834
    %v1251 = vpack.c.b16 %v843, %v835
    %v1252 = vpack.c.b16 %v844, %v836
    %v1253 = vpack.c.b16 %v853, %v845
    %v1254 = vpack.c.b16 %v854, %v846
    %v1255 = vpack.c.b16 %v855, %v847
    %v1256 = vpack.c.b16 %v856, %v848
    %v1257 = vpack.c.b16 %v857, %v849
    %v1258 = vpack.c.b16 %v858, %v850
    %v1259 = vpack.c.b16 %v859, %v851
    %v1260 = vpack.c.b16 %v860, %v852
    %v1261 = vpack.c.b16 %v869, %v861
    %v1262 = vpack.c.b16 %v870, %v862
    %v1263 = vpack.c.b16 %v871, %v863
    %v1264 = vpack.c.b16 %v872, %v864
    %v1265 = vpack.c.b16 %v873, %v865
    %v1266 = vpack.c.b16 %v874, %v866
    %v1267 = vpack.c.b16 %v875, %v867
    %v1268 = vpack.c.b16 %v876, %v868
    %v1269 = vpack.c.b16 %v885, %v877
    %v1270 = vpack.c.b16 %v886, %v878
    %v1271 = vpack.c.b16 %v887, %v879
    %v1272 = vpack.c.b16 %v888, %v880
    %v1273 = vpack.c.b16 %v889, %v881
    %v1274 = vpack.c.b16 %v890, %v882
    %v1275 = vpack.c.b16 %v891, %v883
    %v1276 = vpack.c.b16 %v892, %v884
    %v1277 = vpack.c.b16 %v901, %v893
    %v1278 = vpack.c.b16 %v902, %v894
    %v1279 = vpack.c.b16 %v903, %v895
    %v1280 = vpack.c.b16 %v904, %v896
    %v1281 = vpack.c.b16 %v905, %v897
    %v1282 = vpack.c.b16 %v906, %v898
    %v1283 = vpack.c.b16 %v907, %v899
    %v1284 = vpack.c.b16 %v908, %v900
    %v1285 = vpack.c.b16 %v917, %v909
    %v1286 = vpack.c.b16 %v918, %v910
    %v1287 = vpack.c.b16 %v919, %v911
    %v1288 = vpack.c.b16 %v920, %v912
    %v1289 = vpack.c.b16 %v921, %v913
    %v1290 = vpack.c.b16 %v922, %v914
    %v1291 = vpack.c.b16 %v923, %v915
    %v1292 = vpack.c.b16 %v924, %v916
    %v1293 = vpack.c.b16 %v933, %v925
    %v1294 = vpack.c.b16 %v934, %v926
    %v1295 = vpack.c.b16 %v935, %v927
    %v1296 = vpack.c.b16 %v936, %v928
    %v1297 = vpack.c.b16 %v937, %v929
    %v1298 = vpack.c.b16 %v938, %v930
    %v1299 = vpack.c.b16 %v939, %v931
    %v1300 = vpack.c.b16 %v940, %v932
    %v1301 = vpack.c.b16 %v949, %v941
    %v1302 = vpack.c.b16 %v950, %v942
    %v1303 = vpack.c.b16 %v951, %v943
    %v1304 = vpack.c.b16 %v952, %v944
    %v1305 = vpack.c.b16 %v953, %v945
    %v1306 = vpack.c.b16 %v954, %v946
    %v1307 = vpack.c.b16 %v955, %v947
    %v1308 = vpack.c.b16 %v956, %v948
    %v1309 = vpack.c.b16 %v965, %v957
    %v1310 = vpack.c.b16 %v966, %v958
    %v1311 = vpack.c.b16 %v967, %v959
    %v1312 = vpack.c.b16 %v968, %v960
    %v1313 = vpack.c.b16 %v969, %v961
    %v1314 = vpack.c.b16 %v970, %v962
    %v1315 = vpack.c.b16 %v971, %v963
    %v1316 = vpack.c.b16 %v972, %v964
    %v1317 = vpack.c.b16 %v981, %v973
    %v1318 = vpack.c.b16 %v982, %v974
    %v1319 = vpack.c.b16 %v983, %v975
    %v1320 = vpack.c.b16 %v984, %v976
    %v1321 = vpack.c.b16 %v985, %v977
    %v1322 = vpack.c.b16 %v986, %v978
    %v1323 = vpack.c.b16 %v987, %v979
    %v1324 = vpack.c.b16 %v988, %v980
    %v1325 = vpack.c.b16 %v997, %v989
    %v1326 = vpack.c.b16 %v998, %v990
    %v1327 = vpack.c.b16 %v999, %v991
    %v1328 = vpack.c.b16 %v1000, %v992
    %v1329 = vpack.c.b16 %v1001, %v993
    %v1330 = vpack.c.b16 %v1002, %v994
    %v1331 = vpack.c.b16 %v1003, %v995
    %v1332 = vpack.c.b16 %v1004, %v996
    %v1333 = vpack.c.b16 %v1013, %v1005
    %v1334 = vpack.c.b16 %v1014, %v1006
    %v1335 = vpack.c.b16 %v1015, %v1007
    %v1336 = vpack.c.b16 %v1016, %v1008
    %v1337 = vpack.c.b16 %v1017, %v1009
    %v1338 = vpack.c.b16 %v1018, %v1010
    %v1339 = vpack.c.b16 %v1019, %v1011
    %v1340 = vpack.c.b16 %v1020, %v1012
    %v1341 = vpack.c.b16 %v1029, %v1021
    %v1342 = vpack.c.b16 %v1030, %v1022
    %v1343 = vpack.c.b16 %v1031, %v1023
    %v1344 = vpack.c.b16 %v1032, %v1024
    %v1345 = vpack.c.b16 %v1033, %v1025
    %v1346 = vpack.c.b16 %v1034, %v1026
    %v1347 = vpack.c.b16 %v1035, %v1027
    %v1348 = vpack.c.b16 %v1036, %v1028
    %v1349 = vpack.c.b16 %v1045, %v1037
    %v1350 = vpack.c.b16 %v1046, %v1038
    %v1351 = vpack.c.b16 %v1047, %v1039
    %v1352 = vpack.c.b16 %v1048, %v1040
    %v1353 = vpack.c.b16 %v1049, %v1041
    %v1354 = vpack.c.b16 %v1050, %v1042
    %v1355 = vpack.c.b16 %v1051, %v1043
    %v1356 = vpack.c.b16 %v1052, %v1044
    %v1357 = vpack.c.b16 %v1061, %v1053
    %v1358 = vpack.c.b16 %v1062, %v1054
    %v1359 = vpack.c.b16 %v1063, %v1055
    %v1360 = vpack.c.b16 %v1064, %v1056
    %v1361 = vpack.c.b16 %v1065, %v1057
    %v1362 = vpack.c.b16 %v1066, %v1058
    %v1363 = vpack.c.b16 %v1067, %v1059
    %v1364 = vpack.c.b16 %v1068, %v1060
    %v1365 = vpack.c.b16 %v1077, %v1069
    %v1366 = vpack.c.b16 %v1078, %v1070
    %v1367 = vpack.c.b16 %v1079, %v1071
    %v1368 = vpack.c.b16 %v1080, %v1072
    %v1369 = vpack.c.b16 %v1081, %v1073
    %v1370 = vpack.c.b16 %v1082, %v1074
    %v1371 = vpack.c.b16 %v1083, %v1075
    %v1372 = vpack.c.b16 %v1084, %v1076
    %v1373 = vpack.c.b16 %v1093, %v1085
    %v1374 = vpack.c.b16 %v1094, %v1086
    %v1375 = vpack.c.b16 %v1095, %v1087
    %v1376 = vpack.c.b16 %v1096, %v1088
    %v1377 = vpack.c.b16 %v1097, %v1089
    %v1378 = vpack.c.b16 %v1098, %v1090
    %v1379 = vpack.c.b16 %v1099, %v1091
    %v1380 = vpack.c.b16 %v1100, %v1092
    %v1381 = vpack.c.b16 %v1109, %v1101
    %v1382 = vpack.c.b16 %v1110, %v1102
    %v1383 = vpack.c.b16 %v1111, %v1103
    %v1384 = vpack.c.b16 %v1112, %v1104
    %v1385 = vpack.c.b16 %v1113, %v1105
    %v1386 = vpack.c.b16 %v1114, %v1106
    %v1387 = vpack.c.b16 %v1115, %v1107
    %v1388 = vpack.c.b16 %v1116, %v1108
    %v1389 = vpack.c.b16 %v1125, %v1117
    %v1390 = vpack.c.b16 %v1126, %v1118
    %v1391 = vpack.c.b16 %v1127, %v1119
    %v1392 = vpack.c.b16 %v1128, %v1120
    %v1393 = vpack.c.b16 %v1129, %v1121
    %v1394 = vpack.c.b16 %v1130, %v1122
    %v1395 = vpack.c.b16 %v1131, %v1123
    %v1396 = vpack.c.b16 %v1132, %v1124
    %v1397 = vpack.c.b16 %v1141, %v1133
    %v1398 = vpack.c.b16 %v1142, %v1134
    %v1399 = vpack.c.b16 %v1143, %v1135
    %v1400 = vpack.c.b16 %v1144, %v1136
    %v1401 = vpack.c.b16 %v1145, %v1137
    %v1402 = vpack.c.b16 %v1146, %v1138
    %v1403 = vpack.c.b16 %v1147, %v1139
    %v1404 = vpack.c.b16 %v1148, %v1140
    %1661 = vmatpush.bf16.msra.mxu0 %v1205
    %1662 = vmatpush.bf16.msra.mxu0 %v1197
    %1663 = vmatpush.bf16.msra.mxu0 %v1189
    %1664 = vmatpush.bf16.msra.mxu0 %v1181
    %1665 = vmatpush.bf16.msra.mxu0 %v1173
    %1666 = vmatpush.bf16.msra.mxu0 %v1165
    %1667 = vmatpush.bf16.msra.mxu0 %v1157
    %1668 = vmatpush.bf16.msra.mxu0 %v1149
    %1669 = vmatmul.bf16.gmra.mxu0 %v103
    %v1670 = vpop.f32.mrf.mxu0
    %v1671 = vadd.f32 %v365, %v1670
    %v1672 = vpop.f32.mrf.mxu0
    %v1673 = vadd.f32 %v365, %v1672
    %1674 = vdwg.mxu0
    %1675 = vmatpush.bf16.msra.mxu0 %v1269
    %1676 = vmatpush.bf16.msra.mxu0 %v1261
    %1677 = vmatpush.bf16.msra.mxu0 %v1253
    %1678 = vmatpush.bf16.msra.mxu0 %v1245
    %1679 = vmatpush.bf16.msra.mxu0 %v1237
    %1680 = vmatpush.bf16.msra.mxu0 %v1229
    %1681 = vmatpush.bf16.msra.mxu0 %v1221
    %1682 = vmatpush.bf16.msra.mxu0 %v1213
    %1683 = vmatmul.bf16.gmra.mxu0 %v104
    %v1684 = vpop.f32.mrf.mxu0
    %v1685 = vadd.f32 %v1671, %v1684
    %v1686 = vpop.f32.mrf.mxu0
    %v1687 = vadd.f32 %v1673, %v1686
    %1688 = vdwg.mxu0
    %1689 = vmatpush.bf16.msra.mxu0 %v1333
    %1690 = vmatpush.bf16.msra.mxu0 %v1325
    %1691 = vmatpush.bf16.msra.mxu0 %v1317
    %1692 = vmatpush.bf16.msra.mxu0 %v1309
    %1693 = vmatpush.bf16.msra.mxu0 %v1301
    %1694 = vmatpush.bf16.msra.mxu0 %v1293
    %1695 = vmatpush.bf16.msra.mxu0 %v1285
    %1696 = vmatpush.bf16.msra.mxu0 %v1277
    %1697 = vmatmul.bf16.gmra.mxu0 %v105
    %v1698 = vpop.f32.mrf.mxu0
    %v1699 = vadd.f32 %v1685, %v1698
    %v1700 = vpop.f32.mrf.mxu0
    %v1701 = vadd.f32 %v1687, %v1700
    %1702 = vdwg.mxu0
    %1703 = vmatpush.bf16.msra.mxu0 %v1397
    %1704 = vmatpush.bf16.msra.mxu0 %v1389
    %1705 = vmatpush.bf16.msra.mxu0 %v1381
    %1706 = vmatpush.bf16.msra.mxu0 %v1373
    %1707 = vmatpush.bf16.msra.mxu0 %v1365
    %1708 = vmatpush.bf16.msra.mxu0 %v1357
    %1709 = vmatpush.bf16.msra.mxu0 %v1349
    %1710 = vmatpush.bf16.msra.mxu0 %v1341
    %1711 = vmatmul.bf16.gmra.mxu0 %v106
    %v1712 = vpop.f32.mrf.mxu0
    %v1713 = vadd.f32 %v1699, %v1712
    %v1714 = vpop.f32.mrf.mxu0
    %v1715 = vadd.f32 %v1701, %v1714
    %1716 = vdwg.mxu0
    %1717 = vmatpush.bf16.msra.mxu0 %v1206
    %1718 = vmatpush.bf16.msra.mxu0 %v1198
    %1719 = vmatpush.bf16.msra.mxu0 %v1190
    %1720 = vmatpush.bf16.msra.mxu0 %v1182
    %1721 = vmatpush.bf16.msra.mxu0 %v1174
    %1722 = vmatpush.bf16.msra.mxu0 %v1166
    %1723 = vmatpush.bf16.msra.mxu0 %v1158
    %1724 = vmatpush.bf16.msra.mxu0 %v1150
    %1725 = vmatmul.bf16.gmra.mxu0 %v103
    %v1726 = vpop.f32.mrf.mxu0
    %v1727 = vadd.f32 %v366, %v1726
    %v1728 = vpop.f32.mrf.mxu0
    %v1729 = vadd.f32 %v366, %v1728
    %1730 = vdwg.mxu0
    %1731 = vmatpush.bf16.msra.mxu0 %v1270
    %1732 = vmatpush.bf16.msra.mxu0 %v1262
    %1733 = vmatpush.bf16.msra.mxu0 %v1254
    %1734 = vmatpush.bf16.msra.mxu0 %v1246
    %1735 = vmatpush.bf16.msra.mxu0 %v1238
    %1736 = vmatpush.bf16.msra.mxu0 %v1230
    %1737 = vmatpush.bf16.msra.mxu0 %v1222
    %1738 = vmatpush.bf16.msra.mxu0 %v1214
    %1739 = vmatmul.bf16.gmra.mxu0 %v104
    %v1740 = vpop.f32.mrf.mxu0
    %v1741 = vadd.f32 %v1727, %v1740
    %v1742 = vpop.f32.mrf.mxu0
    %v1743 = vadd.f32 %v1729, %v1742
    %1744 = vdwg.mxu0
    %1745 = vmatpush.bf16.msra.mxu0 %v1334
    %1746 = vmatpush.bf16.msra.mxu0 %v1326
    %1747 = vmatpush.bf16.msra.mxu0 %v1318
    %1748 = vmatpush.bf16.msra.mxu0 %v1310
    %1749 = vmatpush.bf16.msra.mxu0 %v1302
    %1750 = vmatpush.bf16.msra.mxu0 %v1294
    %1751 = vmatpush.bf16.msra.mxu0 %v1286
    %1752 = vmatpush.bf16.msra.mxu0 %v1278
    %1753 = vmatmul.bf16.gmra.mxu0 %v105
    %v1754 = vpop.f32.mrf.mxu0
    %v1755 = vadd.f32 %v1741, %v1754
    %v1756 = vpop.f32.mrf.mxu0
    %v1757 = vadd.f32 %v1743, %v1756
    %1758 = vdwg.mxu0
    %1759 = vmatpush.bf16.msra.mxu0 %v1398
    %1760 = vmatpush.bf16.msra.mxu0 %v1390
    %1761 = vmatpush.bf16.msra.mxu0 %v1382
    %1762 = vmatpush.bf16.msra.mxu0 %v1374
    %1763 = vmatpush.bf16.msra.mxu0 %v1366
    %1764 = vmatpush.bf16.msra.mxu0 %v1358
    %1765 = vmatpush.bf16.msra.mxu0 %v1350
    %1766 = vmatpush.bf16.msra.mxu0 %v1342
    %1767 = vmatmul.bf16.gmra.mxu0 %v106
    %v1768 = vpop.f32.mrf.mxu0
    %v1769 = vadd.f32 %v1755, %v1768
    %v1770 = vpop.f32.mrf.mxu0
    %v1771 = vadd.f32 %v1757, %v1770
    %1772 = vdwg.mxu0
    %1773 = vmatpush.bf16.msra.mxu0 %v1207
    %1774 = vmatpush.bf16.msra.mxu0 %v1199
    %1775 = vmatpush.bf16.msra.mxu0 %v1191
    %1776 = vmatpush.bf16.msra.mxu0 %v1183
    %1777 = vmatpush.bf16.msra.mxu0 %v1175
    %1778 = vmatpush.bf16.msra.mxu0 %v1167
    %1779 = vmatpush.bf16.msra.mxu0 %v1159
    %1780 = vmatpush.bf16.msra.mxu0 %v1151
    %1781 = vmatmul.bf16.gmra.mxu0 %v103
    %v1782 = vpop.f32.mrf.mxu0
    %v1783 = vadd.f32 %v367, %v1782
    %v1784 = vpop.f32.mrf.mxu0
    %v1785 = vadd.f32 %v367, %v1784
    %1786 = vdwg.mxu0
    %1787 = vmatpush.bf16.msra.mxu0 %v1271
    %1788 = vmatpush.bf16.msra.mxu0 %v1263
    %1789 = vmatpush.bf16.msra.mxu0 %v1255
    %1790 = vmatpush.bf16.msra.mxu0 %v1247
    %1791 = vmatpush.bf16.msra.mxu0 %v1239
    %1792 = vmatpush.bf16.msra.mxu0 %v1231
    %1793 = vmatpush.bf16.msra.mxu0 %v1223
    %1794 = vmatpush.bf16.msra.mxu0 %v1215
    %1795 = vmatmul.bf16.gmra.mxu0 %v104
    %v1796 = vpop.f32.mrf.mxu0
    %v1797 = vadd.f32 %v1783, %v1796
    %v1798 = vpop.f32.mrf.mxu0
    %v1799 = vadd.f32 %v1785, %v1798
    %1800 = vdwg.mxu0
    %1801 = vmatpush.bf16.msra.mxu0 %v1335
    %1802 = vmatpush.bf16.msra.mxu0 %v1327
    %1803 = vmatpush.bf16.msra.mxu0 %v1319
    %1804 = vmatpush.bf16.msra.mxu0 %v1311
    %1805 = vmatpush.bf16.msra.mxu0 %v1303
    %1806 = vmatpush.bf16.msra.mxu0 %v1295
    %1807 = vmatpush.bf16.msra.mxu0 %v1287
    %1808 = vmatpush.bf16.msra.mxu0 %v1279
    %1809 = vmatmul.bf16.gmra.mxu0 %v105
    %v1810 = vpop.f32.mrf.mxu0
    %v1811 = vadd.f32 %v1797, %v1810
    %v1812 = vpop.f32.mrf.mxu0
    %v1813 = vadd.f32 %v1799, %v1812
    %1814 = vdwg.mxu0
    %1815 = vmatpush.bf16.msra.mxu0 %v1399
    %1816 = vmatpush.bf16.msra.mxu0 %v1391
    %1817 = vmatpush.bf16.msra.mxu0 %v1383
    %1818 = vmatpush.bf16.msra.mxu0 %v1375
    %1819 = vmatpush.bf16.msra.mxu0 %v1367
    %1820 = vmatpush.bf16.msra.mxu0 %v1359
    %1821 = vmatpush.bf16.msra.mxu0 %v1351
    %1822 = vmatpush.bf16.msra.mxu0 %v1343
    %1823 = vmatmul.bf16.gmra.mxu0 %v106
    %v1824 = vpop.f32.mrf.mxu0
    %v1825 = vadd.f32 %v1811, %v1824
    %v1826 = vpop.f32.mrf.mxu0
    %v1827 = vadd.f32 %v1813, %v1826
    %1828 = vdwg.mxu0
    %1829 = vmatpush.bf16.msra.mxu0 %v1208
    %1830 = vmatpush.bf16.msra.mxu0 %v1200
    %1831 = vmatpush.bf16.msra.mxu0 %v1192
    %1832 = vmatpush.bf16.msra.mxu0 %v1184
    %1833 = vmatpush.bf16.msra.mxu0 %v1176
    %1834 = vmatpush.bf16.msra.mxu0 %v1168
    %1835 = vmatpush.bf16.msra.mxu0 %v1160
    %1836 = vmatpush.bf16.msra.mxu0 %v1152
    %1837 = vmatmul.bf16.gmra.mxu0 %v103
    %v1838 = vpop.f32.mrf.mxu0
    %v1839 = vadd.f32 %v368, %v1838
    %v1840 = vpop.f32.mrf.mxu0
    %v1841 = vadd.f32 %v368, %v1840
    %1842 = vdwg.mxu0
    %1843 = vmatpush.bf16.msra.mxu0 %v1272
    %1844 = vmatpush.bf16.msra.mxu0 %v1264
    %1845 = vmatpush.bf16.msra.mxu0 %v1256
    %1846 = vmatpush.bf16.msra.mxu0 %v1248
    %1847 = vmatpush.bf16.msra.mxu0 %v1240
    %1848 = vmatpush.bf16.msra.mxu0 %v1232
    %1849 = vmatpush.bf16.msra.mxu0 %v1224
    %1850 = vmatpush.bf16.msra.mxu0 %v1216
    %1851 = vmatmul.bf16.gmra.mxu0 %v104
    %v1852 = vpop.f32.mrf.mxu0
    %v1853 = vadd.f32 %v1839, %v1852
    %v1854 = vpop.f32.mrf.mxu0
    %v1855 = vadd.f32 %v1841, %v1854
    %1856 = vdwg.mxu0
    %1857 = vmatpush.bf16.msra.mxu0 %v1336
    %1858 = vmatpush.bf16.msra.mxu0 %v1328
    %1859 = vmatpush.bf16.msra.mxu0 %v1320
    %1860 = vmatpush.bf16.msra.mxu0 %v1312
    %1861 = vmatpush.bf16.msra.mxu0 %v1304
    %1862 = vmatpush.bf16.msra.mxu0 %v1296
    %1863 = vmatpush.bf16.msra.mxu0 %v1288
    %1864 = vmatpush.bf16.msra.mxu0 %v1280
    %1865 = vmatmul.bf16.gmra.mxu0 %v105
    %v1866 = vpop.f32.mrf.mxu0
    %v1867 = vadd.f32 %v1853, %v1866
    %v1868 = vpop.f32.mrf.mxu0
    %v1869 = vadd.f32 %v1855, %v1868
    %1870 = vdwg.mxu0
    %1871 = vmatpush.bf16.msra.mxu0 %v1400
    %1872 = vmatpush.bf16.msra.mxu0 %v1392
    %1873 = vmatpush.bf16.msra.mxu0 %v1384
    %1874 = vmatpush.bf16.msra.mxu0 %v1376
    %1875 = vmatpush.bf16.msra.mxu0 %v1368
    %1876 = vmatpush.bf16.msra.mxu0 %v1360
    %1877 = vmatpush.bf16.msra.mxu0 %v1352
    %1878 = vmatpush.bf16.msra.mxu0 %v1344
    %1879 = vmatmul.bf16.gmra.mxu0 %v106
    %v1880 = vpop.f32.mrf.mxu0
    %v1881 = vadd.f32 %v1867, %v1880
    %v1882 = vpop.f32.mrf.mxu0
    %v1883 = vadd.f32 %v1869, %v1882
    %1884 = vdwg.mxu0
    %1885 = vmatpush.bf16.msra.mxu0 %v1209
    %1886 = vmatpush.bf16.msra.mxu0 %v1201
    %1887 = vmatpush.bf16.msra.mxu0 %v1193
    %1888 = vmatpush.bf16.msra.mxu0 %v1185
    %1889 = vmatpush.bf16.msra.mxu0 %v1177
    %1890 = vmatpush.bf16.msra.mxu0 %v1169
    %1891 = vmatpush.bf16.msra.mxu0 %v1161
    %1892 = vmatpush.bf16.msra.mxu0 %v1153
    %1893 = vmatmul.bf16.gmra.mxu0 %v103
    %v1894 = vpop.f32.mrf.mxu0
    %v1895 = vadd.f32 %v369, %v1894
    %v1896 = vpop.f32.mrf.mxu0
    %v1897 = vadd.f32 %v369, %v1896
    %1898 = vdwg.mxu0
    %1899 = vmatpush.bf16.msra.mxu0 %v1273
    %1900 = vmatpush.bf16.msra.mxu0 %v1265
    %1901 = vmatpush.bf16.msra.mxu0 %v1257
    %1902 = vmatpush.bf16.msra.mxu0 %v1249
    %1903 = vmatpush.bf16.msra.mxu0 %v1241
    %1904 = vmatpush.bf16.msra.mxu0 %v1233
    %1905 = vmatpush.bf16.msra.mxu0 %v1225
    %1906 = vmatpush.bf16.msra.mxu0 %v1217
    %1907 = vmatmul.bf16.gmra.mxu0 %v104
    %v1908 = vpop.f32.mrf.mxu0
    %v1909 = vadd.f32 %v1895, %v1908
    %v1910 = vpop.f32.mrf.mxu0
    %v1911 = vadd.f32 %v1897, %v1910
    %1912 = vdwg.mxu0
    %1913 = vmatpush.bf16.msra.mxu0 %v1337
    %1914 = vmatpush.bf16.msra.mxu0 %v1329
    %1915 = vmatpush.bf16.msra.mxu0 %v1321
    %1916 = vmatpush.bf16.msra.mxu0 %v1313
    %1917 = vmatpush.bf16.msra.mxu0 %v1305
    %1918 = vmatpush.bf16.msra.mxu0 %v1297
    %1919 = vmatpush.bf16.msra.mxu0 %v1289
    %1920 = vmatpush.bf16.msra.mxu0 %v1281
    %1921 = vmatmul.bf16.gmra.mxu0 %v105
    %v1922 = vpop.f32.mrf.mxu0
    %v1923 = vadd.f32 %v1909, %v1922
    %v1924 = vpop.f32.mrf.mxu0
    %v1925 = vadd.f32 %v1911, %v1924
    %1926 = vdwg.mxu0
    %1927 = vmatpush.bf16.msra.mxu0 %v1401
    %1928 = vmatpush.bf16.msra.mxu0 %v1393
    %1929 = vmatpush.bf16.msra.mxu0 %v1385
    %1930 = vmatpush.bf16.msra.mxu0 %v1377
    %1931 = vmatpush.bf16.msra.mxu0 %v1369
    %1932 = vmatpush.bf16.msra.mxu0 %v1361
    %1933 = vmatpush.bf16.msra.mxu0 %v1353
    %1934 = vmatpush.bf16.msra.mxu0 %v1345
    %1935 = vmatmul.bf16.gmra.mxu0 %v106
    %v1936 = vpop.f32.mrf.mxu0
    %v1937 = vadd.f32 %v1923, %v1936
    %v1938 = vpop.f32.mrf.mxu0
    %v1939 = vadd.f32 %v1925, %v1938
    %1940 = vdwg.mxu0
    %1941 = vmatpush.bf16.msra.mxu0 %v1210
    %1942 = vmatpush.bf16.msra.mxu0 %v1202
    %1943 = vmatpush.bf16.msra.mxu0 %v1194
    %1944 = vmatpush.bf16.msra.mxu0 %v1186
    %1945 = vmatpush.bf16.msra.mxu0 %v1178
    %1946 = vmatpush.bf16.msra.mxu0 %v1170
    %1947 = vmatpush.bf16.msra.mxu0 %v1162
    %1948 = vmatpush.bf16.msra.mxu0 %v1154
    %1949 = vmatmul.bf16.gmra.mxu0 %v103
    %v1950 = vpop.f32.mrf.mxu0
    %v1951 = vadd.f32 %v370, %v1950
    %v1952 = vpop.f32.mrf.mxu0
    %v1953 = vadd.f32 %v370, %v1952
    %1954 = vdwg.mxu0
    %1955 = vmatpush.bf16.msra.mxu0 %v1274
    %1956 = vmatpush.bf16.msra.mxu0 %v1266
    %1957 = vmatpush.bf16.msra.mxu0 %v1258
    %1958 = vmatpush.bf16.msra.mxu0 %v1250
    %1959 = vmatpush.bf16.msra.mxu0 %v1242
    %1960 = vmatpush.bf16.msra.mxu0 %v1234
    %1961 = vmatpush.bf16.msra.mxu0 %v1226
    %1962 = vmatpush.bf16.msra.mxu0 %v1218
    %1963 = vmatmul.bf16.gmra.mxu0 %v104
    %v1964 = vpop.f32.mrf.mxu0
    %v1965 = vadd.f32 %v1951, %v1964
    %v1966 = vpop.f32.mrf.mxu0
    %v1967 = vadd.f32 %v1953, %v1966
    %1968 = vdwg.mxu0
    %1969 = vmatpush.bf16.msra.mxu0 %v1338
    %1970 = vmatpush.bf16.msra.mxu0 %v1330
    %1971 = vmatpush.bf16.msra.mxu0 %v1322
    %1972 = vmatpush.bf16.msra.mxu0 %v1314
    %1973 = vmatpush.bf16.msra.mxu0 %v1306
    %1974 = vmatpush.bf16.msra.mxu0 %v1298
    %1975 = vmatpush.bf16.msra.mxu0 %v1290
    %1976 = vmatpush.bf16.msra.mxu0 %v1282
    %1977 = vmatmul.bf16.gmra.mxu0 %v105
    %v1978 = vpop.f32.mrf.mxu0
    %v1979 = vadd.f32 %v1965, %v1978
    %v1980 = vpop.f32.mrf.mxu0
    %v1981 = vadd.f32 %v1967, %v1980
    %1982 = vdwg.mxu0
    %1983 = vmatpush.bf16.msra.mxu0 %v1402
    %1984 = vmatpush.bf16.msra.mxu0 %v1394
    %1985 = vmatpush.bf16.msra.mxu0 %v1386
    %1986 = vmatpush.bf16.msra.mxu0 %v1378
    %1987 = vmatpush.bf16.msra.mxu0 %v1370
    %1988 = vmatpush.bf16.msra.mxu0 %v1362
    %1989 = vmatpush.bf16.msra.mxu0 %v1354
    %1990 = vmatpush.bf16.msra.mxu0 %v1346
    %1991 = vmatmul.bf16.gmra.mxu0 %v106
    %v1992 = vpop.f32.mrf.mxu0
    %v1993 = vadd.f32 %v1979, %v1992
    %v1994 = vpop.f32.mrf.mxu0
    %v1995 = vadd.f32 %v1981, %v1994
    %1996 = vdwg.mxu0
    %1997 = vmatpush.bf16.msra.mxu0 %v1211
    %1998 = vmatpush.bf16.msra.mxu0 %v1203
    %1999 = vmatpush.bf16.msra.mxu0 %v1195
    %2000 = vmatpush.bf16.msra.mxu0 %v1187
    %2001 = vmatpush.bf16.msra.mxu0 %v1179
    %2002 = vmatpush.bf16.msra.mxu0 %v1171
    %2003 = vmatpush.bf16.msra.mxu0 %v1163
    %2004 = vmatpush.bf16.msra.mxu0 %v1155
    %2005 = vmatmul.bf16.gmra.mxu0 %v103
    %v2006 = vpop.f32.mrf.mxu0
    %v2007 = vadd.f32 %v371, %v2006
    %v2008 = vpop.f32.mrf.mxu0
    %v2009 = vadd.f32 %v371, %v2008
    %2010 = vdwg.mxu0
    %2011 = vmatpush.bf16.msra.mxu0 %v1275
    %2012 = vmatpush.bf16.msra.mxu0 %v1267
    %2013 = vmatpush.bf16.msra.mxu0 %v1259
    %2014 = vmatpush.bf16.msra.mxu0 %v1251
    %2015 = vmatpush.bf16.msra.mxu0 %v1243
    %2016 = vmatpush.bf16.msra.mxu0 %v1235
    %2017 = vmatpush.bf16.msra.mxu0 %v1227
    %2018 = vmatpush.bf16.msra.mxu0 %v1219
    %2019 = vmatmul.bf16.gmra.mxu0 %v104
    %v2020 = vpop.f32.mrf.mxu0
    %v2021 = vadd.f32 %v2007, %v2020
    %v2022 = vpop.f32.mrf.mxu0
    %v2023 = vadd.f32 %v2009, %v2022
    %2024 = vdwg.mxu0
    %2025 = vmatpush.bf16.msra.mxu0 %v1339
    %2026 = vmatpush.bf16.msra.mxu0 %v1331
    %2027 = vmatpush.bf16.msra.mxu0 %v1323
    %2028 = vmatpush.bf16.msra.mxu0 %v1315
    %2029 = vmatpush.bf16.msra.mxu0 %v1307
    %2030 = vmatpush.bf16.msra.mxu0 %v1299
    %2031 = vmatpush.bf16.msra.mxu0 %v1291
    %2032 = vmatpush.bf16.msra.mxu0 %v1283
    %2033 = vmatmul.bf16.gmra.mxu0 %v105
    %v2034 = vpop.f32.mrf.mxu0
    %v2035 = vadd.f32 %v2021, %v2034
    %v2036 = vpop.f32.mrf.mxu0
    %v2037 = vadd.f32 %v2023, %v2036
    %2038 = vdwg.mxu0
    %2039 = vmatpush.bf16.msra.mxu0 %v1403
    %2040 = vmatpush.bf16.msra.mxu0 %v1395
    %2041 = vmatpush.bf16.msra.mxu0 %v1387
    %2042 = vmatpush.bf16.msra.mxu0 %v1379
    %2043 = vmatpush.bf16.msra.mxu0 %v1371
    %2044 = vmatpush.bf16.msra.mxu0 %v1363
    %2045 = vmatpush.bf16.msra.mxu0 %v1355
    %2046 = vmatpush.bf16.msra.mxu0 %v1347
    %2047 = vmatmul.bf16.gmra.mxu0 %v106
    %v2048 = vpop.f32.mrf.mxu0
    %v2049 = vadd.f32 %v2035, %v2048
    %v2050 = vpop.f32.mrf.mxu0
    %v2051 = vadd.f32 %v2037, %v2050
    %2052 = vdwg.mxu0
    %2053 = vmatpush.bf16.msra.mxu0 %v1212
    %2054 = vmatpush.bf16.msra.mxu0 %v1204
    %2055 = vmatpush.bf16.msra.mxu0 %v1196
    %2056 = vmatpush.bf16.msra.mxu0 %v1188
    %2057 = vmatpush.bf16.msra.mxu0 %v1180
    %2058 = vmatpush.bf16.msra.mxu0 %v1172
    %2059 = vmatpush.bf16.msra.mxu0 %v1164
    %2060 = vmatpush.bf16.msra.mxu0 %v1156
    %2061 = vmatmul.bf16.gmra.mxu0 %v103
    %v2062 = vpop.f32.mrf.mxu0
    %v2063 = vadd.f32 %v372, %v2062
    %v2064 = vpop.f32.mrf.mxu0
    %v2065 = vadd.f32 %v372, %v2064
    %2066 = vdwg.mxu0
    %2067 = vmatpush.bf16.msra.mxu0 %v1276
    %2068 = vmatpush.bf16.msra.mxu0 %v1268
    %2069 = vmatpush.bf16.msra.mxu0 %v1260
    %2070 = vmatpush.bf16.msra.mxu0 %v1252
    %2071 = vmatpush.bf16.msra.mxu0 %v1244
    %2072 = vmatpush.bf16.msra.mxu0 %v1236
    %2073 = vmatpush.bf16.msra.mxu0 %v1228
    %2074 = vmatpush.bf16.msra.mxu0 %v1220
    %2075 = vmatmul.bf16.gmra.mxu0 %v104
    %v2076 = vpop.f32.mrf.mxu0
    %v2077 = vadd.f32 %v2063, %v2076
    %v2078 = vpop.f32.mrf.mxu0
    %v2079 = vadd.f32 %v2065, %v2078
    %2080 = vdwg.mxu0
    %2081 = vmatpush.bf16.msra.mxu0 %v1340
    %2082 = vmatpush.bf16.msra.mxu0 %v1332
    %2083 = vmatpush.bf16.msra.mxu0 %v1324
    %2084 = vmatpush.bf16.msra.mxu0 %v1316
    %2085 = vmatpush.bf16.msra.mxu0 %v1308
    %2086 = vmatpush.bf16.msra.mxu0 %v1300
    %2087 = vmatpush.bf16.msra.mxu0 %v1292
    %2088 = vmatpush.bf16.msra.mxu0 %v1284
    %2089 = vmatmul.bf16.gmra.mxu0 %v105
    %v2090 = vpop.f32.mrf.mxu0
    %v2091 = vadd.f32 %v2077, %v2090
    %v2092 = vpop.f32.mrf.mxu0
    %v2093 = vadd.f32 %v2079, %v2092
    %2094 = vdwg.mxu0
    %2095 = vmatpush.bf16.msra.mxu0 %v1404
    %2096 = vmatpush.bf16.msra.mxu0 %v1396
    %2097 = vmatpush.bf16.msra.mxu0 %v1388
    %2098 = vmatpush.bf16.msra.mxu0 %v1380
    %2099 = vmatpush.bf16.msra.mxu0 %v1372
    %2100 = vmatpush.bf16.msra.mxu0 %v1364
    %2101 = vmatpush.bf16.msra.mxu0 %v1356
    %2102 = vmatpush.bf16.msra.mxu0 %v1348
    %2103 = vmatmul.bf16.gmra.mxu0 %v106
    %v2104 = vpop.f32.mrf.mxu0
    %v2105 = vadd.f32 %v2091, %v2104
    %v2106 = vpop.f32.mrf.mxu0
    %v2107 = vadd.f32 %v2093, %v2106
    %2108 = vdwg.mxu0
    %v2109 = vmax.f32 %v1713, 0.0
    %v2110 = vmax.f32 %v1769, 0.0
    %v2111 = vmax.f32 %v1825, 0.0
    %v2112 = vmax.f32 %v1881, 0.0
    %v2113 = vmax.f32 %v1937, 0.0
    %v2114 = vmax.f32 %v1993, 0.0
    %v2115 = vmax.f32 %v2049, 0.0
    %v2116 = vmax.f32 %v2105, 0.0
    %v2117 = vmax.f32 %v1715, 0.0
    %v2118 = vmax.f32 %v1771, 0.0
    %v2119 = vmax.f32 %v1827, 0.0
    %v2120 = vmax.f32 %v1883, 0.0
    %v2121 = vmax.f32 %v1939, 0.0
    %v2122 = vmax.f32 %v1995, 0.0
    %v2123 = vmax.f32 %v2051, 0.0
    %v2124 = vmax.f32 %v2107, 0.0
    %v2125 = vpack.c.bf16 %v2117, %v2109
    %v2126 = vpack.c.bf16 %v2118, %v2110
    %v2127 = vpack.c.bf16 %v2119, %v2111
    %v2128 = vpack.c.bf16 %v2120, %v2112
    %v2129 = vpack.c.bf16 %v2121, %v2113
    %v2130 = vpack.c.bf16 %v2122, %v2114
    %v2131 = vpack.c.bf16 %v2123, %v2115
    %v2132 = vpack.c.bf16 %v2124, %v2116
    %v2133 = vld [vmem:[#allocation8] sm:$0xff]
    %v2134 = vld [vmem:[#allocation8 + $0x8] sm:$0xff]
    %v2135 = vld [vmem:[#allocation8 + $0x10] sm:$0xff]
    %v2136 = vld [vmem:[#allocation8 + $0x18] sm:$0xff]
    %v2137 = vld [vmem:[#allocation8 + $0x20] sm:$0xff]
    %v2138 = vld [vmem:[#allocation8 + $0x28] sm:$0xff]
    %v2139 = vld [vmem:[#allocation8 + $0x30] sm:$0xff]
    %v2140 = vld [vmem:[#allocation8 + $0x38] sm:$0xff]
    %v2141 = vld [vmem:[#allocation8 + $0x40] sm:$0xff]
    %v2142 = vld [vmem:[#allocation8 + $0x48] sm:$0xff]
    %v2143 = vld [vmem:[#allocation8 + $0x50] sm:$0xff]
    %v2144 = vld [vmem:[#allocation8 + $0x58] sm:$0xff]
    %v2145 = vld [vmem:[#allocation8 + $0x60] sm:$0xff]
    %v2146 = vld [vmem:[#allocation8 + $0x68] sm:$0xff]
    %v2147 = vld [vmem:[#allocation8 + $0x70] sm:$0xff]
    %v2148 = vld [vmem:[#allocation8 + $0x78] sm:$0xff]
    %v2149 = vld [vmem:[#allocation8 + $0x80] sm:$0xff]
    %v2150 = vld [vmem:[#allocation8 + $0x88] sm:$0xff]
    %v2151 = vld [vmem:[#allocation8 + $0x90] sm:$0xff]
    %v2152 = vld [vmem:[#allocation8 + $0x98] sm:$0xff]
    %v2153 = vld [vmem:[#allocation8 + $0xa0] sm:$0xff]
    %v2154 = vld [vmem:[#allocation8 + $0xa8] sm:$0xff]
    %v2155 = vld [vmem:[#allocation8 + $0xb0] sm:$0xff]
    %v2156 = vld [vmem:[#allocation8 + $0xb8] sm:$0xff]
    %v2157 = vld [vmem:[#allocation8 + $0xc0] sm:$0xff]
    %v2158 = vld [vmem:[#allocation8 + $0xc8] sm:$0xff]
    %v2159 = vld [vmem:[#allocation8 + $0xd0] sm:$0xff]
    %v2160 = vld [vmem:[#allocation8 + $0xd8] sm:$0xff]
    %v2161 = vld [vmem:[#allocation8 + $0xe0] sm:$0xff]
    %v2162 = vld [vmem:[#allocation8 + $0xe8] sm:$0xff]
    %v2163 = vld [vmem:[#allocation8 + $0xf0] sm:$0xff]
    %v2164 = vld [vmem:[#allocation8 + $0xf8] sm:$0xff]
    %v2165 = vld [vmem:[#allocation8 + $0x100] sm:$0xff]
    %v2166 = vld [vmem:[#allocation8 + $0x108] sm:$0xff]
    %v2167 = vld [vmem:[#allocation8 + $0x110] sm:$0xff]
    %v2168 = vld [vmem:[#allocation8 + $0x118] sm:$0xff]
    %v2169 = vld [vmem:[#allocation8 + $0x120] sm:$0xff]
    %v2170 = vld [vmem:[#allocation8 + $0x128] sm:$0xff]
    %v2171 = vld [vmem:[#allocation8 + $0x130] sm:$0xff]
    %v2172 = vld [vmem:[#allocation8 + $0x138] sm:$0xff]
    %v2173 = vld [vmem:[#allocation8 + $0x140] sm:$0xff]
    %v2174 = vld [vmem:[#allocation8 + $0x148] sm:$0xff]
    %v2175 = vld [vmem:[#allocation8 + $0x150] sm:$0xff]
    %v2176 = vld [vmem:[#allocation8 + $0x158] sm:$0xff]
    %v2177 = vld [vmem:[#allocation8 + $0x160] sm:$0xff]
    %v2178 = vld [vmem:[#allocation8 + $0x168] sm:$0xff]
    %v2179 = vld [vmem:[#allocation8 + $0x170] sm:$0xff]
    %v2180 = vld [vmem:[#allocation8 + $0x178] sm:$0xff]
    %v2181 = vld [vmem:[#allocation8 + $0x180] sm:$0xff]
    %v2182 = vld [vmem:[#allocation8 + $0x188] sm:$0xff]
    %v2183 = vld [vmem:[#allocation8 + $0x190] sm:$0xff]
    %v2184 = vld [vmem:[#allocation8 + $0x198] sm:$0xff]
    %v2185 = vld [vmem:[#allocation8 + $0x1a0] sm:$0xff]
    %v2186 = vld [vmem:[#allocation8 + $0x1a8] sm:$0xff]
    %v2187 = vld [vmem:[#allocation8 + $0x1b0] sm:$0xff]
    %v2188 = vld [vmem:[#allocation8 + $0x1b8] sm:$0xff]
    %v2189 = vld [vmem:[#allocation8 + $0x1c0] sm:$0xff]
    %v2190 = vld [vmem:[#allocation8 + $0x1c8] sm:$0xff]
    %v2191 = vld [vmem:[#allocation8 + $0x1d0] sm:$0xff]
    %v2192 = vld [vmem:[#allocation8 + $0x1d8] sm:$0xff]
    %v2193 = vld [vmem:[#allocation8 + $0x1e0] sm:$0xff]
    %v2194 = vld [vmem:[#allocation8 + $0x1e8] sm:$0xff]
    %v2195 = vld [vmem:[#allocation8 + $0x1f0] sm:$0xff]
    %v2196 = vld [vmem:[#allocation8 + $0x1f8] sm:$0xff]
    %v2197 = vld [vmem:[#allocation8 + $0x200] sm:$0xff]
    %v2198 = vld [vmem:[#allocation8 + $0x208] sm:$0xff]
    %v2199 = vld [vmem:[#allocation8 + $0x210] sm:$0xff]
    %v2200 = vld [vmem:[#allocation8 + $0x218] sm:$0xff]
    %v2201 = vld [vmem:[#allocation8 + $0x220] sm:$0xff]
    %v2202 = vld [vmem:[#allocation8 + $0x228] sm:$0xff]
    %v2203 = vld [vmem:[#allocation8 + $0x230] sm:$0xff]
    %v2204 = vld [vmem:[#allocation8 + $0x238] sm:$0xff]
    %v2205 = vld [vmem:[#allocation8 + $0x240] sm:$0xff]
    %v2206 = vld [vmem:[#allocation8 + $0x248] sm:$0xff]
    %v2207 = vld [vmem:[#allocation8 + $0x250] sm:$0xff]
    %v2208 = vld [vmem:[#allocation8 + $0x258] sm:$0xff]
    %v2209 = vld [vmem:[#allocation8 + $0x260] sm:$0xff]
    %v2210 = vld [vmem:[#allocation8 + $0x268] sm:$0xff]
    %v2211 = vld [vmem:[#allocation8 + $0x270] sm:$0xff]
    %v2212 = vld [vmem:[#allocation8 + $0x278] sm:$0xff]
    %v2213 = vld [vmem:[#allocation8 + $0x280] sm:$0xff]
    %v2214 = vld [vmem:[#allocation8 + $0x288] sm:$0xff]
    %v2215 = vld [vmem:[#allocation8 + $0x290] sm:$0xff]
    %v2216 = vld [vmem:[#allocation8 + $0x298] sm:$0xff]
    %v2217 = vld [vmem:[#allocation8 + $0x2a0] sm:$0xff]
    %v2218 = vld [vmem:[#allocation8 + $0x2a8] sm:$0xff]
    %v2219 = vld [vmem:[#allocation8 + $0x2b0] sm:$0xff]
    %v2220 = vld [vmem:[#allocation8 + $0x2b8] sm:$0xff]
    %v2221 = vld [vmem:[#allocation8 + $0x2c0] sm:$0xff]
    %v2222 = vld [vmem:[#allocation8 + $0x2c8] sm:$0xff]
    %v2223 = vld [vmem:[#allocation8 + $0x2d0] sm:$0xff]
    %v2224 = vld [vmem:[#allocation8 + $0x2d8] sm:$0xff]
    %v2225 = vld [vmem:[#allocation8 + $0x2e0] sm:$0xff]
    %v2226 = vld [vmem:[#allocation8 + $0x2e8] sm:$0xff]
    %v2227 = vld [vmem:[#allocation8 + $0x2f0] sm:$0xff]
    %v2228 = vld [vmem:[#allocation8 + $0x2f8] sm:$0xff]
    %v2229 = vld [vmem:[#allocation8 + $0x300] sm:$0xff]
    %v2230 = vld [vmem:[#allocation8 + $0x308] sm:$0xff]
    %v2231 = vld [vmem:[#allocation8 + $0x310] sm:$0xff]
    %v2232 = vld [vmem:[#allocation8 + $0x318] sm:$0xff]
    %v2233 = vld [vmem:[#allocation8 + $0x320] sm:$0xff]
    %v2234 = vld [vmem:[#allocation8 + $0x328] sm:$0xff]
    %v2235 = vld [vmem:[#allocation8 + $0x330] sm:$0xff]
    %v2236 = vld [vmem:[#allocation8 + $0x338] sm:$0xff]
    %v2237 = vld [vmem:[#allocation8 + $0x340] sm:$0xff]
    %v2238 = vld [vmem:[#allocation8 + $0x348] sm:$0xff]
    %v2239 = vld [vmem:[#allocation8 + $0x350] sm:$0xff]
    %v2240 = vld [vmem:[#allocation8 + $0x358] sm:$0xff]
    %v2241 = vld [vmem:[#allocation8 + $0x360] sm:$0xff]
    %v2242 = vld [vmem:[#allocation8 + $0x368] sm:$0xff]
    %v2243 = vld [vmem:[#allocation8 + $0x370] sm:$0xff]
    %v2244 = vld [vmem:[#allocation8 + $0x378] sm:$0xff]
    %v2245 = vld [vmem:[#allocation8 + $0x380] sm:$0xff]
    %v2246 = vld [vmem:[#allocation8 + $0x388] sm:$0xff]
    %v2247 = vld [vmem:[#allocation8 + $0x390] sm:$0xff]
    %v2248 = vld [vmem:[#allocation8 + $0x398] sm:$0xff]
    %v2249 = vld [vmem:[#allocation8 + $0x3a0] sm:$0xff]
    %v2250 = vld [vmem:[#allocation8 + $0x3a8] sm:$0xff]
    %v2251 = vld [vmem:[#allocation8 + $0x3b0] sm:$0xff]
    %v2252 = vld [vmem:[#allocation8 + $0x3b8] sm:$0xff]
    %v2253 = vld [vmem:[#allocation8 + $0x3c0] sm:$0xff]
    %v2254 = vld [vmem:[#allocation8 + $0x3c8] sm:$0xff]
    %v2255 = vld [vmem:[#allocation8 + $0x3d0] sm:$0xff]
    %v2256 = vld [vmem:[#allocation8 + $0x3d8] sm:$0xff]
    %v2257 = vld [vmem:[#allocation8 + $0x3e0] sm:$0xff]
    %v2258 = vld [vmem:[#allocation8 + $0x3e8] sm:$0xff]
    %v2259 = vld [vmem:[#allocation8 + $0x3f0] sm:$0xff]
    %v2260 = vld [vmem:[#allocation8 + $0x3f8] sm:$0xff]
    %v2261 = vld [vmem:[#allocation8 + $0x400] sm:$0xff]
    %v2262 = vld [vmem:[#allocation8 + $0x408] sm:$0xff]
    %v2263 = vld [vmem:[#allocation8 + $0x410] sm:$0xff]
    %v2264 = vld [vmem:[#allocation8 + $0x418] sm:$0xff]
    %v2265 = vld [vmem:[#allocation8 + $0x420] sm:$0xff]
    %v2266 = vld [vmem:[#allocation8 + $0x428] sm:$0xff]
    %v2267 = vld [vmem:[#allocation8 + $0x430] sm:$0xff]
    %v2268 = vld [vmem:[#allocation8 + $0x438] sm:$0xff]
    %v2269 = vld [vmem:[#allocation8 + $0x440] sm:$0xff]
    %v2270 = vld [vmem:[#allocation8 + $0x448] sm:$0xff]
    %v2271 = vld [vmem:[#allocation8 + $0x450] sm:$0xff]
    %v2272 = vld [vmem:[#allocation8 + $0x458] sm:$0xff]
    %v2273 = vld [vmem:[#allocation8 + $0x460] sm:$0xff]
    %v2274 = vld [vmem:[#allocation8 + $0x468] sm:$0xff]
    %v2275 = vld [vmem:[#allocation8 + $0x470] sm:$0xff]
    %v2276 = vld [vmem:[#allocation8 + $0x478] sm:$0xff]
    %v2277 = vld [vmem:[#allocation8 + $0x480] sm:$0xff]
    %v2278 = vld [vmem:[#allocation8 + $0x488] sm:$0xff]
    %v2279 = vld [vmem:[#allocation8 + $0x490] sm:$0xff]
    %v2280 = vld [vmem:[#allocation8 + $0x498] sm:$0xff]
    %v2281 = vld [vmem:[#allocation8 + $0x4a0] sm:$0xff]
    %v2282 = vld [vmem:[#allocation8 + $0x4a8] sm:$0xff]
    %v2283 = vld [vmem:[#allocation8 + $0x4b0] sm:$0xff]
    %v2284 = vld [vmem:[#allocation8 + $0x4b8] sm:$0xff]
    %v2285 = vld [vmem:[#allocation8 + $0x4c0] sm:$0xff]
    %v2286 = vld [vmem:[#allocation8 + $0x4c8] sm:$0xff]
    %v2287 = vld [vmem:[#allocation8 + $0x4d0] sm:$0xff]
    %v2288 = vld [vmem:[#allocation8 + $0x4d8] sm:$0xff]
    %v2289 = vld [vmem:[#allocation8 + $0x4e0] sm:$0xff]
    %v2290 = vld [vmem:[#allocation8 + $0x4e8] sm:$0xff]
    %v2291 = vld [vmem:[#allocation8 + $0x4f0] sm:$0xff]
    %v2292 = vld [vmem:[#allocation8 + $0x4f8] sm:$0xff]
    %v2293 = vld [vmem:[#allocation8 + $0x500] sm:$0xff]
    %v2294 = vld [vmem:[#allocation8 + $0x508] sm:$0xff]
    %v2295 = vld [vmem:[#allocation8 + $0x510] sm:$0xff]
    %v2296 = vld [vmem:[#allocation8 + $0x518] sm:$0xff]
    %v2297 = vld [vmem:[#allocation8 + $0x520] sm:$0xff]
    %v2298 = vld [vmem:[#allocation8 + $0x528] sm:$0xff]
    %v2299 = vld [vmem:[#allocation8 + $0x530] sm:$0xff]
    %v2300 = vld [vmem:[#allocation8 + $0x538] sm:$0xff]
    %v2301 = vld [vmem:[#allocation8 + $0x540] sm:$0xff]
    %v2302 = vld [vmem:[#allocation8 + $0x548] sm:$0xff]
    %v2303 = vld [vmem:[#allocation8 + $0x550] sm:$0xff]
    %v2304 = vld [vmem:[#allocation8 + $0x558] sm:$0xff]
    %v2305 = vld [vmem:[#allocation8 + $0x560] sm:$0xff]
    %v2306 = vld [vmem:[#allocation8 + $0x568] sm:$0xff]
    %v2307 = vld [vmem:[#allocation8 + $0x570] sm:$0xff]
    %v2308 = vld [vmem:[#allocation8 + $0x578] sm:$0xff]
    %v2309 = vld [vmem:[#allocation8 + $0x580] sm:$0xff]
    %v2310 = vld [vmem:[#allocation8 + $0x588] sm:$0xff]
    %v2311 = vld [vmem:[#allocation8 + $0x590] sm:$0xff]
    %v2312 = vld [vmem:[#allocation8 + $0x598] sm:$0xff]
    %v2313 = vld [vmem:[#allocation8 + $0x5a0] sm:$0xff]
    %v2314 = vld [vmem:[#allocation8 + $0x5a8] sm:$0xff]
    %v2315 = vld [vmem:[#allocation8 + $0x5b0] sm:$0xff]
    %v2316 = vld [vmem:[#allocation8 + $0x5b8] sm:$0xff]
    %v2317 = vld [vmem:[#allocation8 + $0x5c0] sm:$0xff]
    %v2318 = vld [vmem:[#allocation8 + $0x5c8] sm:$0xff]
    %v2319 = vld [vmem:[#allocation8 + $0x5d0] sm:$0xff]
    %v2320 = vld [vmem:[#allocation8 + $0x5d8] sm:$0xff]
    %v2321 = vld [vmem:[#allocation8 + $0x5e0] sm:$0xff]
    %v2322 = vld [vmem:[#allocation8 + $0x5e8] sm:$0xff]
    %v2323 = vld [vmem:[#allocation8 + $0x5f0] sm:$0xff]
    %v2324 = vld [vmem:[#allocation8 + $0x5f8] sm:$0xff]
    %v2325 = vld [vmem:[#allocation8 + $0x600] sm:$0xff]
    %v2326 = vld [vmem:[#allocation8 + $0x608] sm:$0xff]
    %v2327 = vld [vmem:[#allocation8 + $0x610] sm:$0xff]
    %v2328 = vld [vmem:[#allocation8 + $0x618] sm:$0xff]
    %v2329 = vld [vmem:[#allocation8 + $0x620] sm:$0xff]
    %v2330 = vld [vmem:[#allocation8 + $0x628] sm:$0xff]
    %v2331 = vld [vmem:[#allocation8 + $0x630] sm:$0xff]
    %v2332 = vld [vmem:[#allocation8 + $0x638] sm:$0xff]
    %v2333 = vld [vmem:[#allocation8 + $0x640] sm:$0xff]
    %v2334 = vld [vmem:[#allocation8 + $0x648] sm:$0xff]
    %v2335 = vld [vmem:[#allocation8 + $0x650] sm:$0xff]
    %v2336 = vld [vmem:[#allocation8 + $0x658] sm:$0xff]
    %v2337 = vld [vmem:[#allocation8 + $0x660] sm:$0xff]
    %v2338 = vld [vmem:[#allocation8 + $0x668] sm:$0xff]
    %v2339 = vld [vmem:[#allocation8 + $0x670] sm:$0xff]
    %v2340 = vld [vmem:[#allocation8 + $0x678] sm:$0xff]
    %v2341 = vld [vmem:[#allocation8 + $0x680] sm:$0xff]
    %v2342 = vld [vmem:[#allocation8 + $0x688] sm:$0xff]
    %v2343 = vld [vmem:[#allocation8 + $0x690] sm:$0xff]
    %v2344 = vld [vmem:[#allocation8 + $0x698] sm:$0xff]
    %v2345 = vld [vmem:[#allocation8 + $0x6a0] sm:$0xff]
    %v2346 = vld [vmem:[#allocation8 + $0x6a8] sm:$0xff]
    %v2347 = vld [vmem:[#allocation8 + $0x6b0] sm:$0xff]
    %v2348 = vld [vmem:[#allocation8 + $0x6b8] sm:$0xff]
    %v2349 = vld [vmem:[#allocation8 + $0x6c0] sm:$0xff]
    %v2350 = vld [vmem:[#allocation8 + $0x6c8] sm:$0xff]
    %v2351 = vld [vmem:[#allocation8 + $0x6d0] sm:$0xff]
    %v2352 = vld [vmem:[#allocation8 + $0x6d8] sm:$0xff]
    %v2353 = vld [vmem:[#allocation8 + $0x6e0] sm:$0xff]
    %v2354 = vld [vmem:[#allocation8 + $0x6e8] sm:$0xff]
    %v2355 = vld [vmem:[#allocation8 + $0x6f0] sm:$0xff]
    %v2356 = vld [vmem:[#allocation8 + $0x6f8] sm:$0xff]
    %v2357 = vld [vmem:[#allocation8 + $0x700] sm:$0xff]
    %v2358 = vld [vmem:[#allocation8 + $0x708] sm:$0xff]
    %v2359 = vld [vmem:[#allocation8 + $0x710] sm:$0xff]
    %v2360 = vld [vmem:[#allocation8 + $0x718] sm:$0xff]
    %v2361 = vld [vmem:[#allocation8 + $0x720] sm:$0xff]
    %v2362 = vld [vmem:[#allocation8 + $0x728] sm:$0xff]
    %v2363 = vld [vmem:[#allocation8 + $0x730] sm:$0xff]
    %v2364 = vld [vmem:[#allocation8 + $0x738] sm:$0xff]
    %v2365 = vld [vmem:[#allocation8 + $0x740] sm:$0xff]
    %v2366 = vld [vmem:[#allocation8 + $0x748] sm:$0xff]
    %v2367 = vld [vmem:[#allocation8 + $0x750] sm:$0xff]
    %v2368 = vld [vmem:[#allocation8 + $0x758] sm:$0xff]
    %v2369 = vld [vmem:[#allocation8 + $0x760] sm:$0xff]
    %v2370 = vld [vmem:[#allocation8 + $0x768] sm:$0xff]
    %v2371 = vld [vmem:[#allocation8 + $0x770] sm:$0xff]
    %v2372 = vld [vmem:[#allocation8 + $0x778] sm:$0xff]
    %v2373 = vld [vmem:[#allocation8 + $0x780] sm:$0xff]
    %v2374 = vld [vmem:[#allocation8 + $0x788] sm:$0xff]
    %v2375 = vld [vmem:[#allocation8 + $0x790] sm:$0xff]
    %v2376 = vld [vmem:[#allocation8 + $0x798] sm:$0xff]
    %v2377 = vld [vmem:[#allocation8 + $0x7a0] sm:$0xff]
    %v2378 = vld [vmem:[#allocation8 + $0x7a8] sm:$0xff]
    %v2379 = vld [vmem:[#allocation8 + $0x7b0] sm:$0xff]
    %v2380 = vld [vmem:[#allocation8 + $0x7b8] sm:$0xff]
    %v2381 = vld [vmem:[#allocation8 + $0x7c0] sm:$0xff]
    %v2382 = vld [vmem:[#allocation8 + $0x7c8] sm:$0xff]
    %v2383 = vld [vmem:[#allocation8 + $0x7d0] sm:$0xff]
    %v2384 = vld [vmem:[#allocation8 + $0x7d8] sm:$0xff]
    %v2385 = vld [vmem:[#allocation8 + $0x7e0] sm:$0xff]
    %v2386 = vld [vmem:[#allocation8 + $0x7e8] sm:$0xff]
    %v2387 = vld [vmem:[#allocation8 + $0x7f0] sm:$0xff]
    %v2388 = vld [vmem:[#allocation8 + $0x7f8] sm:$0xff]
    %v2389 = vld [vmem:[#allocation10] sm:$0xf]
    %v2391 = vperm.slane %v2389, 0
    %v2392 = vperm.slane %v2389, 1
    %v2393 = vperm.slane %v2389, 2
    %v2394 = vperm.slane %v2389, 3
    %v2655 = vunpack.c.l.b16 %v2133
    %v2656 = vunpack.c.h.b16 %v2133
    %v2657 = vunpack.c.l.b16 %v2134
    %v2658 = vunpack.c.h.b16 %v2134
    %v2659 = vunpack.c.l.b16 %v2135
    %v2660 = vunpack.c.h.b16 %v2135
    %v2661 = vunpack.c.l.b16 %v2136
    %v2662 = vunpack.c.h.b16 %v2136
    %v2663 = vunpack.c.l.b16 %v2137
    %v2664 = vunpack.c.h.b16 %v2137
    %v2665 = vunpack.c.l.b16 %v2138
    %v2666 = vunpack.c.h.b16 %v2138
    %v2667 = vunpack.c.l.b16 %v2139
    %v2668 = vunpack.c.h.b16 %v2139
    %v2669 = vunpack.c.l.b16 %v2140
    %v2670 = vunpack.c.h.b16 %v2140
    %v2671 = vunpack.c.l.b16 %v2141
    %v2672 = vunpack.c.h.b16 %v2141
    %v2673 = vunpack.c.l.b16 %v2142
    %v2674 = vunpack.c.h.b16 %v2142
    %v2675 = vunpack.c.l.b16 %v2143
    %v2676 = vunpack.c.h.b16 %v2143
    %v2677 = vunpack.c.l.b16 %v2144
    %v2678 = vunpack.c.h.b16 %v2144
    %v2679 = vunpack.c.l.b16 %v2145
    %v2680 = vunpack.c.h.b16 %v2145
    %v2681 = vunpack.c.l.b16 %v2146
    %v2682 = vunpack.c.h.b16 %v2146
    %v2683 = vunpack.c.l.b16 %v2147
    %v2684 = vunpack.c.h.b16 %v2147
    %v2685 = vunpack.c.l.b16 %v2148
    %v2686 = vunpack.c.h.b16 %v2148
    %v2687 = vunpack.c.l.b16 %v2149
    %v2688 = vunpack.c.h.b16 %v2149
    %v2689 = vunpack.c.l.b16 %v2150
    %v2690 = vunpack.c.h.b16 %v2150
    %v2691 = vunpack.c.l.b16 %v2151
    %v2692 = vunpack.c.h.b16 %v2151
    %v2693 = vunpack.c.l.b16 %v2152
    %v2694 = vunpack.c.h.b16 %v2152
    %v2695 = vunpack.c.l.b16 %v2153
    %v2696 = vunpack.c.h.b16 %v2153
    %v2697 = vunpack.c.l.b16 %v2154
    %v2698 = vunpack.c.h.b16 %v2154
    %v2699 = vunpack.c.l.b16 %v2155
    %v2700 = vunpack.c.h.b16 %v2155
    %v2701 = vunpack.c.l.b16 %v2156
    %v2702 = vunpack.c.h.b16 %v2156
    %v2703 = vunpack.c.l.b16 %v2157
    %v2704 = vunpack.c.h.b16 %v2157
    %v2705 = vunpack.c.l.b16 %v2158
    %v2706 = vunpack.c.h.b16 %v2158
    %v2707 = vunpack.c.l.b16 %v2159
    %v2708 = vunpack.c.h.b16 %v2159
    %v2709 = vunpack.c.l.b16 %v2160
    %v2710 = vunpack.c.h.b16 %v2160
    %v2711 = vunpack.c.l.b16 %v2161
    %v2712 = vunpack.c.h.b16 %v2161
    %v2713 = vunpack.c.l.b16 %v2162
    %v2714 = vunpack.c.h.b16 %v2162
    %v2715 = vunpack.c.l.b16 %v2163
    %v2716 = vunpack.c.h.b16 %v2163
    %v2717 = vunpack.c.l.b16 %v2164
    %v2718 = vunpack.c.h.b16 %v2164
    %v2719 = vunpack.c.l.b16 %v2165
    %v2720 = vunpack.c.h.b16 %v2165
    %v2721 = vunpack.c.l.b16 %v2166
    %v2722 = vunpack.c.h.b16 %v2166
    %v2723 = vunpack.c.l.b16 %v2167
    %v2724 = vunpack.c.h.b16 %v2167
    %v2725 = vunpack.c.l.b16 %v2168
    %v2726 = vunpack.c.h.b16 %v2168
    %v2727 = vunpack.c.l.b16 %v2169
    %v2728 = vunpack.c.h.b16 %v2169
    %v2729 = vunpack.c.l.b16 %v2170
    %v2730 = vunpack.c.h.b16 %v2170
    %v2731 = vunpack.c.l.b16 %v2171
    %v2732 = vunpack.c.h.b16 %v2171
    %v2733 = vunpack.c.l.b16 %v2172
    %v2734 = vunpack.c.h.b16 %v2172
    %v2735 = vunpack.c.l.b16 %v2173
    %v2736 = vunpack.c.h.b16 %v2173
    %v2737 = vunpack.c.l.b16 %v2174
    %v2738 = vunpack.c.h.b16 %v2174
    %v2739 = vunpack.c.l.b16 %v2175
    %v2740 = vunpack.c.h.b16 %v2175
    %v2741 = vunpack.c.l.b16 %v2176
    %v2742 = vunpack.c.h.b16 %v2176
    %v2743 = vunpack.c.l.b16 %v2177
    %v2744 = vunpack.c.h.b16 %v2177
    %v2745 = vunpack.c.l.b16 %v2178
    %v2746 = vunpack.c.h.b16 %v2178
    %v2747 = vunpack.c.l.b16 %v2179
    %v2748 = vunpack.c.h.b16 %v2179
    %v2749 = vunpack.c.l.b16 %v2180
    %v2750 = vunpack.c.h.b16 %v2180
    %v2751 = vunpack.c.l.b16 %v2181
    %v2752 = vunpack.c.h.b16 %v2181
    %v2753 = vunpack.c.l.b16 %v2182
    %v2754 = vunpack.c.h.b16 %v2182
    %v2755 = vunpack.c.l.b16 %v2183
    %v2756 = vunpack.c.h.b16 %v2183
    %v2757 = vunpack.c.l.b16 %v2184
    %v2758 = vunpack.c.h.b16 %v2184
    %v2759 = vunpack.c.l.b16 %v2185
    %v2760 = vunpack.c.h.b16 %v2185
    %v2761 = vunpack.c.l.b16 %v2186
    %v2762 = vunpack.c.h.b16 %v2186
    %v2763 = vunpack.c.l.b16 %v2187
    %v2764 = vunpack.c.h.b16 %v2187
    %v2765 = vunpack.c.l.b16 %v2188
    %v2766 = vunpack.c.h.b16 %v2188
    %v2767 = vunpack.c.l.b16 %v2189
    %v2768 = vunpack.c.h.b16 %v2189
    %v2769 = vunpack.c.l.b16 %v2190
    %v2770 = vunpack.c.h.b16 %v2190
    %v2771 = vunpack.c.l.b16 %v2191
    %v2772 = vunpack.c.h.b16 %v2191
    %v2773 = vunpack.c.l.b16 %v2192
    %v2774 = vunpack.c.h.b16 %v2192
    %v2775 = vunpack.c.l.b16 %v2193
    %v2776 = vunpack.c.h.b16 %v2193
    %v2777 = vunpack.c.l.b16 %v2194
    %v2778 = vunpack.c.h.b16 %v2194
    %v2779 = vunpack.c.l.b16 %v2195
    %v2780 = vunpack.c.h.b16 %v2195
    %v2781 = vunpack.c.l.b16 %v2196
    %v2782 = vunpack.c.h.b16 %v2196
    %v2783 = vunpack.c.l.b16 %v2197
    %v2784 = vunpack.c.h.b16 %v2197
    %v2785 = vunpack.c.l.b16 %v2198
    %v2786 = vunpack.c.h.b16 %v2198
    %v2787 = vunpack.c.l.b16 %v2199
    %v2788 = vunpack.c.h.b16 %v2199
    %v2789 = vunpack.c.l.b16 %v2200
    %v2790 = vunpack.c.h.b16 %v2200
    %v2791 = vunpack.c.l.b16 %v2201
    %v2792 = vunpack.c.h.b16 %v2201
    %v2793 = vunpack.c.l.b16 %v2202
    %v2794 = vunpack.c.h.b16 %v2202
    %v2795 = vunpack.c.l.b16 %v2203
    %v2796 = vunpack.c.h.b16 %v2203
    %v2797 = vunpack.c.l.b16 %v2204
    %v2798 = vunpack.c.h.b16 %v2204
    %v2799 = vunpack.c.l.b16 %v2205
    %v2800 = vunpack.c.h.b16 %v2205
    %v2801 = vunpack.c.l.b16 %v2206
    %v2802 = vunpack.c.h.b16 %v2206
    %v2803 = vunpack.c.l.b16 %v2207
    %v2804 = vunpack.c.h.b16 %v2207
    %v2805 = vunpack.c.l.b16 %v2208
    %v2806 = vunpack.c.h.b16 %v2208
    %v2807 = vunpack.c.l.b16 %v2209
    %v2808 = vunpack.c.h.b16 %v2209
    %v2809 = vunpack.c.l.b16 %v2210
    %v2810 = vunpack.c.h.b16 %v2210
    %v2811 = vunpack.c.l.b16 %v2211
    %v2812 = vunpack.c.h.b16 %v2211
    %v2813 = vunpack.c.l.b16 %v2212
    %v2814 = vunpack.c.h.b16 %v2212
    %v2815 = vunpack.c.l.b16 %v2213
    %v2816 = vunpack.c.h.b16 %v2213
    %v2817 = vunpack.c.l.b16 %v2214
    %v2818 = vunpack.c.h.b16 %v2214
    %v2819 = vunpack.c.l.b16 %v2215
    %v2820 = vunpack.c.h.b16 %v2215
    %v2821 = vunpack.c.l.b16 %v2216
    %v2822 = vunpack.c.h.b16 %v2216
    %v2823 = vunpack.c.l.b16 %v2217
    %v2824 = vunpack.c.h.b16 %v2217
    %v2825 = vunpack.c.l.b16 %v2218
    %v2826 = vunpack.c.h.b16 %v2218
    %v2827 = vunpack.c.l.b16 %v2219
    %v2828 = vunpack.c.h.b16 %v2219
    %v2829 = vunpack.c.l.b16 %v2220
    %v2830 = vunpack.c.h.b16 %v2220
    %v2831 = vunpack.c.l.b16 %v2221
    %v2832 = vunpack.c.h.b16 %v2221
    %v2833 = vunpack.c.l.b16 %v2222
    %v2834 = vunpack.c.h.b16 %v2222
    %v2835 = vunpack.c.l.b16 %v2223
    %v2836 = vunpack.c.h.b16 %v2223
    %v2837 = vunpack.c.l.b16 %v2224
    %v2838 = vunpack.c.h.b16 %v2224
    %v2839 = vunpack.c.l.b16 %v2225
    %v2840 = vunpack.c.h.b16 %v2225
    %v2841 = vunpack.c.l.b16 %v2226
    %v2842 = vunpack.c.h.b16 %v2226
    %v2843 = vunpack.c.l.b16 %v2227
    %v2844 = vunpack.c.h.b16 %v2227
    %v2845 = vunpack.c.l.b16 %v2228
    %v2846 = vunpack.c.h.b16 %v2228
    %v2847 = vunpack.c.l.b16 %v2229
    %v2848 = vunpack.c.h.b16 %v2229
    %v2849 = vunpack.c.l.b16 %v2230
    %v2850 = vunpack.c.h.b16 %v2230
    %v2851 = vunpack.c.l.b16 %v2231
    %v2852 = vunpack.c.h.b16 %v2231
    %v2853 = vunpack.c.l.b16 %v2232
    %v2854 = vunpack.c.h.b16 %v2232
    %v2855 = vunpack.c.l.b16 %v2233
    %v2856 = vunpack.c.h.b16 %v2233
    %v2857 = vunpack.c.l.b16 %v2234
    %v2858 = vunpack.c.h.b16 %v2234
    %v2859 = vunpack.c.l.b16 %v2235
    %v2860 = vunpack.c.h.b16 %v2235
    %v2861 = vunpack.c.l.b16 %v2236
    %v2862 = vunpack.c.h.b16 %v2236
    %v2863 = vunpack.c.l.b16 %v2237
    %v2864 = vunpack.c.h.b16 %v2237
    %v2865 = vunpack.c.l.b16 %v2238
    %v2866 = vunpack.c.h.b16 %v2238
    %v2867 = vunpack.c.l.b16 %v2239
    %v2868 = vunpack.c.h.b16 %v2239
    %v2869 = vunpack.c.l.b16 %v2240
    %v2870 = vunpack.c.h.b16 %v2240
    %v2871 = vunpack.c.l.b16 %v2241
    %v2872 = vunpack.c.h.b16 %v2241
    %v2873 = vunpack.c.l.b16 %v2242
    %v2874 = vunpack.c.h.b16 %v2242
    %v2875 = vunpack.c.l.b16 %v2243
    %v2876 = vunpack.c.h.b16 %v2243
    %v2877 = vunpack.c.l.b16 %v2244
    %v2878 = vunpack.c.h.b16 %v2244
    %v2879 = vunpack.c.l.b16 %v2245
    %v2880 = vunpack.c.h.b16 %v2245
    %v2881 = vunpack.c.l.b16 %v2246
    %v2882 = vunpack.c.h.b16 %v2246
    %v2883 = vunpack.c.l.b16 %v2247
    %v2884 = vunpack.c.h.b16 %v2247
    %v2885 = vunpack.c.l.b16 %v2248
    %v2886 = vunpack.c.h.b16 %v2248
    %v2887 = vunpack.c.l.b16 %v2249
    %v2888 = vunpack.c.h.b16 %v2249
    %v2889 = vunpack.c.l.b16 %v2250
    %v2890 = vunpack.c.h.b16 %v2250
    %v2891 = vunpack.c.l.b16 %v2251
    %v2892 = vunpack.c.h.b16 %v2251
    %v2893 = vunpack.c.l.b16 %v2252
    %v2894 = vunpack.c.h.b16 %v2252
    %v2895 = vunpack.c.l.b16 %v2253
    %v2896 = vunpack.c.h.b16 %v2253
    %v2897 = vunpack.c.l.b16 %v2254
    %v2898 = vunpack.c.h.b16 %v2254
    %v2899 = vunpack.c.l.b16 %v2255
    %v2900 = vunpack.c.h.b16 %v2255
    %v2901 = vunpack.c.l.b16 %v2256
    %v2902 = vunpack.c.h.b16 %v2256
    %v2903 = vunpack.c.l.b16 %v2257
    %v2904 = vunpack.c.h.b16 %v2257
    %v2905 = vunpack.c.l.b16 %v2258
    %v2906 = vunpack.c.h.b16 %v2258
    %v2907 = vunpack.c.l.b16 %v2259
    %v2908 = vunpack.c.h.b16 %v2259
    %v2909 = vunpack.c.l.b16 %v2260
    %v2910 = vunpack.c.h.b16 %v2260
    %v2911 = vunpack.c.l.b16 %v2261
    %v2912 = vunpack.c.h.b16 %v2261
    %v2913 = vunpack.c.l.b16 %v2262
    %v2914 = vunpack.c.h.b16 %v2262
    %v2915 = vunpack.c.l.b16 %v2263
    %v2916 = vunpack.c.h.b16 %v2263
    %v2917 = vunpack.c.l.b16 %v2264
    %v2918 = vunpack.c.h.b16 %v2264
    %v2919 = vunpack.c.l.b16 %v2265
    %v2920 = vunpack.c.h.b16 %v2265
    %v2921 = vunpack.c.l.b16 %v2266
    %v2922 = vunpack.c.h.b16 %v2266
    %v2923 = vunpack.c.l.b16 %v2267
    %v2924 = vunpack.c.h.b16 %v2267
    %v2925 = vunpack.c.l.b16 %v2268
    %v2926 = vunpack.c.h.b16 %v2268
    %v2927 = vunpack.c.l.b16 %v2269
    %v2928 = vunpack.c.h.b16 %v2269
    %v2929 = vunpack.c.l.b16 %v2270
    %v2930 = vunpack.c.h.b16 %v2270
    %v2931 = vunpack.c.l.b16 %v2271
    %v2932 = vunpack.c.h.b16 %v2271
    %v2933 = vunpack.c.l.b16 %v2272
    %v2934 = vunpack.c.h.b16 %v2272
    %v2935 = vunpack.c.l.b16 %v2273
    %v2936 = vunpack.c.h.b16 %v2273
    %v2937 = vunpack.c.l.b16 %v2274
    %v2938 = vunpack.c.h.b16 %v2274
    %v2939 = vunpack.c.l.b16 %v2275
    %v2940 = vunpack.c.h.b16 %v2275
    %v2941 = vunpack.c.l.b16 %v2276
    %v2942 = vunpack.c.h.b16 %v2276
    %v2943 = vunpack.c.l.b16 %v2277
    %v2944 = vunpack.c.h.b16 %v2277
    %v2945 = vunpack.c.l.b16 %v2278
    %v2946 = vunpack.c.h.b16 %v2278
    %v2947 = vunpack.c.l.b16 %v2279
    %v2948 = vunpack.c.h.b16 %v2279
    %v2949 = vunpack.c.l.b16 %v2280
    %v2950 = vunpack.c.h.b16 %v2280
    %v2951 = vunpack.c.l.b16 %v2281
    %v2952 = vunpack.c.h.b16 %v2281
    %v2953 = vunpack.c.l.b16 %v2282
    %v2954 = vunpack.c.h.b16 %v2282
    %v2955 = vunpack.c.l.b16 %v2283
    %v2956 = vunpack.c.h.b16 %v2283
    %v2957 = vunpack.c.l.b16 %v2284
    %v2958 = vunpack.c.h.b16 %v2284
    %v2959 = vunpack.c.l.b16 %v2285
    %v2960 = vunpack.c.h.b16 %v2285
    %v2961 = vunpack.c.l.b16 %v2286
    %v2962 = vunpack.c.h.b16 %v2286
    %v2963 = vunpack.c.l.b16 %v2287
    %v2964 = vunpack.c.h.b16 %v2287
    %v2965 = vunpack.c.l.b16 %v2288
    %v2966 = vunpack.c.h.b16 %v2288
    %v2967 = vunpack.c.l.b16 %v2289
    %v2968 = vunpack.c.h.b16 %v2289
    %v2969 = vunpack.c.l.b16 %v2290
    %v2970 = vunpack.c.h.b16 %v2290
    %v2971 = vunpack.c.l.b16 %v2291
    %v2972 = vunpack.c.h.b16 %v2291
    %v2973 = vunpack.c.l.b16 %v2292
    %v2974 = vunpack.c.h.b16 %v2292
    %v2975 = vunpack.c.l.b16 %v2293
    %v2976 = vunpack.c.h.b16 %v2293
    %v2977 = vunpack.c.l.b16 %v2294
    %v2978 = vunpack.c.h.b16 %v2294
    %v2979 = vunpack.c.l.b16 %v2295
    %v2980 = vunpack.c.h.b16 %v2295
    %v2981 = vunpack.c.l.b16 %v2296
    %v2982 = vunpack.c.h.b16 %v2296
    %v2983 = vunpack.c.l.b16 %v2297
    %v2984 = vunpack.c.h.b16 %v2297
    %v2985 = vunpack.c.l.b16 %v2298
    %v2986 = vunpack.c.h.b16 %v2298
    %v2987 = vunpack.c.l.b16 %v2299
    %v2988 = vunpack.c.h.b16 %v2299
    %v2989 = vunpack.c.l.b16 %v2300
    %v2990 = vunpack.c.h.b16 %v2300
    %v2991 = vunpack.c.l.b16 %v2301
    %v2992 = vunpack.c.h.b16 %v2301
    %v2993 = vunpack.c.l.b16 %v2302
    %v2994 = vunpack.c.h.b16 %v2302
    %v2995 = vunpack.c.l.b16 %v2303
    %v2996 = vunpack.c.h.b16 %v2303
    %v2997 = vunpack.c.l.b16 %v2304
    %v2998 = vunpack.c.h.b16 %v2304
    %v2999 = vunpack.c.l.b16 %v2305
    %v3000 = vunpack.c.h.b16 %v2305
    %v3001 = vunpack.c.l.b16 %v2306
    %v3002 = vunpack.c.h.b16 %v2306
    %v3003 = vunpack.c.l.b16 %v2307
    %v3004 = vunpack.c.h.b16 %v2307
    %v3005 = vunpack.c.l.b16 %v2308
    %v3006 = vunpack.c.h.b16 %v2308
    %v3007 = vunpack.c.l.b16 %v2309
    %v3008 = vunpack.c.h.b16 %v2309
    %v3009 = vunpack.c.l.b16 %v2310
    %v3010 = vunpack.c.h.b16 %v2310
    %v3011 = vunpack.c.l.b16 %v2311
    %v3012 = vunpack.c.h.b16 %v2311
    %v3013 = vunpack.c.l.b16 %v2312
    %v3014 = vunpack.c.h.b16 %v2312
    %v3015 = vunpack.c.l.b16 %v2313
    %v3016 = vunpack.c.h.b16 %v2313
    %v3017 = vunpack.c.l.b16 %v2314
    %v3018 = vunpack.c.h.b16 %v2314
    %v3019 = vunpack.c.l.b16 %v2315
    %v3020 = vunpack.c.h.b16 %v2315
    %v3021 = vunpack.c.l.b16 %v2316
    %v3022 = vunpack.c.h.b16 %v2316
    %v3023 = vunpack.c.l.b16 %v2317
    %v3024 = vunpack.c.h.b16 %v2317
    %v3025 = vunpack.c.l.b16 %v2318
    %v3026 = vunpack.c.h.b16 %v2318
    %v3027 = vunpack.c.l.b16 %v2319
    %v3028 = vunpack.c.h.b16 %v2319
    %v3029 = vunpack.c.l.b16 %v2320
    %v3030 = vunpack.c.h.b16 %v2320
    %v3031 = vunpack.c.l.b16 %v2321
    %v3032 = vunpack.c.h.b16 %v2321
    %v3033 = vunpack.c.l.b16 %v2322
    %v3034 = vunpack.c.h.b16 %v2322
    %v3035 = vunpack.c.l.b16 %v2323
    %v3036 = vunpack.c.h.b16 %v2323
    %v3037 = vunpack.c.l.b16 %v2324
    %v3038 = vunpack.c.h.b16 %v2324
    %v3039 = vunpack.c.l.b16 %v2325
    %v3040 = vunpack.c.h.b16 %v2325
    %v3041 = vunpack.c.l.b16 %v2326
    %v3042 = vunpack.c.h.b16 %v2326
    %v3043 = vunpack.c.l.b16 %v2327
    %v3044 = vunpack.c.h.b16 %v2327
    %v3045 = vunpack.c.l.b16 %v2328
    %v3046 = vunpack.c.h.b16 %v2328
    %v3047 = vunpack.c.l.b16 %v2329
    %v3048 = vunpack.c.h.b16 %v2329
    %v3049 = vunpack.c.l.b16 %v2330
    %v3050 = vunpack.c.h.b16 %v2330
    %v3051 = vunpack.c.l.b16 %v2331
    %v3052 = vunpack.c.h.b16 %v2331
    %v3053 = vunpack.c.l.b16 %v2332
    %v3054 = vunpack.c.h.b16 %v2332
    %v3055 = vunpack.c.l.b16 %v2333
    %v3056 = vunpack.c.h.b16 %v2333
    %v3057 = vunpack.c.l.b16 %v2334
    %v3058 = vunpack.c.h.b16 %v2334
    %v3059 = vunpack.c.l.b16 %v2335
    %v3060 = vunpack.c.h.b16 %v2335
    %v3061 = vunpack.c.l.b16 %v2336
    %v3062 = vunpack.c.h.b16 %v2336
    %v3063 = vunpack.c.l.b16 %v2337
    %v3064 = vunpack.c.h.b16 %v2337
    %v3065 = vunpack.c.l.b16 %v2338
    %v3066 = vunpack.c.h.b16 %v2338
    %v3067 = vunpack.c.l.b16 %v2339
    %v3068 = vunpack.c.h.b16 %v2339
    %v3069 = vunpack.c.l.b16 %v2340
    %v3070 = vunpack.c.h.b16 %v2340
    %v3071 = vunpack.c.l.b16 %v2341
    %v3072 = vunpack.c.h.b16 %v2341
    %v3073 = vunpack.c.l.b16 %v2342
    %v3074 = vunpack.c.h.b16 %v2342
    %v3075 = vunpack.c.l.b16 %v2343
    %v3076 = vunpack.c.h.b16 %v2343
    %v3077 = vunpack.c.l.b16 %v2344
    %v3078 = vunpack.c.h.b16 %v2344
    %v3079 = vunpack.c.l.b16 %v2345
    %v3080 = vunpack.c.h.b16 %v2345
    %v3081 = vunpack.c.l.b16 %v2346
    %v3082 = vunpack.c.h.b16 %v2346
    %v3083 = vunpack.c.l.b16 %v2347
    %v3084 = vunpack.c.h.b16 %v2347
    %v3085 = vunpack.c.l.b16 %v2348
    %v3086 = vunpack.c.h.b16 %v2348
    %v3087 = vunpack.c.l.b16 %v2349
    %v3088 = vunpack.c.h.b16 %v2349
    %v3089 = vunpack.c.l.b16 %v2350
    %v3090 = vunpack.c.h.b16 %v2350
    %v3091 = vunpack.c.l.b16 %v2351
    %v3092 = vunpack.c.h.b16 %v2351
    %v3093 = vunpack.c.l.b16 %v2352
    %v3094 = vunpack.c.h.b16 %v2352
    %v3095 = vunpack.c.l.b16 %v2353
    %v3096 = vunpack.c.h.b16 %v2353
    %v3097 = vunpack.c.l.b16 %v2354
    %v3098 = vunpack.c.h.b16 %v2354
    %v3099 = vunpack.c.l.b16 %v2355
    %v3100 = vunpack.c.h.b16 %v2355
    %v3101 = vunpack.c.l.b16 %v2356
    %v3102 = vunpack.c.h.b16 %v2356
    %v3103 = vunpack.c.l.b16 %v2357
    %v3104 = vunpack.c.h.b16 %v2357
    %v3105 = vunpack.c.l.b16 %v2358
    %v3106 = vunpack.c.h.b16 %v2358
    %v3107 = vunpack.c.l.b16 %v2359
    %v3108 = vunpack.c.h.b16 %v2359
    %v3109 = vunpack.c.l.b16 %v2360
    %v3110 = vunpack.c.h.b16 %v2360
    %v3111 = vunpack.c.l.b16 %v2361
    %v3112 = vunpack.c.h.b16 %v2361
    %v3113 = vunpack.c.l.b16 %v2362
    %v3114 = vunpack.c.h.b16 %v2362
    %v3115 = vunpack.c.l.b16 %v2363
    %v3116 = vunpack.c.h.b16 %v2363
    %v3117 = vunpack.c.l.b16 %v2364
    %v3118 = vunpack.c.h.b16 %v2364
    %v3119 = vunpack.c.l.b16 %v2365
    %v3120 = vunpack.c.h.b16 %v2365
    %v3121 = vunpack.c.l.b16 %v2366
    %v3122 = vunpack.c.h.b16 %v2366
    %v3123 = vunpack.c.l.b16 %v2367
    %v3124 = vunpack.c.h.b16 %v2367
    %v3125 = vunpack.c.l.b16 %v2368
    %v3126 = vunpack.c.h.b16 %v2368
    %v3127 = vunpack.c.l.b16 %v2369
    %v3128 = vunpack.c.h.b16 %v2369
    %v3129 = vunpack.c.l.b16 %v2370
    %v3130 = vunpack.c.h.b16 %v2370
    %v3131 = vunpack.c.l.b16 %v2371
    %v3132 = vunpack.c.h.b16 %v2371
    %v3133 = vunpack.c.l.b16 %v2372
    %v3134 = vunpack.c.h.b16 %v2372
    %v3135 = vunpack.c.l.b16 %v2373
    %v3136 = vunpack.c.h.b16 %v2373
    %v3137 = vunpack.c.l.b16 %v2374
    %v3138 = vunpack.c.h.b16 %v2374
    %v3139 = vunpack.c.l.b16 %v2375
    %v3140 = vunpack.c.h.b16 %v2375
    %v3141 = vunpack.c.l.b16 %v2376
    %v3142 = vunpack.c.h.b16 %v2376
    %v3143 = vunpack.c.l.b16 %v2377
    %v3144 = vunpack.c.h.b16 %v2377
    %v3145 = vunpack.c.l.b16 %v2378
    %v3146 = vunpack.c.h.b16 %v2378
    %v3147 = vunpack.c.l.b16 %v2379
    %v3148 = vunpack.c.h.b16 %v2379
    %v3149 = vunpack.c.l.b16 %v2380
    %v3150 = vunpack.c.h.b16 %v2380
    %v3151 = vunpack.c.l.b16 %v2381
    %v3152 = vunpack.c.h.b16 %v2381
    %v3153 = vunpack.c.l.b16 %v2382
    %v3154 = vunpack.c.h.b16 %v2382
    %v3155 = vunpack.c.l.b16 %v2383
    %v3156 = vunpack.c.h.b16 %v2383
    %v3157 = vunpack.c.l.b16 %v2384
    %v3158 = vunpack.c.h.b16 %v2384
    %v3159 = vunpack.c.l.b16 %v2385
    %v3160 = vunpack.c.h.b16 %v2385
    %v3161 = vunpack.c.l.b16 %v2386
    %v3162 = vunpack.c.h.b16 %v2386
    %v3163 = vunpack.c.l.b16 %v2387
    %v3164 = vunpack.c.h.b16 %v2387
    %v3165 = vunpack.c.l.b16 %v2388
    %v3166 = vunpack.c.h.b16 %v2388
    %v3167 = vpack.c.b16 %v2659, %v2655
    %v3168 = vpack.c.b16 %v2660, %v2656
    %v3169 = vpack.c.b16 %v2661, %v2657
    %v3170 = vpack.c.b16 %v2662, %v2658
    %v3171 = vpack.c.b16 %v2667, %v2663
    %v3172 = vpack.c.b16 %v2668, %v2664
    %v3173 = vpack.c.b16 %v2669, %v2665
    %v3174 = vpack.c.b16 %v2670, %v2666
    %v3175 = vpack.c.b16 %v2675, %v2671
    %v3176 = vpack.c.b16 %v2676, %v2672
    %v3177 = vpack.c.b16 %v2677, %v2673
    %v3178 = vpack.c.b16 %v2678, %v2674
    %v3179 = vpack.c.b16 %v2683, %v2679
    %v3180 = vpack.c.b16 %v2684, %v2680
    %v3181 = vpack.c.b16 %v2685, %v2681
    %v3182 = vpack.c.b16 %v2686, %v2682
    %v3183 = vpack.c.b16 %v2691, %v2687
    %v3184 = vpack.c.b16 %v2692, %v2688
    %v3185 = vpack.c.b16 %v2693, %v2689
    %v3186 = vpack.c.b16 %v2694, %v2690
    %v3187 = vpack.c.b16 %v2699, %v2695
    %v3188 = vpack.c.b16 %v2700, %v2696
    %v3189 = vpack.c.b16 %v2701, %v2697
    %v3190 = vpack.c.b16 %v2702, %v2698
    %v3191 = vpack.c.b16 %v2707, %v2703
    %v3192 = vpack.c.b16 %v2708, %v2704
    %v3193 = vpack.c.b16 %v2709, %v2705
    %v3194 = vpack.c.b16 %v2710, %v2706
    %v3195 = vpack.c.b16 %v2715, %v2711
    %v3196 = vpack.c.b16 %v2716, %v2712
    %v3197 = vpack.c.b16 %v2717, %v2713
    %v3198 = vpack.c.b16 %v2718, %v2714
    %v3199 = vpack.c.b16 %v2723, %v2719
    %v3200 = vpack.c.b16 %v2724, %v2720
    %v3201 = vpack.c.b16 %v2725, %v2721
    %v3202 = vpack.c.b16 %v2726, %v2722
    %v3203 = vpack.c.b16 %v2731, %v2727
    %v3204 = vpack.c.b16 %v2732, %v2728
    %v3205 = vpack.c.b16 %v2733, %v2729
    %v3206 = vpack.c.b16 %v2734, %v2730
    %v3207 = vpack.c.b16 %v2739, %v2735
    %v3208 = vpack.c.b16 %v2740, %v2736
    %v3209 = vpack.c.b16 %v2741, %v2737
    %v3210 = vpack.c.b16 %v2742, %v2738
    %v3211 = vpack.c.b16 %v2747, %v2743
    %v3212 = vpack.c.b16 %v2748, %v2744
    %v3213 = vpack.c.b16 %v2749, %v2745
    %v3214 = vpack.c.b16 %v2750, %v2746
    %v3215 = vpack.c.b16 %v2755, %v2751
    %v3216 = vpack.c.b16 %v2756, %v2752
    %v3217 = vpack.c.b16 %v2757, %v2753
    %v3218 = vpack.c.b16 %v2758, %v2754
    %v3219 = vpack.c.b16 %v2763, %v2759
    %v3220 = vpack.c.b16 %v2764, %v2760
    %v3221 = vpack.c.b16 %v2765, %v2761
    %v3222 = vpack.c.b16 %v2766, %v2762
    %v3223 = vpack.c.b16 %v2771, %v2767
    %v3224 = vpack.c.b16 %v2772, %v2768
    %v3225 = vpack.c.b16 %v2773, %v2769
    %v3226 = vpack.c.b16 %v2774, %v2770
    %v3227 = vpack.c.b16 %v2779, %v2775
    %v3228 = vpack.c.b16 %v2780, %v2776
    %v3229 = vpack.c.b16 %v2781, %v2777
    %v3230 = vpack.c.b16 %v2782, %v2778
    %v3231 = vpack.c.b16 %v2787, %v2783
    %v3232 = vpack.c.b16 %v2788, %v2784
    %v3233 = vpack.c.b16 %v2789, %v2785
    %v3234 = vpack.c.b16 %v2790, %v2786
    %v3235 = vpack.c.b16 %v2795, %v2791
    %v3236 = vpack.c.b16 %v2796, %v2792
    %v3237 = vpack.c.b16 %v2797, %v2793
    %v3238 = vpack.c.b16 %v2798, %v2794
    %v3239 = vpack.c.b16 %v2803, %v2799
    %v3240 = vpack.c.b16 %v2804, %v2800
    %v3241 = vpack.c.b16 %v2805, %v2801
    %v3242 = vpack.c.b16 %v2806, %v2802
    %v3243 = vpack.c.b16 %v2811, %v2807
    %v3244 = vpack.c.b16 %v2812, %v2808
    %v3245 = vpack.c.b16 %v2813, %v2809
    %v3246 = vpack.c.b16 %v2814, %v2810
    %v3247 = vpack.c.b16 %v2819, %v2815
    %v3248 = vpack.c.b16 %v2820, %v2816
    %v3249 = vpack.c.b16 %v2821, %v2817
    %v3250 = vpack.c.b16 %v2822, %v2818
    %v3251 = vpack.c.b16 %v2827, %v2823
    %v3252 = vpack.c.b16 %v2828, %v2824
    %v3253 = vpack.c.b16 %v2829, %v2825
    %v3254 = vpack.c.b16 %v2830, %v2826
    %v3255 = vpack.c.b16 %v2835, %v2831
    %v3256 = vpack.c.b16 %v2836, %v2832
    %v3257 = vpack.c.b16 %v2837, %v2833
    %v3258 = vpack.c.b16 %v2838, %v2834
    %v3259 = vpack.c.b16 %v2843, %v2839
    %v3260 = vpack.c.b16 %v2844, %v2840
    %v3261 = vpack.c.b16 %v2845, %v2841
    %v3262 = vpack.c.b16 %v2846, %v2842
    %v3263 = vpack.c.b16 %v2851, %v2847
    %v3264 = vpack.c.b16 %v2852, %v2848
    %v3265 = vpack.c.b16 %v2853, %v2849
    %v3266 = vpack.c.b16 %v2854, %v2850
    %v3267 = vpack.c.b16 %v2859, %v2855
    %v3268 = vpack.c.b16 %v2860, %v2856
    %v3269 = vpack.c.b16 %v2861, %v2857
    %v3270 = vpack.c.b16 %v2862, %v2858
    %v3271 = vpack.c.b16 %v2867, %v2863
    %v3272 = vpack.c.b16 %v2868, %v2864
    %v3273 = vpack.c.b16 %v2869, %v2865
    %v3274 = vpack.c.b16 %v2870, %v2866
    %v3275 = vpack.c.b16 %v2875, %v2871
    %v3276 = vpack.c.b16 %v2876, %v2872
    %v3277 = vpack.c.b16 %v2877, %v2873
    %v3278 = vpack.c.b16 %v2878, %v2874
    %v3279 = vpack.c.b16 %v2883, %v2879
    %v3280 = vpack.c.b16 %v2884, %v2880
    %v3281 = vpack.c.b16 %v2885, %v2881
    %v3282 = vpack.c.b16 %v2886, %v2882
    %v3283 = vpack.c.b16 %v2891, %v2887
    %v3284 = vpack.c.b16 %v2892, %v2888
    %v3285 = vpack.c.b16 %v2893, %v2889
    %v3286 = vpack.c.b16 %v2894, %v2890
    %v3287 = vpack.c.b16 %v2899, %v2895
    %v3288 = vpack.c.b16 %v2900, %v2896
    %v3289 = vpack.c.b16 %v2901, %v2897
    %v3290 = vpack.c.b16 %v2902, %v2898
    %v3291 = vpack.c.b16 %v2907, %v2903
    %v3292 = vpack.c.b16 %v2908, %v2904
    %v3293 = vpack.c.b16 %v2909, %v2905
    %v3294 = vpack.c.b16 %v2910, %v2906
    %v3295 = vpack.c.b16 %v2915, %v2911
    %v3296 = vpack.c.b16 %v2916, %v2912
    %v3297 = vpack.c.b16 %v2917, %v2913
    %v3298 = vpack.c.b16 %v2918, %v2914
    %v3299 = vpack.c.b16 %v2923, %v2919
    %v3300 = vpack.c.b16 %v2924, %v2920
    %v3301 = vpack.c.b16 %v2925, %v2921
    %v3302 = vpack.c.b16 %v2926, %v2922
    %v3303 = vpack.c.b16 %v2931, %v2927
    %v3304 = vpack.c.b16 %v2932, %v2928
    %v3305 = vpack.c.b16 %v2933, %v2929
    %v3306 = vpack.c.b16 %v2934, %v2930
    %v3307 = vpack.c.b16 %v2939, %v2935
    %v3308 = vpack.c.b16 %v2940, %v2936
    %v3309 = vpack.c.b16 %v2941, %v2937
    %v3310 = vpack.c.b16 %v2942, %v2938
    %v3311 = vpack.c.b16 %v2947, %v2943
    %v3312 = vpack.c.b16 %v2948, %v2944
    %v3313 = vpack.c.b16 %v2949, %v2945
    %v3314 = vpack.c.b16 %v2950, %v2946
    %v3315 = vpack.c.b16 %v2955, %v2951
    %v3316 = vpack.c.b16 %v2956, %v2952
    %v3317 = vpack.c.b16 %v2957, %v2953
    %v3318 = vpack.c.b16 %v2958, %v2954
    %v3319 = vpack.c.b16 %v2963, %v2959
    %v3320 = vpack.c.b16 %v2964, %v2960
    %v3321 = vpack.c.b16 %v2965, %v2961
    %v3322 = vpack.c.b16 %v2966, %v2962
    %v3323 = vpack.c.b16 %v2971, %v2967
    %v3324 = vpack.c.b16 %v2972, %v2968
    %v3325 = vpack.c.b16 %v2973, %v2969
    %v3326 = vpack.c.b16 %v2974, %v2970
    %v3327 = vpack.c.b16 %v2979, %v2975
    %v3328 = vpack.c.b16 %v2980, %v2976
    %v3329 = vpack.c.b16 %v2981, %v2977
    %v3330 = vpack.c.b16 %v2982, %v2978
    %v3331 = vpack.c.b16 %v2987, %v2983
    %v3332 = vpack.c.b16 %v2988, %v2984
    %v3333 = vpack.c.b16 %v2989, %v2985
    %v3334 = vpack.c.b16 %v2990, %v2986
    %v3335 = vpack.c.b16 %v2995, %v2991
    %v3336 = vpack.c.b16 %v2996, %v2992
    %v3337 = vpack.c.b16 %v2997, %v2993
    %v3338 = vpack.c.b16 %v2998, %v2994
    %v3339 = vpack.c.b16 %v3003, %v2999
    %v3340 = vpack.c.b16 %v3004, %v3000
    %v3341 = vpack.c.b16 %v3005, %v3001
    %v3342 = vpack.c.b16 %v3006, %v3002
    %v3343 = vpack.c.b16 %v3011, %v3007
    %v3344 = vpack.c.b16 %v3012, %v3008
    %v3345 = vpack.c.b16 %v3013, %v3009
    %v3346 = vpack.c.b16 %v3014, %v3010
    %v3347 = vpack.c.b16 %v3019, %v3015
    %v3348 = vpack.c.b16 %v3020, %v3016
    %v3349 = vpack.c.b16 %v3021, %v3017
    %v3350 = vpack.c.b16 %v3022, %v3018
    %v3351 = vpack.c.b16 %v3027, %v3023
    %v3352 = vpack.c.b16 %v3028, %v3024
    %v3353 = vpack.c.b16 %v3029, %v3025
    %v3354 = vpack.c.b16 %v3030, %v3026
    %v3355 = vpack.c.b16 %v3035, %v3031
    %v3356 = vpack.c.b16 %v3036, %v3032
    %v3357 = vpack.c.b16 %v3037, %v3033
    %v3358 = vpack.c.b16 %v3038, %v3034
    %v3359 = vpack.c.b16 %v3043, %v3039
    %v3360 = vpack.c.b16 %v3044, %v3040
    %v3361 = vpack.c.b16 %v3045, %v3041
    %v3362 = vpack.c.b16 %v3046, %v3042
    %v3363 = vpack.c.b16 %v3051, %v3047
    %v3364 = vpack.c.b16 %v3052, %v3048
    %v3365 = vpack.c.b16 %v3053, %v3049
    %v3366 = vpack.c.b16 %v3054, %v3050
    %v3367 = vpack.c.b16 %v3059, %v3055
    %v3368 = vpack.c.b16 %v3060, %v3056
    %v3369 = vpack.c.b16 %v3061, %v3057
    %v3370 = vpack.c.b16 %v3062, %v3058
    %v3371 = vpack.c.b16 %v3067, %v3063
    %v3372 = vpack.c.b16 %v3068, %v3064
    %v3373 = vpack.c.b16 %v3069, %v3065
    %v3374 = vpack.c.b16 %v3070, %v3066
    %v3375 = vpack.c.b16 %v3075, %v3071
    %v3376 = vpack.c.b16 %v3076, %v3072
    %v3377 = vpack.c.b16 %v3077, %v3073
    %v3378 = vpack.c.b16 %v3078, %v3074
    %v3379 = vpack.c.b16 %v3083, %v3079
    %v3380 = vpack.c.b16 %v3084, %v3080
    %v3381 = vpack.c.b16 %v3085, %v3081
    %v3382 = vpack.c.b16 %v3086, %v3082
    %v3383 = vpack.c.b16 %v3091, %v3087
    %v3384 = vpack.c.b16 %v3092, %v3088
    %v3385 = vpack.c.b16 %v3093, %v3089
    %v3386 = vpack.c.b16 %v3094, %v3090
    %v3387 = vpack.c.b16 %v3099, %v3095
    %v3388 = vpack.c.b16 %v3100, %v3096
    %v3389 = vpack.c.b16 %v3101, %v3097
    %v3390 = vpack.c.b16 %v3102, %v3098
    %v3391 = vpack.c.b16 %v3107, %v3103
    %v3392 = vpack.c.b16 %v3108, %v3104
    %v3393 = vpack.c.b16 %v3109, %v3105
    %v3394 = vpack.c.b16 %v3110, %v3106
    %v3395 = vpack.c.b16 %v3115, %v3111
    %v3396 = vpack.c.b16 %v3116, %v3112
    %v3397 = vpack.c.b16 %v3117, %v3113
    %v3398 = vpack.c.b16 %v3118, %v3114
    %v3399 = vpack.c.b16 %v3123, %v3119
    %v3400 = vpack.c.b16 %v3124, %v3120
    %v3401 = vpack.c.b16 %v3125, %v3121
    %v3402 = vpack.c.b16 %v3126, %v3122
    %v3403 = vpack.c.b16 %v3131, %v3127
    %v3404 = vpack.c.b16 %v3132, %v3128
    %v3405 = vpack.c.b16 %v3133, %v3129
    %v3406 = vpack.c.b16 %v3134, %v3130
    %v3407 = vpack.c.b16 %v3139, %v3135
    %v3408 = vpack.c.b16 %v3140, %v3136
    %v3409 = vpack.c.b16 %v3141, %v3137
    %v3410 = vpack.c.b16 %v3142, %v3138
    %v3411 = vpack.c.b16 %v3147, %v3143
    %v3412 = vpack.c.b16 %v3148, %v3144
    %v3413 = vpack.c.b16 %v3149, %v3145
    %v3414 = vpack.c.b16 %v3150, %v3146
    %v3415 = vpack.c.b16 %v3155, %v3151
    %v3416 = vpack.c.b16 %v3156, %v3152
    %v3417 = vpack.c.b16 %v3157, %v3153
    %v3418 = vpack.c.b16 %v3158, %v3154
    %v3419 = vpack.c.b16 %v3163, %v3159
    %v3420 = vpack.c.b16 %v3164, %v3160
    %v3421 = vpack.c.b16 %v3165, %v3161
    %v3422 = vpack.c.b16 %v3166, %v3162
    %3679 = vmatpush.bf16.msra.mxu0 %v3195
    %3680 = vmatpush.bf16.msra.mxu0 %v3191
    %3681 = vmatpush.bf16.msra.mxu0 %v3187
    %3682 = vmatpush.bf16.msra.mxu0 %v3183
    %3683 = vmatpush.bf16.msra.mxu0 %v3179
    %3684 = vmatpush.bf16.msra.mxu0 %v3175
    %3685 = vmatpush.bf16.msra.mxu0 %v3171
    %3686 = vmatpush.bf16.msra.mxu0 %v3167
    %3687 = vmatmul.bf16.gmra.mxu0 %v2125
    %v3688 = vpop.f32.mrf.mxu0
    %v3689 = vadd.f32 %v2391, %v3688
    %v3690 = vpop.f32.mrf.mxu0
    %v3691 = vadd.f32 %v2391, %v3690
    %3692 = vdwg.mxu0
    %3693 = vmatpush.bf16.msra.mxu0 %v3227
    %3694 = vmatpush.bf16.msra.mxu0 %v3223
    %3695 = vmatpush.bf16.msra.mxu0 %v3219
    %3696 = vmatpush.bf16.msra.mxu0 %v3215
    %3697 = vmatpush.bf16.msra.mxu0 %v3211
    %3698 = vmatpush.bf16.msra.mxu0 %v3207
    %3699 = vmatpush.bf16.msra.mxu0 %v3203
    %3700 = vmatpush.bf16.msra.mxu0 %v3199
    %3701 = vmatmul.bf16.gmra.mxu0 %v2126
    %v3702 = vpop.f32.mrf.mxu0
    %v3703 = vadd.f32 %v3689, %v3702
    %v3704 = vpop.f32.mrf.mxu0
    %v3705 = vadd.f32 %v3691, %v3704
    %3706 = vdwg.mxu0
    %3707 = vmatpush.bf16.msra.mxu0 %v3259
    %3708 = vmatpush.bf16.msra.mxu0 %v3255
    %3709 = vmatpush.bf16.msra.mxu0 %v3251
    %3710 = vmatpush.bf16.msra.mxu0 %v3247
    %3711 = vmatpush.bf16.msra.mxu0 %v3243
    %3712 = vmatpush.bf16.msra.mxu0 %v3239
    %3713 = vmatpush.bf16.msra.mxu0 %v3235
    %3714 = vmatpush.bf16.msra.mxu0 %v3231
    %3715 = vmatmul.bf16.gmra.mxu0 %v2127
    %v3716 = vpop.f32.mrf.mxu0
    %v3717 = vadd.f32 %v3703, %v3716
    %v3718 = vpop.f32.mrf.mxu0
    %v3719 = vadd.f32 %v3705, %v3718
    %3720 = vdwg.mxu0
    %3721 = vmatpush.bf16.msra.mxu0 %v3291
    %3722 = vmatpush.bf16.msra.mxu0 %v3287
    %3723 = vmatpush.bf16.msra.mxu0 %v3283
    %3724 = vmatpush.bf16.msra.mxu0 %v3279
    %3725 = vmatpush.bf16.msra.mxu0 %v3275
    %3726 = vmatpush.bf16.msra.mxu0 %v3271
    %3727 = vmatpush.bf16.msra.mxu0 %v3267
    %3728 = vmatpush.bf16.msra.mxu0 %v3263
    %3729 = vmatmul.bf16.gmra.mxu0 %v2128
    %v3730 = vpop.f32.mrf.mxu0
    %v3731 = vadd.f32 %v3717, %v3730
    %v3732 = vpop.f32.mrf.mxu0
    %v3733 = vadd.f32 %v3719, %v3732
    %3734 = vdwg.mxu0
    %3735 = vmatpush.bf16.msra.mxu0 %v3323
    %3736 = vmatpush.bf16.msra.mxu0 %v3319
    %3737 = vmatpush.bf16.msra.mxu0 %v3315
    %3738 = vmatpush.bf16.msra.mxu0 %v3311
    %3739 = vmatpush.bf16.msra.mxu0 %v3307
    %3740 = vmatpush.bf16.msra.mxu0 %v3303
    %3741 = vmatpush.bf16.msra.mxu0 %v3299
    %3742 = vmatpush.bf16.msra.mxu0 %v3295
    %3743 = vmatmul.bf16.gmra.mxu0 %v2129
    %v3744 = vpop.f32.mrf.mxu0
    %v3745 = vadd.f32 %v3731, %v3744
    %v3746 = vpop.f32.mrf.mxu0
    %v3747 = vadd.f32 %v3733, %v3746
    %3748 = vdwg.mxu0
    %3749 = vmatpush.bf16.msra.mxu0 %v3355
    %3750 = vmatpush.bf16.msra.mxu0 %v3351
    %3751 = vmatpush.bf16.msra.mxu0 %v3347
    %3752 = vmatpush.bf16.msra.mxu0 %v3343
    %3753 = vmatpush.bf16.msra.mxu0 %v3339
    %3754 = vmatpush.bf16.msra.mxu0 %v3335
    %3755 = vmatpush.bf16.msra.mxu0 %v3331
    %3756 = vmatpush.bf16.msra.mxu0 %v3327
    %3757 = vmatmul.bf16.gmra.mxu0 %v2130
    %v3758 = vpop.f32.mrf.mxu0
    %v3759 = vadd.f32 %v3745, %v3758
    %v3760 = vpop.f32.mrf.mxu0
    %v3761 = vadd.f32 %v3747, %v3760
    %3762 = vdwg.mxu0
    %3763 = vmatpush.bf16.msra.mxu0 %v3387
    %3764 = vmatpush.bf16.msra.mxu0 %v3383
    %3765 = vmatpush.bf16.msra.mxu0 %v3379
    %3766 = vmatpush.bf16.msra.mxu0 %v3375
    %3767 = vmatpush.bf16.msra.mxu0 %v3371
    %3768 = vmatpush.bf16.msra.mxu0 %v3367
    %3769 = vmatpush.bf16.msra.mxu0 %v3363
    %3770 = vmatpush.bf16.msra.mxu0 %v3359
    %3771 = vmatmul.bf16.gmra.mxu0 %v2131
    %v3772 = vpop.f32.mrf.mxu0
    %v3773 = vadd.f32 %v3759, %v3772
    %v3774 = vpop.f32.mrf.mxu0
    %v3775 = vadd.f32 %v3761, %v3774
    %3776 = vdwg.mxu0
    %3777 = vmatpush.bf16.msra.mxu0 %v3419
    %3778 = vmatpush.bf16.msra.mxu0 %v3415
    %3779 = vmatpush.bf16.msra.mxu0 %v3411
    %3780 = vmatpush.bf16.msra.mxu0 %v3407
    %3781 = vmatpush.bf16.msra.mxu0 %v3403
    %3782 = vmatpush.bf16.msra.mxu0 %v3399
    %3783 = vmatpush.bf16.msra.mxu0 %v3395
    %3784 = vmatpush.bf16.msra.mxu0 %v3391
    %3785 = vmatmul.bf16.gmra.mxu0 %v2132
    %v3786 = vpop.f32.mrf.mxu0
    %v3787 = vadd.f32 %v3773, %v3786
    %v3788 = vpop.f32.mrf.mxu0
    %v3789 = vadd.f32 %v3775, %v3788
    %3790 = vdwg.mxu0
    %3791 = vmatpush.bf16.msra.mxu0 %v3196
    %3792 = vmatpush.bf16.msra.mxu0 %v3192
    %3793 = vmatpush.bf16.msra.mxu0 %v3188
    %3794 = vmatpush.bf16.msra.mxu0 %v3184
    %3795 = vmatpush.bf16.msra.mxu0 %v3180
    %3796 = vmatpush.bf16.msra.mxu0 %v3176
    %3797 = vmatpush.bf16.msra.mxu0 %v3172
    %3798 = vmatpush.bf16.msra.mxu0 %v3168
    %3799 = vmatmul.bf16.gmra.mxu0 %v2125
    %v3800 = vpop.f32.mrf.mxu0
    %v3801 = vadd.f32 %v2392, %v3800
    %v3802 = vpop.f32.mrf.mxu0
    %v3803 = vadd.f32 %v2392, %v3802
    %3804 = vdwg.mxu0
    %3805 = vmatpush.bf16.msra.mxu0 %v3228
    %3806 = vmatpush.bf16.msra.mxu0 %v3224
    %3807 = vmatpush.bf16.msra.mxu0 %v3220
    %3808 = vmatpush.bf16.msra.mxu0 %v3216
    %3809 = vmatpush.bf16.msra.mxu0 %v3212
    %3810 = vmatpush.bf16.msra.mxu0 %v3208
    %3811 = vmatpush.bf16.msra.mxu0 %v3204
    %3812 = vmatpush.bf16.msra.mxu0 %v3200
    %3813 = vmatmul.bf16.gmra.mxu0 %v2126
    %v3814 = vpop.f32.mrf.mxu0
    %v3815 = vadd.f32 %v3801, %v3814
    %v3816 = vpop.f32.mrf.mxu0
    %v3817 = vadd.f32 %v3803, %v3816
    %3818 = vdwg.mxu0
    %3819 = vmatpush.bf16.msra.mxu0 %v3260
    %3820 = vmatpush.bf16.msra.mxu0 %v3256
    %3821 = vmatpush.bf16.msra.mxu0 %v3252
    %3822 = vmatpush.bf16.msra.mxu0 %v3248
    %3823 = vmatpush.bf16.msra.mxu0 %v3244
    %3824 = vmatpush.bf16.msra.mxu0 %v3240
    %3825 = vmatpush.bf16.msra.mxu0 %v3236
    %3826 = vmatpush.bf16.msra.mxu0 %v3232
    %3827 = vmatmul.bf16.gmra.mxu0 %v2127
    %v3828 = vpop.f32.mrf.mxu0
    %v3829 = vadd.f32 %v3815, %v3828
    %v3830 = vpop.f32.mrf.mxu0
    %v3831 = vadd.f32 %v3817, %v3830
    %3832 = vdwg.mxu0
    %3833 = vmatpush.bf16.msra.mxu0 %v3292
    %3834 = vmatpush.bf16.msra.mxu0 %v3288
    %3835 = vmatpush.bf16.msra.mxu0 %v3284
    %3836 = vmatpush.bf16.msra.mxu0 %v3280
    %3837 = vmatpush.bf16.msra.mxu0 %v3276
    %3838 = vmatpush.bf16.msra.mxu0 %v3272
    %3839 = vmatpush.bf16.msra.mxu0 %v3268
    %3840 = vmatpush.bf16.msra.mxu0 %v3264
    %3841 = vmatmul.bf16.gmra.mxu0 %v2128
    %v3842 = vpop.f32.mrf.mxu0
    %v3843 = vadd.f32 %v3829, %v3842
    %v3844 = vpop.f32.mrf.mxu0
    %v3845 = vadd.f32 %v3831, %v3844
    %3846 = vdwg.mxu0
    %3847 = vmatpush.bf16.msra.mxu0 %v3324
    %3848 = vmatpush.bf16.msra.mxu0 %v3320
    %3849 = vmatpush.bf16.msra.mxu0 %v3316
    %3850 = vmatpush.bf16.msra.mxu0 %v3312
    %3851 = vmatpush.bf16.msra.mxu0 %v3308
    %3852 = vmatpush.bf16.msra.mxu0 %v3304
    %3853 = vmatpush.bf16.msra.mxu0 %v3300
    %3854 = vmatpush.bf16.msra.mxu0 %v3296
    %3855 = vmatmul.bf16.gmra.mxu0 %v2129
    %v3856 = vpop.f32.mrf.mxu0
    %v3857 = vadd.f32 %v3843, %v3856
    %v3858 = vpop.f32.mrf.mxu0
    %v3859 = vadd.f32 %v3845, %v3858
    %3860 = vdwg.mxu0
    %3861 = vmatpush.bf16.msra.mxu0 %v3356
    %3862 = vmatpush.bf16.msra.mxu0 %v3352
    %3863 = vmatpush.bf16.msra.mxu0 %v3348
    %3864 = vmatpush.bf16.msra.mxu0 %v3344
    %3865 = vmatpush.bf16.msra.mxu0 %v3340
    %3866 = vmatpush.bf16.msra.mxu0 %v3336
    %3867 = vmatpush.bf16.msra.mxu0 %v3332
    %3868 = vmatpush.bf16.msra.mxu0 %v3328
    %3869 = vmatmul.bf16.gmra.mxu0 %v2130
    %v3870 = vpop.f32.mrf.mxu0
    %v3871 = vadd.f32 %v3857, %v3870
    %v3872 = vpop.f32.mrf.mxu0
    %v3873 = vadd.f32 %v3859, %v3872
    %3874 = vdwg.mxu0
    %3875 = vmatpush.bf16.msra.mxu0 %v3388
    %3876 = vmatpush.bf16.msra.mxu0 %v3384
    %3877 = vmatpush.bf16.msra.mxu0 %v3380
    %3878 = vmatpush.bf16.msra.mxu0 %v3376
    %3879 = vmatpush.bf16.msra.mxu0 %v3372
    %3880 = vmatpush.bf16.msra.mxu0 %v3368
    %3881 = vmatpush.bf16.msra.mxu0 %v3364
    %3882 = vmatpush.bf16.msra.mxu0 %v3360
    %3883 = vmatmul.bf16.gmra.mxu0 %v2131
    %v3884 = vpop.f32.mrf.mxu0
    %v3885 = vadd.f32 %v3871, %v3884
    %v3886 = vpop.f32.mrf.mxu0
    %v3887 = vadd.f32 %v3873, %v3886
    %3888 = vdwg.mxu0
    %3889 = vmatpush.bf16.msra.mxu0 %v3420
    %3890 = vmatpush.bf16.msra.mxu0 %v3416
    %3891 = vmatpush.bf16.msra.mxu0 %v3412
    %3892 = vmatpush.bf16.msra.mxu0 %v3408
    %3893 = vmatpush.bf16.msra.mxu0 %v3404
    %3894 = vmatpush.bf16.msra.mxu0 %v3400
    %3895 = vmatpush.bf16.msra.mxu0 %v3396
    %3896 = vmatpush.bf16.msra.mxu0 %v3392
    %3897 = vmatmul.bf16.gmra.mxu0 %v2132
    %v3898 = vpop.f32.mrf.mxu0
    %v3899 = vadd.f32 %v3885, %v3898
    %v3900 = vpop.f32.mrf.mxu0
    %v3901 = vadd.f32 %v3887, %v3900
    %3902 = vdwg.mxu0
    %3903 = vmatpush.bf16.msra.mxu0 %v3197
    %3904 = vmatpush.bf16.msra.mxu0 %v3193
    %3905 = vmatpush.bf16.msra.mxu0 %v3189
    %3906 = vmatpush.bf16.msra.mxu0 %v3185
    %3907 = vmatpush.bf16.msra.mxu0 %v3181
    %3908 = vmatpush.bf16.msra.mxu0 %v3177
    %3909 = vmatpush.bf16.msra.mxu0 %v3173
    %3910 = vmatpush.bf16.msra.mxu0 %v3169
    %3911 = vmatmul.bf16.gmra.mxu0 %v2125
    %v3912 = vpop.f32.mrf.mxu0
    %v3913 = vadd.f32 %v2393, %v3912
    %v3914 = vpop.f32.mrf.mxu0
    %v3915 = vadd.f32 %v2393, %v3914
    %3916 = vdwg.mxu0
    %3917 = vmatpush.bf16.msra.mxu0 %v3229
    %3918 = vmatpush.bf16.msra.mxu0 %v3225
    %3919 = vmatpush.bf16.msra.mxu0 %v3221
    %3920 = vmatpush.bf16.msra.mxu0 %v3217
    %3921 = vmatpush.bf16.msra.mxu0 %v3213
    %3922 = vmatpush.bf16.msra.mxu0 %v3209
    %3923 = vmatpush.bf16.msra.mxu0 %v3205
    %3924 = vmatpush.bf16.msra.mxu0 %v3201
    %3925 = vmatmul.bf16.gmra.mxu0 %v2126
    %v3926 = vpop.f32.mrf.mxu0
    %v3927 = vadd.f32 %v3913, %v3926
    %v3928 = vpop.f32.mrf.mxu0
    %v3929 = vadd.f32 %v3915, %v3928
    %3930 = vdwg.mxu0
    %3931 = vmatpush.bf16.msra.mxu0 %v3261
    %3932 = vmatpush.bf16.msra.mxu0 %v3257
    %3933 = vmatpush.bf16.msra.mxu0 %v3253
    %3934 = vmatpush.bf16.msra.mxu0 %v3249
    %3935 = vmatpush.bf16.msra.mxu0 %v3245
    %3936 = vmatpush.bf16.msra.mxu0 %v3241
    %3937 = vmatpush.bf16.msra.mxu0 %v3237
    %3938 = vmatpush.bf16.msra.mxu0 %v3233
    %3939 = vmatmul.bf16.gmra.mxu0 %v2127
    %v3940 = vpop.f32.mrf.mxu0
    %v3941 = vadd.f32 %v3927, %v3940
    %v3942 = vpop.f32.mrf.mxu0
    %v3943 = vadd.f32 %v3929, %v3942
    %3944 = vdwg.mxu0
    %3945 = vmatpush.bf16.msra.mxu0 %v3293
    %3946 = vmatpush.bf16.msra.mxu0 %v3289
    %3947 = vmatpush.bf16.msra.mxu0 %v3285
    %3948 = vmatpush.bf16.msra.mxu0 %v3281
    %3949 = vmatpush.bf16.msra.mxu0 %v3277
    %3950 = vmatpush.bf16.msra.mxu0 %v3273
    %3951 = vmatpush.bf16.msra.mxu0 %v3269
    %3952 = vmatpush.bf16.msra.mxu0 %v3265
    %3953 = vmatmul.bf16.gmra.mxu0 %v2128
    %v3954 = vpop.f32.mrf.mxu0
    %v3955 = vadd.f32 %v3941, %v3954
    %v3956 = vpop.f32.mrf.mxu0
    %v3957 = vadd.f32 %v3943, %v3956
    %3958 = vdwg.mxu0
    %3959 = vmatpush.bf16.msra.mxu0 %v3325
    %3960 = vmatpush.bf16.msra.mxu0 %v3321
    %3961 = vmatpush.bf16.msra.mxu0 %v3317
    %3962 = vmatpush.bf16.msra.mxu0 %v3313
    %3963 = vmatpush.bf16.msra.mxu0 %v3309
    %3964 = vmatpush.bf16.msra.mxu0 %v3305
    %3965 = vmatpush.bf16.msra.mxu0 %v3301
    %3966 = vmatpush.bf16.msra.mxu0 %v3297
    %3967 = vmatmul.bf16.gmra.mxu0 %v2129
    %v3968 = vpop.f32.mrf.mxu0
    %v3969 = vadd.f32 %v3955, %v3968
    %v3970 = vpop.f32.mrf.mxu0
    %v3971 = vadd.f32 %v3957, %v3970
    %3972 = vdwg.mxu0
    %3973 = vmatpush.bf16.msra.mxu0 %v3357
    %3974 = vmatpush.bf16.msra.mxu0 %v3353
    %3975 = vmatpush.bf16.msra.mxu0 %v3349
    %3976 = vmatpush.bf16.msra.mxu0 %v3345
    %3977 = vmatpush.bf16.msra.mxu0 %v3341
    %3978 = vmatpush.bf16.msra.mxu0 %v3337
    %3979 = vmatpush.bf16.msra.mxu0 %v3333
    %3980 = vmatpush.bf16.msra.mxu0 %v3329
    %3981 = vmatmul.bf16.gmra.mxu0 %v2130
    %v3982 = vpop.f32.mrf.mxu0
    %v3983 = vadd.f32 %v3969, %v3982
    %v3984 = vpop.f32.mrf.mxu0
    %v3985 = vadd.f32 %v3971, %v3984
    %3986 = vdwg.mxu0
    %3987 = vmatpush.bf16.msra.mxu0 %v3389
    %3988 = vmatpush.bf16.msra.mxu0 %v3385
    %3989 = vmatpush.bf16.msra.mxu0 %v3381
    %3990 = vmatpush.bf16.msra.mxu0 %v3377
    %3991 = vmatpush.bf16.msra.mxu0 %v3373
    %3992 = vmatpush.bf16.msra.mxu0 %v3369
    %3993 = vmatpush.bf16.msra.mxu0 %v3365
    %3994 = vmatpush.bf16.msra.mxu0 %v3361
    %3995 = vmatmul.bf16.gmra.mxu0 %v2131
    %v3996 = vpop.f32.mrf.mxu0
    %v3997 = vadd.f32 %v3983, %v3996
    %v3998 = vpop.f32.mrf.mxu0
    %v3999 = vadd.f32 %v3985, %v3998
    %4000 = vdwg.mxu0
    %4001 = vmatpush.bf16.msra.mxu0 %v3421
    %4002 = vmatpush.bf16.msra.mxu0 %v3417
    %4003 = vmatpush.bf16.msra.mxu0 %v3413
    %4004 = vmatpush.bf16.msra.mxu0 %v3409
    %4005 = vmatpush.bf16.msra.mxu0 %v3405
    %4006 = vmatpush.bf16.msra.mxu0 %v3401
    %4007 = vmatpush.bf16.msra.mxu0 %v3397
    %4008 = vmatpush.bf16.msra.mxu0 %v3393
    %4009 = vmatmul.bf16.gmra.mxu0 %v2132
    %v4010 = vpop.f32.mrf.mxu0
    %v4011 = vadd.f32 %v3997, %v4010
    %v4012 = vpop.f32.mrf.mxu0
    %v4013 = vadd.f32 %v3999, %v4012
    %4014 = vdwg.mxu0
    %4015 = vmatpush.bf16.msra.mxu0 %v3198
    %4016 = vmatpush.bf16.msra.mxu0 %v3194
    %4017 = vmatpush.bf16.msra.mxu0 %v3190
    %4018 = vmatpush.bf16.msra.mxu0 %v3186
    %4019 = vmatpush.bf16.msra.mxu0 %v3182
    %4020 = vmatpush.bf16.msra.mxu0 %v3178
    %4021 = vmatpush.bf16.msra.mxu0 %v3174
    %4022 = vmatpush.bf16.msra.mxu0 %v3170
    %4023 = vmatmul.bf16.gmra.mxu0 %v2125
    %v4024 = vpop.f32.mrf.mxu0
    %v4025 = vadd.f32 %v2394, %v4024
    %v4026 = vpop.f32.mrf.mxu0
    %v4027 = vadd.f32 %v2394, %v4026
    %4028 = vdwg.mxu0
    %4029 = vmatpush.bf16.msra.mxu0 %v3230
    %4030 = vmatpush.bf16.msra.mxu0 %v3226
    %4031 = vmatpush.bf16.msra.mxu0 %v3222
    %4032 = vmatpush.bf16.msra.mxu0 %v3218
    %4033 = vmatpush.bf16.msra.mxu0 %v3214
    %4034 = vmatpush.bf16.msra.mxu0 %v3210
    %4035 = vmatpush.bf16.msra.mxu0 %v3206
    %4036 = vmatpush.bf16.msra.mxu0 %v3202
    %4037 = vmatmul.bf16.gmra.mxu0 %v2126
    %v4038 = vpop.f32.mrf.mxu0
    %v4039 = vadd.f32 %v4025, %v4038
    %v4040 = vpop.f32.mrf.mxu0
    %v4041 = vadd.f32 %v4027, %v4040
    %4042 = vdwg.mxu0
    %4043 = vmatpush.bf16.msra.mxu0 %v3262
    %4044 = vmatpush.bf16.msra.mxu0 %v3258
    %4045 = vmatpush.bf16.msra.mxu0 %v3254
    %4046 = vmatpush.bf16.msra.mxu0 %v3250
    %4047 = vmatpush.bf16.msra.mxu0 %v3246
    %4048 = vmatpush.bf16.msra.mxu0 %v3242
    %4049 = vmatpush.bf16.msra.mxu0 %v3238
    %4050 = vmatpush.bf16.msra.mxu0 %v3234
    %4051 = vmatmul.bf16.gmra.mxu0 %v2127
    %v4052 = vpop.f32.mrf.mxu0
    %v4053 = vadd.f32 %v4039, %v4052
    %v4054 = vpop.f32.mrf.mxu0
    %v4055 = vadd.f32 %v4041, %v4054
    %4056 = vdwg.mxu0
    %4057 = vmatpush.bf16.msra.mxu0 %v3294
    %4058 = vmatpush.bf16.msra.mxu0 %v3290
    %4059 = vmatpush.bf16.msra.mxu0 %v3286
    %4060 = vmatpush.bf16.msra.mxu0 %v3282
    %4061 = vmatpush.bf16.msra.mxu0 %v3278
    %4062 = vmatpush.bf16.msra.mxu0 %v3274
    %4063 = vmatpush.bf16.msra.mxu0 %v3270
    %4064 = vmatpush.bf16.msra.mxu0 %v3266
    %4065 = vmatmul.bf16.gmra.mxu0 %v2128
    %v4066 = vpop.f32.mrf.mxu0
    %v4067 = vadd.f32 %v4053, %v4066
    %v4068 = vpop.f32.mrf.mxu0
    %v4069 = vadd.f32 %v4055, %v4068
    %4070 = vdwg.mxu0
    %4071 = vmatpush.bf16.msra.mxu0 %v3326
    %4072 = vmatpush.bf16.msra.mxu0 %v3322
    %4073 = vmatpush.bf16.msra.mxu0 %v3318
    %4074 = vmatpush.bf16.msra.mxu0 %v3314
    %4075 = vmatpush.bf16.msra.mxu0 %v3310
    %4076 = vmatpush.bf16.msra.mxu0 %v3306
    %4077 = vmatpush.bf16.msra.mxu0 %v3302
    %4078 = vmatpush.bf16.msra.mxu0 %v3298
    %4079 = vmatmul.bf16.gmra.mxu0 %v2129
    %v4080 = vpop.f32.mrf.mxu0
    %v4081 = vadd.f32 %v4067, %v4080
    %v4082 = vpop.f32.mrf.mxu0
    %v4083 = vadd.f32 %v4069, %v4082
    %4084 = vdwg.mxu0
    %4085 = vmatpush.bf16.msra.mxu0 %v3358
    %4086 = vmatpush.bf16.msra.mxu0 %v3354
    %4087 = vmatpush.bf16.msra.mxu0 %v3350
    %4088 = vmatpush.bf16.msra.mxu0 %v3346
    %4089 = vmatpush.bf16.msra.mxu0 %v3342
    %4090 = vmatpush.bf16.msra.mxu0 %v3338
    %4091 = vmatpush.bf16.msra.mxu0 %v3334
    %4092 = vmatpush.bf16.msra.mxu0 %v3330
    %4093 = vmatmul.bf16.gmra.mxu0 %v2130
    %v4094 = vpop.f32.mrf.mxu0
    %v4095 = vadd.f32 %v4081, %v4094
    %v4096 = vpop.f32.mrf.mxu0
    %v4097 = vadd.f32 %v4083, %v4096
    %4098 = vdwg.mxu0
    %4099 = vmatpush.bf16.msra.mxu0 %v3390
    %4100 = vmatpush.bf16.msra.mxu0 %v3386
    %4101 = vmatpush.bf16.msra.mxu0 %v3382
    %4102 = vmatpush.bf16.msra.mxu0 %v3378
    %4103 = vmatpush.bf16.msra.mxu0 %v3374
    %4104 = vmatpush.bf16.msra.mxu0 %v3370
    %4105 = vmatpush.bf16.msra.mxu0 %v3366
    %4106 = vmatpush.bf16.msra.mxu0 %v3362
    %4107 = vmatmul.bf16.gmra.mxu0 %v2131
    %v4108 = vpop.f32.mrf.mxu0
    %v4109 = vadd.f32 %v4095, %v4108
    %v4110 = vpop.f32.mrf.mxu0
    %v4111 = vadd.f32 %v4097, %v4110
    %4112 = vdwg.mxu0
    %4113 = vmatpush.bf16.msra.mxu0 %v3422
    %4114 = vmatpush.bf16.msra.mxu0 %v3418
    %4115 = vmatpush.bf16.msra.mxu0 %v3414
    %4116 = vmatpush.bf16.msra.mxu0 %v3410
    %4117 = vmatpush.bf16.msra.mxu0 %v3406
    %4118 = vmatpush.bf16.msra.mxu0 %v3402
    %4119 = vmatpush.bf16.msra.mxu0 %v3398
    %4120 = vmatpush.bf16.msra.mxu0 %v3394
    %4121 = vmatmul.bf16.gmra.mxu0 %v2132
    %v4122 = vpop.f32.mrf.mxu0
    %v4123 = vadd.f32 %v4109, %v4122
    %v4124 = vpop.f32.mrf.mxu0
    %v4125 = vadd.f32 %v4111, %v4124
    %4126 = vdwg.mxu0
    %4127 = vst [vmem:[#allocation11] sm:$0xff] %v3787
    %4128 = vst [vmem:[#allocation11 + $0x8] sm:$0xff] %v3899
    %4129 = vst [vmem:[#allocation11 + $0x10] sm:$0xff] %v4011
    %4130 = vst [vmem:[#allocation11 + $0x18] sm:$0xff] %v4123
    %4131 = vst [vmem:[#allocation11 + $0x20] sm:$0xff] %v3789
    %4132 = vst [vmem:[#allocation11 + $0x28] sm:$0xff] %v3901
    %4133 = vst [vmem:[#allocation11 + $0x30] sm:$0xff] %v4013
    %4134 = vst [vmem:[#allocation11 + $0x38] sm:$0xff] %v4125
    // Predicated region
    $region42: #{tpu_custom_call.1} parent=1 // pred_check
      _
    $region43: #{tpu_custom_call.1} parent=1 // pred_check_branch
      %4136 = sbr.rel (0) target = $region45
    $region44: #{tpu_custom_call.1} parent=1 // pred_region
      %4138 = vsyncadd [#allocation4], 0
      %s4139 = sshll.u32 [#allocation11], 4
      %s4140 = int_to_ptr.vmem [resolvable:$true] %s4139
      %s4141 = sshll.u32 %s5, 4
      %s4142 = int_to_ptr.hbm [resolvable:$true] %s4141
      %4147 = dma.vmem_to_hbm [thread:$0]  %s4140, 1024, %s4142, [#allocation4], 512, 512, 32
    $region45: #{tpu_custom_call.1} parent=1 // pred_fallthru
      _
    // Predicated region
    $region46: #{tpu_custom_call.1} parent=1 // pred_check
      _
    $region47: #{tpu_custom_call.1} parent=1 // pred_check_branch
      %4149 = sbr.rel (0) target = $region49
    $region48: #{tpu_custom_call.1} parent=1 // pred_region
      %4151 = dma.done [#allocation4], 1024
    $region49: #{tpu_custom_call.1} parent=1 // pred_fallthru
      _
    %4152 = vsyncpa [#allocation3], 1
    %4153 = vsyncpa [#allocation6], 1
    %4154 = vsyncpa [#allocation9], 1
    %4155 = vsyncpa [#allocation4], 1

</llo_original>
